<compile_context>
chip_gen: v7x
topology: tpu7x:2x2x1
jax: 0.10.0
libtpu: 0.0.40
codegen_flags: <defaults>
</compile_context>

<pallas_src>
import jax
import jax.numpy as jnp
from jax.experimental import pallas as pl
from jax.experimental.pallas import tpu as pltpu

# ----------------------------- config ---------------------------------------
BATCH = 2
IMG = 16          # image size (scaled down from 336)
CHANNELS = 3
PATCH = 8         # patch size (scaled down from 14)
GRID = IMG // PATCH
NUM_PATCHES = GRID * GRID
SEQ = NUM_PATCHES + 1          # +1 class token
BS = BATCH * SEQ               # batch folded into the block
WIDTH = 64                     # transformer width (scaled down from 1024)
HEADS = 4
HEAD_DIM = WIDTH // HEADS
LAYERS = 2                     # scaled down from 24
MLP_DIM = 4 * WIDTH
VIS_OUT = 768                  # CLIP ViT-L visual output dim (kept exact)
GEN_OUT = 384                  # generator output dim (kept exact)
PATCH_DIM = CHANNELS * PATCH * PATCH
LN_EPS = 1e-5
NEG_INF = -1e9                 # cross-batch attention mask value


# ----------------------------- in-kernel helpers -----------------------------
def _ln(x, g, b, eps=LN_EPS):
    x = x.astype(jnp.float32)
    mu = jnp.mean(x, axis=-1, keepdims=True)
    var = jnp.mean(jnp.square(x - mu), axis=-1, keepdims=True)
    return (x - mu) * jax.lax.rsqrt(var + eps) * g + b


# ----------------------------- fused kernel ----------------------------------
def _clip_fused_kernel(
    # stem / constant inputs
    patches_ref, conv_w_ref, stem_add_ref, ln_pre_g_ref, ln_pre_b_ref,
    attn_mask_ref,
    # stacked per-layer weights (leading dim = layer, selected via index_map)
    ln1_g_ref, ln1_b_ref, wq_ref, wk_ref, wv_ref, bq_ref, bk_ref, bv_ref,
    out_w_ref, out_b_ref, ln2_g_ref, ln2_b_ref,
    fc_w_ref, fc_b_ref, proj_w_ref, proj_b_ref,
    # head inputs
    ln_post_g_ref, ln_post_b_ref, w_head_ref, gen_b_ref,
    # output + resident activation scratch
    out_ref, xf_ref,
):
    layer = pl.program_id(0)

    # ---- stem: one full-tile matmul + (cls+pos) add + ln_pre ----------------
    # patches row b*SEQ is zero-padded, so no partial-row writes are needed.
    @pl.when(layer == 0)
    def _stem():
        tok = jnp.dot(patches_ref[...], conv_w_ref[...],
                      preferred_element_type=jnp.float32)          # [BS, W]
        xf_ref[...] = _ln(tok + stem_add_ref[...],
                          ln_pre_g_ref[...], ln_pre_b_ref[...])

    x = xf_ref[...]                                                # [BS, W] f32

    # ---- multi-head self-attention ------------------------------------------
    h = _ln(x, ln1_g_ref[0], ln1_b_ref[0])
    hb = h.astype(jnp.bfloat16)
    scale = float(HEAD_DIM) ** -0.5
    mask = attn_mask_ref[...]                                      # [BS, BS]

    heads = []
    for hh in range(HEADS):
        # per-head operands come straight out of the MXU (ref slices are free):
        q = jnp.dot(hb, wq_ref[0, hh],
                    preferred_element_type=jnp.float32) + bq_ref[0, hh]
        k = jnp.dot(hb, wk_ref[0, hh],
                    preferred_element_type=jnp.float32) + bk_ref[0, hh]
        v = jnp.dot(hb, wv_ref[0, hh],
                    preferred_element_type=jnp.float32) + bv_ref[0, hh]
        # q @ k.T (contract last dims, no transpose materialized)
        s = jax.lax.dot_general(q.astype(jnp.bfloat16), k.astype(jnp.bfloat16),
                                (((1,), (1,)), ((), ())),
                                preferred_element_type=jnp.float32)
        s = s * scale + mask                       # block-diag mask = per-batch attn
        s = s - jnp.max(s, axis=-1, keepdims=True)
        p = jnp.exp(s)
        p = p * pl.reciprocal(jnp.sum(p, axis=-1, keepdims=True), approx=True)
        heads.append(jnp.dot(p.astype(jnp.bfloat16), v.astype(jnp.bfloat16),
                             preferred_element_type=jnp.float32))  # [BS, Dh]

    # concat heads (64 lanes, one vreg) -> single out-proj matmul
    attn = jnp.concatenate(heads, axis=-1)                         # [BS, W]
    attn = jnp.dot(attn.astype(jnp.bfloat16), out_w_ref[0],
                   preferred_element_type=jnp.float32) + out_b_ref[0]
    x = x + attn

    # ---- MLP (Linear -> QuickGELU -> Linear) --------------------------------
    h2 = _ln(x, ln2_g_ref[0], ln2_b_ref[0])
    h2 = jnp.dot(h2.astype(jnp.bfloat16), fc_w_ref[0],
                 preferred_element_type=jnp.float32) + fc_b_ref[0]
    # QuickGELU: x * sigmoid(1.702 x), denominator through the EUP
    h2 = h2 * pl.reciprocal(1.0 + jnp.exp(-1.702 * h2), approx=True)
    h2 = jnp.dot(h2.astype(jnp.bfloat16), proj_w_ref[0],
                 preferred_element_type=jnp.float32) + proj_b_ref[0]
    x = x + h2
    xf_ref[...] = x

    # ---- head: ln_post(cls) @ (visual_proj @ gen_w) + gen_b -----------------
    @pl.when(layer == LAYERS - 1)
    def _head():
        cls = jnp.concatenate(
            [xf_ref[b * SEQ:b * SEQ + 1, :] for b in range(BATCH)], axis=0)  # [B, W]
        cls = _ln(cls, ln_post_g_ref[...], ln_post_b_ref[...])
        out_ref[...] = (jnp.dot(cls.astype(jnp.bfloat16), w_head_ref[...],
                                preferred_element_type=jnp.float32)
                        + gen_b_ref[...])                                    # [B, 384]


# ----------------------------- parameters -----------------------------------
def make_params(seed=0):
    keys = iter(jax.random.split(jax.random.PRNGKey(seed), 256))

    def nrm(shape, scale=0.02):
        return scale * jax.random.normal(next(keys), shape, dtype=jnp.float32)

    # Conv2d(3, WIDTH, kernel=patch, stride=patch, bias=False) as a matmul:
    # weight [WIDTH, C, p, p] -> [C*p*p, WIDTH]
    conv_w = nrm((WIDTH, CHANNELS, PATCH, PATCH)).reshape(WIDTH, -1).T
    class_embedding = nrm((WIDTH,))
    pos_embed = nrm((SEQ, WIDTH))
    # cls token + positional embedding folded into one additive table,
    # tiled for the batch-folded [BS, W] activation slab.
    stem_add = jnp.tile(pos_embed.at[0].add(class_embedding), (BATCH, 1))

    visual_proj = nrm((WIDTH, VIS_OUT))
    gen_w = nrm((GEN_OUT, VIS_OUT)).T                 # [VIS_OUT, GEN_OUT]
    gen_b = nrm((GEN_OUT,))
    # Fold visual_proj @ gen_w (no nonlinearity between them).
    w_head = jnp.dot(visual_proj, gen_w)              # [WIDTH, GEN_OUT]

    # block-diagonal additive mask: rows may only attend within their batch
    bid = jnp.arange(BS) // SEQ
    attn_mask = jnp.where(bid[:, None] == bid[None, :], 0.0, NEG_INF
                          ).astype(jnp.float32)

    def stack(fn):
        return jnp.stack([fn() for _ in range(LAYERS)], axis=0)

    def split_heads_w(w):   # [W, W] -> [HEADS, W, Dh] (head-major columns)
        return w.reshape(WIDTH, HEADS, HEAD_DIM).transpose(1, 0, 2)

    def split_heads_b(b):   # [W] -> [HEADS, 1, Dh]
        return b.reshape(HEADS, 1, HEAD_DIM)

    bf16 = jnp.bfloat16
    params = {
        "conv_w": conv_w.astype(bf16),
        "stem_add": stem_add,
        "ln_pre_g": jnp.ones((1, WIDTH), jnp.float32),
        "ln_pre_b": jnp.zeros((1, WIDTH), jnp.float32),
        "attn_mask": attn_mask,
        # per-layer weights stacked along a leading [LAYERS, ...] dimension
        "ln1_g": jnp.ones((LAYERS, 1, WIDTH), jnp.float32),
        "ln1_b": jnp.zeros((LAYERS, 1, WIDTH), jnp.float32),
        "wq": stack(lambda: split_heads_w(nrm((WIDTH, WIDTH)))).astype(bf16),
        "wk": stack(lambda: split_heads_w(nrm((WIDTH, WIDTH)))).astype(bf16),
        "wv": stack(lambda: split_heads_w(nrm((WIDTH, WIDTH)))).astype(bf16),
        "bq": stack(lambda: split_heads_b(nrm((WIDTH,)))),
        "bk": stack(lambda: split_heads_b(nrm((WIDTH,)))),
        "bv": stack(lambda: split_heads_b(nrm((WIDTH,)))),
        "out_w": stack(lambda: nrm((WIDTH, WIDTH)).T).astype(bf16),
        "out_b": stack(lambda: nrm((WIDTH,)).reshape(1, WIDTH)),
        "ln2_g": jnp.ones((LAYERS, 1, WIDTH), jnp.float32),
        "ln2_b": jnp.zeros((LAYERS, 1, WIDTH), jnp.float32),
        "fc_w": stack(lambda: nrm((MLP_DIM, WIDTH)).T).astype(bf16),
        "fc_b": stack(lambda: nrm((MLP_DIM,)).reshape(1, MLP_DIM)),
        "proj_w": stack(lambda: nrm((WIDTH, MLP_DIM)).T).astype(bf16),
        "proj_b": stack(lambda: nrm((WIDTH,)).reshape(1, WIDTH)),
        "ln_post_g": jnp.ones((1, WIDTH), jnp.float32),
        "ln_post_b": jnp.zeros((1, WIDTH), jnp.float32),
        "w_head": w_head.astype(bf16),
        "gen_b": gen_b.reshape(1, GEN_OUT),
    }
    return params


# ----------------------------- forward pass ----------------------------------
def clip_model_forward(params, x):
    """x: [B, C, H, W] float32 (NCHW).  Returns embeddings [B, 384]."""
    B, C, H, W = x.shape
    assert B == BATCH and C == CHANNELS and H == IMG and W == IMG

    # patchify (Conv2d stride=patch rewritten as matmul), (C, kh, kw) order;
    # a zero row is padded at position 0 of every sequence (cls-token slot).
    patches = (
        x.reshape(B, C, GRID, PATCH, GRID, PATCH)
        .transpose(0, 2, 4, 1, 3, 5)                  # [B, gh, gw, C, p, p]
        .reshape(B, NUM_PATCHES, PATCH_DIM)
    )
    patches = jnp.concatenate(
        [jnp.zeros((B, 1, PATCH_DIM), patches.dtype), patches], axis=1)
    patches = patches.reshape(BS, PATCH_DIM).astype(jnp.bfloat16)

    def full(shape):
        zeros = (0,) * len(shape)
        return pl.BlockSpec(shape, lambda l: zeros)

    def per_layer(shape):
        zeros = (0,) * len(shape)
        return pl.BlockSpec((1,) + shape, lambda l: (l,) + zeros)

    in_specs = [
        full((BS, PATCH_DIM)),                 # patches (zero-padded cls rows)
        full((PATCH_DIM, WIDTH)),              # conv_w
        full((BS, WIDTH)),                     # stem_add (cls + pos embed, tiled)
        full((1, WIDTH)),                      # ln_pre_g
        full((1, WIDTH)),                      # ln_pre_b
        full((BS, BS)),                        # attn_mask (block-diagonal)
        per_layer((1, WIDTH)),                 # ln1_g
        per_layer((1, WIDTH)),                 # ln1_b
        per_layer((HEADS, WIDTH, HEAD_DIM)),   # wq (head-major)
        per_layer((HEADS, WIDTH, HEAD_DIM)),   # wk
        per_layer((HEADS, WIDTH, HEAD_DIM)),   # wv
        per_layer((HEADS, 1, HEAD_DIM)),       # bq
        per_layer((HEADS, 1, HEAD_DIM)),       # bk
        per_layer((HEADS, 1, HEAD_DIM)),       # bv
        per_layer((WIDTH, WIDTH)),             # out_w
        per_layer((1, WIDTH)),                 # out_b
        per_layer((1, WIDTH)),                 # ln2_g
        per_layer((1, WIDTH)),                 # ln2_b
        per_layer((WIDTH, MLP_DIM)),           # fc_w
        per_layer((1, MLP_DIM)),               # fc_b
        per_layer((MLP_DIM, WIDTH)),           # proj_w
        per_layer((1, WIDTH)),                 # proj_b
        full((1, WIDTH)),                      # ln_post_g
        full((1, WIDTH)),                      # ln_post_b
        full((WIDTH, GEN_OUT)),                # w_head (visual_proj @ gen_w)
        full((1, GEN_OUT)),                    # gen_b
    ]
    out_spec = pl.BlockSpec((BATCH, GEN_OUT), lambda l: (0, 0))

    out = pl.pallas_call(
        _clip_fused_kernel,
        out_shape=jax.ShapeDtypeStruct((BATCH, GEN_OUT), jnp.float32),
        grid_spec=pltpu.PrefetchScalarGridSpec(
            num_scalar_prefetch=0,
            grid=(LAYERS,),                    # single sequential layer axis
            in_specs=in_specs,
            out_specs=out_spec,
            scratch_shapes=[pltpu.VMEM((BS, WIDTH), jnp.float32)],  # resident acts
        ),
        compiler_params=pltpu.CompilerParams(
            dimension_semantics=("arbitrary",)),
    )(
        patches,
        params["conv_w"], params["stem_add"],
        params["ln_pre_g"], params["ln_pre_b"], params["attn_mask"],
        params["ln1_g"], params["ln1_b"],
        params["wq"], params["wk"], params["wv"],
        params["bq"], params["bk"], params["bv"],
        params["out_w"], params["out_b"],
        params["ln2_g"], params["ln2_b"],
        params["fc_w"], params["fc_b"],
        params["proj_w"], params["proj_b"],
        params["ln_post_g"], params["ln_post_b"],
        params["w_head"], params["gen_b"],
    )
    return out


# TODO(synk): pretrained CLIP weight loading, the CLIP preprocessor, and the
# training-only members (CosineEmbeddingLoss, CosineSimilarity, AdamW,
# CosineAnnealingLR) are not part of the forward pass and are not translated.

# ----------------------------- main ------------------------------------------
if __name__ == "__main__":
    key = jax.random.PRNGKey(0)
    x = jax.random.normal(key, (BATCH, CHANNELS, IMG, IMG), dtype=jnp.float32)

    params = make_params(seed=0)
    fwd = jax.jit(clip_model_forward)
    out = fwd(params, x)
    jax.block_until_ready(out)

    assert out.shape == (BATCH, GEN_OUT), out.shape
    assert out.dtype == jnp.float32
    assert bool(jnp.all(jnp.isfinite(out)))
    print("KERNEL_OK")
</pallas_src>

<mosaic_0001>
module attributes {stable_mosaic.version = 11 : i64} {
  func.func @_clip_fused_kernel(%arg0: i32, %arg1: memref<10x192xbf16, #tpu.memory_space<vmem>>, %arg2: memref<192x64xbf16, #tpu.memory_space<vmem>>, %arg3: memref<10x64xf32, #tpu.memory_space<vmem>>, %arg4: memref<1x64xf32, #tpu.memory_space<vmem>>, %arg5: memref<1x64xf32, #tpu.memory_space<vmem>>, %arg6: memref<10x10xf32, #tpu.memory_space<vmem>>, %arg7: memref<1x1x64xf32, #tpu.memory_space<vmem>>, %arg8: memref<1x1x64xf32, #tpu.memory_space<vmem>>, %arg9: memref<1x4x64x16xbf16, #tpu.memory_space<vmem>>, %arg10: memref<1x4x64x16xbf16, #tpu.memory_space<vmem>>, %arg11: memref<1x4x64x16xbf16, #tpu.memory_space<vmem>>, %arg12: memref<1x4x1x16xf32, #tpu.memory_space<vmem>>, %arg13: memref<1x4x1x16xf32, #tpu.memory_space<vmem>>, %arg14: memref<1x4x1x16xf32, #tpu.memory_space<vmem>>, %arg15: memref<1x64x64xbf16, #tpu.memory_space<vmem>>, %arg16: memref<1x1x64xf32, #tpu.memory_space<vmem>>, %arg17: memref<1x1x64xf32, #tpu.memory_space<vmem>>, %arg18: memref<1x1x64xf32, #tpu.memory_space<vmem>>, %arg19: memref<1x64x256xbf16, #tpu.memory_space<vmem>>, %arg20: memref<1x1x256xf32, #tpu.memory_space<vmem>>, %arg21: memref<1x256x64xbf16, #tpu.memory_space<vmem>>, %arg22: memref<1x1x64xf32, #tpu.memory_space<vmem>>, %arg23: memref<1x64xf32, #tpu.memory_space<vmem>>, %arg24: memref<1x64xf32, #tpu.memory_space<vmem>>, %arg25: memref<64x384xbf16, #tpu.memory_space<vmem>>, %arg26: memref<1x384xf32, #tpu.memory_space<vmem>>, %arg27: memref<2x384xf32, #tpu.memory_space<vmem>>, %arg28: memref<10x64xf32, #tpu.memory_space<vmem>>) attributes {dimension_semantics = [#tpu.dimension_semantics<arbitrary>], iteration_bounds = array<i64: 2>, scalar_prefetch = 0 : i64, scratch_operands = 1 : i64, tpu.core_type = #tpu.core_type<tc>, window_params = [{pipeline_mode = #tpu.pipeline_mode<synchronous>, transform_indices = @transform_0, window_bounds = array<i64: 10, 192>}, {pipeline_mode = #tpu.pipeline_mode<synchronous>, transform_indices = @transform_1, window_bounds = array<i64: 192, 64>}, {pipeline_mode = #tpu.pipeline_mode<synchronous>, transform_indices = @transform_2, window_bounds = array<i64: 10, 64>}, {pipeline_mode = #tpu.pipeline_mode<synchronous>, transform_indices = @transform_3, window_bounds = array<i64: 1, 64>}, {pipeline_mode = #tpu.pipeline_mode<synchronous>, transform_indices = @transform_4, window_bounds = array<i64: 1, 64>}, {pipeline_mode = #tpu.pipeline_mode<synchronous>, transform_indices = @transform_5, window_bounds = array<i64: 10, 10>}, {transform_indices = @transform_6, window_bounds = array<i64: 1, 1, 64>}, {transform_indices = @transform_7, window_bounds = array<i64: 1, 1, 64>}, {transform_indices = @transform_8, window_bounds = array<i64: 1, 4, 64, 16>}, {transform_indices = @transform_9, window_bounds = array<i64: 1, 4, 64, 16>}, {transform_indices = @transform_10, window_bounds = array<i64: 1, 4, 64, 16>}, {transform_indices = @transform_11, window_bounds = array<i64: 1, 4, 1, 16>}, {transform_indices = @transform_12, window_bounds = array<i64: 1, 4, 1, 16>}, {transform_indices = @transform_13, window_bounds = array<i64: 1, 4, 1, 16>}, {transform_indices = @transform_14, window_bounds = array<i64: 1, 64, 64>}, {transform_indices = @transform_15, window_bounds = array<i64: 1, 1, 64>}, {transform_indices = @transform_16, window_bounds = array<i64: 1, 1, 64>}, {transform_indices = @transform_17, window_bounds = array<i64: 1, 1, 64>}, {transform_indices = @transform_18, window_bounds = array<i64: 1, 64, 256>}, {transform_indices = @transform_19, window_bounds = array<i64: 1, 1, 256>}, {transform_indices = @transform_20, window_bounds = array<i64: 1, 256, 64>}, {transform_indices = @transform_21, window_bounds = array<i64: 1, 1, 64>}, {pipeline_mode = #tpu.pipeline_mode<synchronous>, transform_indices = @transform_22, window_bounds = array<i64: 1, 64>}, {pipeline_mode = #tpu.pipeline_mode<synchronous>, transform_indices = @transform_23, window_bounds = array<i64: 1, 64>}, {pipeline_mode = #tpu.pipeline_mode<synchronous>, transform_indices = @transform_24, window_bounds = array<i64: 64, 384>}, {pipeline_mode = #tpu.pipeline_mode<synchronous>, transform_indices = @transform_25, window_bounds = array<i64: 1, 384>}, {pipeline_mode = #tpu.pipeline_mode<synchronous>, transform_indices = @transform_26, window_bounds = array<i64: 2, 384>}]} {
    %c0_i32 = arith.constant 0 : i32
    %0 = arith.cmpi eq, %arg0, %c0_i32 : i32
    %1 = arith.extui %0 : i1 to i32
    %c0_i32_0 = arith.constant 0 : i32
    %2 = arith.cmpi ne, %1, %c0_i32_0 : i32
    scf.if %2 {
      %c0_176 = arith.constant 0 : index
      %c0_177 = arith.constant 0 : index
      %256 = vector.load %arg1[%c0_176, %c0_177] : memref<10x192xbf16, #tpu.memory_space<vmem>>, vector<10x192xbf16>
      %c0_178 = arith.constant 0 : index
      %c0_179 = arith.constant 0 : index
      %257 = vector.load %arg2[%c0_178, %c0_179] : memref<192x64xbf16, #tpu.memory_space<vmem>>, vector<192x64xbf16>
      %cst_180 = arith.constant dense<0.000000e+00> : vector<10x64xf32>
      %258 = tpu.matmul %256, %257, %cst_180 {dimension_numbers = #tpu.dot_dimension_numbers<[1], [0], [0], [1], [0, 0, 1, 1], [], []>} : vector<10x192xbf16>, vector<192x64xbf16>, vector<10x64xf32> -> vector<10x64xf32>
      %c0_181 = arith.constant 0 : index
      %c0_182 = arith.constant 0 : index
      %259 = vector.load %arg3[%c0_181, %c0_182] : memref<10x64xf32, #tpu.memory_space<vmem>>, vector<10x64xf32>
      %260 = arith.addf %258, %259 : vector<10x64xf32>
      %c0_183 = arith.constant 0 : index
      %c0_184 = arith.constant 0 : index
      %261 = vector.load %arg4[%c0_183, %c0_184] : memref<1x64xf32, #tpu.memory_space<vmem>>, vector<1x64xf32>
      %c0_185 = arith.constant 0 : index
      %c0_186 = arith.constant 0 : index
      %262 = vector.load %arg5[%c0_185, %c0_186] : memref<1x64xf32, #tpu.memory_space<vmem>>, vector<1x64xf32>
      %cst_187 = arith.constant dense<0.000000e+00> : vector<10xf32>
      %263 = vector.multi_reduction <add>, %260, %cst_187 [1] : vector<10x64xf32> to vector<10xf32>
      %264 = vector.shape_cast %263 : vector<10xf32> to vector<10x1xf32>
      %cst_188 = arith.constant 6.400000e+01 : f32
      %265 = vector.broadcast %cst_188 : f32 to vector<10x1xf32>
      %266 = arith.divf %264, %265 : vector<10x1xf32>
      %267 = vector.broadcast %266 : vector<10x1xf32> to vector<10x64xf32>
      %268 = arith.subf %260, %267 : vector<10x64xf32>
      %269 = arith.mulf %268, %268 : vector<10x64xf32>
      %cst_189 = arith.constant dense<0.000000e+00> : vector<10xf32>
      %270 = vector.multi_reduction <add>, %269, %cst_189 [1] : vector<10x64xf32> to vector<10xf32>
      %271 = vector.shape_cast %270 : vector<10xf32> to vector<10x1xf32>
      %cst_190 = arith.constant 6.400000e+01 : f32
      %272 = vector.broadcast %cst_190 : f32 to vector<10x1xf32>
      %273 = arith.divf %271, %272 : vector<10x1xf32>
      %274 = vector.broadcast %266 : vector<10x1xf32> to vector<10x64xf32>
      %275 = arith.subf %260, %274 : vector<10x64xf32>
      %cst_191 = arith.constant 9.99999974E-6 : f32
      %276 = vector.broadcast %cst_191 : f32 to vector<10x1xf32>
      %277 = arith.addf %273, %276 : vector<10x1xf32>
      %278 = math.rsqrt %277 : vector<10x1xf32>
      %279 = vector.broadcast %278 : vector<10x1xf32> to vector<10x64xf32>
      %280 = arith.mulf %275, %279 : vector<10x64xf32>
      %281 = vector.broadcast %261 : vector<1x64xf32> to vector<10x64xf32>
      %282 = arith.mulf %280, %281 : vector<10x64xf32>
      %283 = vector.broadcast %262 : vector<1x64xf32> to vector<10x64xf32>
      %284 = arith.addf %282, %283 : vector<10x64xf32>
      %c0_192 = arith.constant 0 : index
      %c0_193 = arith.constant 0 : index
      %285 = vector.load %arg28[%c0_192, %c0_193] : memref<10x64xf32, #tpu.memory_space<vmem>>, vector<10x64xf32>
      tpu.vector_store %arg28[%c0_192, %c0_193], %284 {strides = array<i32>} : memref<10x64xf32, #tpu.memory_space<vmem>>, vector<10x64xf32>,
    } else {
    }
    %c0 = arith.constant 0 : index
    %c0_1 = arith.constant 0 : index
    %3 = vector.load %arg28[%c0, %c0_1] : memref<10x64xf32, #tpu.memory_space<vmem>>, vector<10x64xf32>
    %c0_2 = arith.constant 0 : index
    %c0_3 = arith.constant 0 : index
    %c0_4 = arith.constant 0 : index
    %4 = vector.load %arg7[%c0_2, %c0_3, %c0_4] : memref<1x1x64xf32, #tpu.memory_space<vmem>>, vector<1x1x64xf32>
    %5 = vector.shape_cast %4 : vector<1x1x64xf32> to vector<1x64xf32>
    %c0_5 = arith.constant 0 : index
    %c0_6 = arith.constant 0 : index
    %c0_7 = arith.constant 0 : index
    %6 = vector.load %arg8[%c0_5, %c0_6, %c0_7] : memref<1x1x64xf32, #tpu.memory_space<vmem>>, vector<1x1x64xf32>
    %7 = vector.shape_cast %6 : vector<1x1x64xf32> to vector<1x64xf32>
    %cst = arith.constant dense<0.000000e+00> : vector<10xf32>
    %8 = vector.multi_reduction <add>, %3, %cst [1] : vector<10x64xf32> to vector<10xf32>
    %9 = vector.shape_cast %8 : vector<10xf32> to vector<10x1xf32>
    %cst_8 = arith.constant 6.400000e+01 : f32
    %10 = vector.broadcast %cst_8 : f32 to vector<10x1xf32>
    %11 = arith.divf %9, %10 : vector<10x1xf32>
    %12 = vector.broadcast %11 : vector<10x1xf32> to vector<10x64xf32>
    %13 = arith.subf %3, %12 : vector<10x64xf32>
    %14 = arith.mulf %13, %13 : vector<10x64xf32>
    %cst_9 = arith.constant dense<0.000000e+00> : vector<10xf32>
    %15 = vector.multi_reduction <add>, %14, %cst_9 [1] : vector<10x64xf32> to vector<10xf32>
    %16 = vector.shape_cast %15 : vector<10xf32> to vector<10x1xf32>
    %cst_10 = arith.constant 6.400000e+01 : f32
    %17 = vector.broadcast %cst_10 : f32 to vector<10x1xf32>
    %18 = arith.divf %16, %17 : vector<10x1xf32>
    %19 = vector.broadcast %11 : vector<10x1xf32> to vector<10x64xf32>
    %20 = arith.subf %3, %19 : vector<10x64xf32>
    %cst_11 = arith.constant 9.99999974E-6 : f32
    %21 = vector.broadcast %cst_11 : f32 to vector<10x1xf32>
    %22 = arith.addf %18, %21 : vector<10x1xf32>
    %23 = math.rsqrt %22 : vector<10x1xf32>
    %24 = vector.broadcast %23 : vector<10x1xf32> to vector<10x64xf32>
    %25 = arith.mulf %20, %24 : vector<10x64xf32>
    %26 = vector.broadcast %5 : vector<1x64xf32> to vector<10x64xf32>
    %27 = arith.mulf %25, %26 : vector<10x64xf32>
    %28 = vector.broadcast %7 : vector<1x64xf32> to vector<10x64xf32>
    %29 = arith.addf %27, %28 : vector<10x64xf32>
    %30 = arith.truncf %29 : vector<10x64xf32> to vector<10x64xbf16>
    %c0_12 = arith.constant 0 : index
    %c0_13 = arith.constant 0 : index
    %31 = vector.load %arg6[%c0_12, %c0_13] : memref<10x10xf32, #tpu.memory_space<vmem>>, vector<10x10xf32>
    %c0_14 = arith.constant 0 : index
    %c0_15 = arith.constant 0 : index
    %c0_16 = arith.constant 0 : index
    %c0_17 = arith.constant 0 : index
    %32 = vector.load %arg9[%c0_14, %c0_15, %c0_16, %c0_17] : memref<1x4x64x16xbf16, #tpu.memory_space<vmem>>, vector<1x1x64x16xbf16>
    %33 = vector.shape_cast %32 : vector<1x1x64x16xbf16> to vector<64x16xbf16>
    %cst_18 = arith.constant dense<0.000000e+00> : vector<10x16xf32>
    %34 = tpu.matmul %30, %33, %cst_18 {dimension_numbers = #tpu.dot_dimension_numbers<[1], [0], [0], [1], [0, 0, 1, 1], [], []>} : vector<10x64xbf16>, vector<64x16xbf16>, vector<10x16xf32> -> vector<10x16xf32>
    %c0_19 = arith.constant 0 : index
    %c0_20 = arith.constant 0 : index
    %c0_21 = arith.constant 0 : index
    %c0_22 = arith.constant 0 : index
    %35 = vector.load %arg12[%c0_19, %c0_20, %c0_21, %c0_22] : memref<1x4x1x16xf32, #tpu.memory_space<vmem>>, vector<1x1x1x16xf32>
    %36 = vector.shape_cast %35 : vector<1x1x1x16xf32> to vector<1x16xf32>
    %37 = vector.broadcast %36 : vector<1x16xf32> to vector<10x16xf32>
    %38 = arith.addf %34, %37 : vector<10x16xf32>
    %c0_23 = arith.constant 0 : index
    %c0_24 = arith.constant 0 : index
    %c0_25 = arith.constant 0 : index
    %c0_26 = arith.constant 0 : index
    %39 = vector.load %arg10[%c0_23, %c0_24, %c0_25, %c0_26] : memref<1x4x64x16xbf16, #tpu.memory_space<vmem>>, vector<1x1x64x16xbf16>
    %40 = vector.shape_cast %39 : vector<1x1x64x16xbf16> to vector<64x16xbf16>
    %cst_27 = arith.constant dense<0.000000e+00> : vector<10x16xf32>
    %41 = tpu.matmul %30, %40, %cst_27 {dimension_numbers = #tpu.dot_dimension_numbers<[1], [0], [0], [1], [0, 0, 1, 1], [], []>} : vector<10x64xbf16>, vector<64x16xbf16>, vector<10x16xf32> -> vector<10x16xf32>
    %c0_28 = arith.constant 0 : index
    %c0_29 = arith.constant 0 : index
    %c0_30 = arith.constant 0 : index
    %c0_31 = arith.constant 0 : index
    %42 = vector.load %arg13[%c0_28, %c0_29, %c0_30, %c0_31] : memref<1x4x1x16xf32, #tpu.memory_space<vmem>>, vector<1x1x1x16xf32>
    %43 = vector.shape_cast %42 : vector<1x1x1x16xf32> to vector<1x16xf32>
    %44 = vector.broadcast %43 : vector<1x16xf32> to vector<10x16xf32>
    %45 = arith.addf %41, %44 : vector<10x16xf32>
    %c0_32 = arith.constant 0 : index
    %c0_33 = arith.constant 0 : index
    %c0_34 = arith.constant 0 : index
    %c0_35 = arith.constant 0 : index
    %46 = vector.load %arg11[%c0_32, %c0_33, %c0_34, %c0_35] : memref<1x4x64x16xbf16, #tpu.memory_space<vmem>>, vector<1x1x64x16xbf16>
    %47 = vector.shape_cast %46 : vector<1x1x64x16xbf16> to vector<64x16xbf16>
    %cst_36 = arith.constant dense<0.000000e+00> : vector<10x16xf32>
    %48 = tpu.matmul %30, %47, %cst_36 {dimension_numbers = #tpu.dot_dimension_numbers<[1], [0], [0], [1], [0, 0, 1, 1], [], []>} : vector<10x64xbf16>, vector<64x16xbf16>, vector<10x16xf32> -> vector<10x16xf32>
    %c0_37 = arith.constant 0 : index
    %c0_38 = arith.constant 0 : index
    %c0_39 = arith.constant 0 : index
    %c0_40 = arith.constant 0 : index
    %49 = vector.load %arg14[%c0_37, %c0_38, %c0_39, %c0_40] : memref<1x4x1x16xf32, #tpu.memory_space<vmem>>, vector<1x1x1x16xf32>
    %50 = vector.shape_cast %49 : vector<1x1x1x16xf32> to vector<1x16xf32>
    %51 = vector.broadcast %50 : vector<1x16xf32> to vector<10x16xf32>
    %52 = arith.addf %48, %51 : vector<10x16xf32>
    %53 = arith.truncf %38 : vector<10x16xf32> to vector<10x16xbf16>
    %54 = arith.truncf %45 : vector<10x16xf32> to vector<10x16xbf16>
    %cst_41 = arith.constant dense<0.000000e+00> : vector<10x10xf32>
    %55 = tpu.matmul %53, %54, %cst_41 {dimension_numbers = #tpu.dot_dimension_numbers<[1], [1], [0], [0], [0, 0, 1, 0], [], []>} : vector<10x16xbf16>, vector<10x16xbf16>, vector<10x10xf32> -> vector<10x10xf32>
    %cst_42 = arith.constant 2.500000e-01 : f32
    %56 = vector.broadcast %cst_42 : f32 to vector<10x10xf32>
    %57 = arith.mulf %55, %56 : vector<10x10xf32>
    %58 = arith.addf %57, %31 : vector<10x10xf32>
    %cst_43 = arith.constant dense<0xFF800000> : vector<10xf32>
    %59 = vector.multi_reduction <maximumf>, %58, %cst_43 [1] : vector<10x10xf32> to vector<10xf32>
    %60 = vector.shape_cast %59 : vector<10xf32> to vector<10x1xf32>
    %61 = vector.broadcast %60 : vector<10x1xf32> to vector<10x10xf32>
    %62 = arith.subf %58, %61 : vector<10x10xf32>
    %63 = math.exp %62 : vector<10x10xf32>
    %cst_44 = arith.constant dense<0.000000e+00> : vector<10xf32>
    %64 = vector.multi_reduction <add>, %63, %cst_44 [1] : vector<10x10xf32> to vector<10xf32>
    %65 = vector.shape_cast %64 : vector<10xf32> to vector<10x1xf32>
    %66 = tpu.reciprocal %65 {approx = true} : vector<10x1xf32> -> vector<10x1xf32>
    %67 = vector.broadcast %66 : vector<10x1xf32> to vector<10x10xf32>
    %68 = arith.mulf %63, %67 : vector<10x10xf32>
    %69 = arith.truncf %68 : vector<10x10xf32> to vector<10x10xbf16>
    %70 = arith.truncf %52 : vector<10x16xf32> to vector<10x16xbf16>
    %cst_45 = arith.constant dense<0.000000e+00> : vector<10x16xf32>
    %71 = tpu.matmul %69, %70, %cst_45 {dimension_numbers = #tpu.dot_dimension_numbers<[1], [0], [0], [1], [0, 0, 1, 1], [], []>} : vector<10x10xbf16>, vector<10x16xbf16>, vector<10x16xf32> -> vector<10x16xf32>
    %c0_46 = arith.constant 0 : index
    %c1 = arith.constant 1 : index
    %c0_47 = arith.constant 0 : index
    %c0_48 = arith.constant 0 : index
    %72 = vector.load %arg9[%c0_46, %c1, %c0_47, %c0_48] : memref<1x4x64x16xbf16, #tpu.memory_space<vmem>>, vector<1x1x64x16xbf16>
    %73 = vector.shape_cast %72 : vector<1x1x64x16xbf16> to vector<64x16xbf16>
    %cst_49 = arith.constant dense<0.000000e+00> : vector<10x16xf32>
    %74 = tpu.matmul %30, %73, %cst_49 {dimension_numbers = #tpu.dot_dimension_numbers<[1], [0], [0], [1], [0, 0, 1, 1], [], []>} : vector<10x64xbf16>, vector<64x16xbf16>, vector<10x16xf32> -> vector<10x16xf32>
    %c0_50 = arith.constant 0 : index
    %c1_51 = arith.constant 1 : index
    %c0_52 = arith.constant 0 : index
    %c0_53 = arith.constant 0 : index
    %75 = vector.load %arg12[%c0_50, %c1_51, %c0_52, %c0_53] : memref<1x4x1x16xf32, #tpu.memory_space<vmem>>, vector<1x1x1x16xf32>
    %76 = vector.shape_cast %75 : vector<1x1x1x16xf32> to vector<1x16xf32>
    %77 = vector.broadcast %76 : vector<1x16xf32> to vector<10x16xf32>
    %78 = arith.addf %74, %77 : vector<10x16xf32>
    %c0_54 = arith.constant 0 : index
    %c1_55 = arith.constant 1 : index
    %c0_56 = arith.constant 0 : index
    %c0_57 = arith.constant 0 : index
    %79 = vector.load %arg10[%c0_54, %c1_55, %c0_56, %c0_57] : memref<1x4x64x16xbf16, #tpu.memory_space<vmem>>, vector<1x1x64x16xbf16>
    %80 = vector.shape_cast %79 : vector<1x1x64x16xbf16> to vector<64x16xbf16>
    %cst_58 = arith.constant dense<0.000000e+00> : vector<10x16xf32>
    %81 = tpu.matmul %30, %80, %cst_58 {dimension_numbers = #tpu.dot_dimension_numbers<[1], [0], [0], [1], [0, 0, 1, 1], [], []>} : vector<10x64xbf16>, vector<64x16xbf16>, vector<10x16xf32> -> vector<10x16xf32>
    %c0_59 = arith.constant 0 : index
    %c1_60 = arith.constant 1 : index
    %c0_61 = arith.constant 0 : index
    %c0_62 = arith.constant 0 : index
    %82 = vector.load %arg13[%c0_59, %c1_60, %c0_61, %c0_62] : memref<1x4x1x16xf32, #tpu.memory_space<vmem>>, vector<1x1x1x16xf32>
    %83 = vector.shape_cast %82 : vector<1x1x1x16xf32> to vector<1x16xf32>
    %84 = vector.broadcast %83 : vector<1x16xf32> to vector<10x16xf32>
    %85 = arith.addf %81, %84 : vector<10x16xf32>
    %c0_63 = arith.constant 0 : index
    %c1_64 = arith.constant 1 : index
    %c0_65 = arith.constant 0 : index
    %c0_66 = arith.constant 0 : index
    %86 = vector.load %arg11[%c0_63, %c1_64, %c0_65, %c0_66] : memref<1x4x64x16xbf16, #tpu.memory_space<vmem>>, vector<1x1x64x16xbf16>
    %87 = vector.shape_cast %86 : vector<1x1x64x16xbf16> to vector<64x16xbf16>
    %cst_67 = arith.constant dense<0.000000e+00> : vector<10x16xf32>
    %88 = tpu.matmul %30, %87, %cst_67 {dimension_numbers = #tpu.dot_dimension_numbers<[1], [0], [0], [1], [0, 0, 1, 1], [], []>} : vector<10x64xbf16>, vector<64x16xbf16>, vector<10x16xf32> -> vector<10x16xf32>
    %c0_68 = arith.constant 0 : index
    %c1_69 = arith.constant 1 : index
    %c0_70 = arith.constant 0 : index
    %c0_71 = arith.constant 0 : index
    %89 = vector.load %arg14[%c0_68, %c1_69, %c0_70, %c0_71] : memref<1x4x1x16xf32, #tpu.memory_space<vmem>>, vector<1x1x1x16xf32>
    %90 = vector.shape_cast %89 : vector<1x1x1x16xf32> to vector<1x16xf32>
    %91 = vector.broadcast %90 : vector<1x16xf32> to vector<10x16xf32>
    %92 = arith.addf %88, %91 : vector<10x16xf32>
    %93 = arith.truncf %78 : vector<10x16xf32> to vector<10x16xbf16>
    %94 = arith.truncf %85 : vector<10x16xf32> to vector<10x16xbf16>
    %cst_72 = arith.constant dense<0.000000e+00> : vector<10x10xf32>
    %95 = tpu.matmul %93, %94, %cst_72 {dimension_numbers = #tpu.dot_dimension_numbers<[1], [1], [0], [0], [0, 0, 1, 0], [], []>} : vector<10x16xbf16>, vector<10x16xbf16>, vector<10x10xf32> -> vector<10x10xf32>
    %cst_73 = arith.constant 2.500000e-01 : f32
    %96 = vector.broadcast %cst_73 : f32 to vector<10x10xf32>
    %97 = arith.mulf %95, %96 : vector<10x10xf32>
    %98 = arith.addf %97, %31 : vector<10x10xf32>
    %cst_74 = arith.constant dense<0xFF800000> : vector<10xf32>
    %99 = vector.multi_reduction <maximumf>, %98, %cst_74 [1] : vector<10x10xf32> to vector<10xf32>
    %100 = vector.shape_cast %99 : vector<10xf32> to vector<10x1xf32>
    %101 = vector.broadcast %100 : vector<10x1xf32> to vector<10x10xf32>
    %102 = arith.subf %98, %101 : vector<10x10xf32>
    %103 = math.exp %102 : vector<10x10xf32>
    %cst_75 = arith.constant dense<0.000000e+00> : vector<10xf32>
    %104 = vector.multi_reduction <add>, %103, %cst_75 [1] : vector<10x10xf32> to vector<10xf32>
    %105 = vector.shape_cast %104 : vector<10xf32> to vector<10x1xf32>
    %106 = tpu.reciprocal %105 {approx = true} : vector<10x1xf32> -> vector<10x1xf32>
    %107 = vector.broadcast %106 : vector<10x1xf32> to vector<10x10xf32>
    %108 = arith.mulf %103, %107 : vector<10x10xf32>
    %109 = arith.truncf %108 : vector<10x10xf32> to vector<10x10xbf16>
    %110 = arith.truncf %92 : vector<10x16xf32> to vector<10x16xbf16>
    %cst_76 = arith.constant dense<0.000000e+00> : vector<10x16xf32>
    %111 = tpu.matmul %109, %110, %cst_76 {dimension_numbers = #tpu.dot_dimension_numbers<[1], [0], [0], [1], [0, 0, 1, 1], [], []>} : vector<10x10xbf16>, vector<10x16xbf16>, vector<10x16xf32> -> vector<10x16xf32>
    %c0_77 = arith.constant 0 : index
    %c2 = arith.constant 2 : index
    %c0_78 = arith.constant 0 : index
    %c0_79 = arith.constant 0 : index
    %112 = vector.load %arg9[%c0_77, %c2, %c0_78, %c0_79] : memref<1x4x64x16xbf16, #tpu.memory_space<vmem>>, vector<1x1x64x16xbf16>
    %113 = vector.shape_cast %112 : vector<1x1x64x16xbf16> to vector<64x16xbf16>
    %cst_80 = arith.constant dense<0.000000e+00> : vector<10x16xf32>
    %114 = tpu.matmul %30, %113, %cst_80 {dimension_numbers = #tpu.dot_dimension_numbers<[1], [0], [0], [1], [0, 0, 1, 1], [], []>} : vector<10x64xbf16>, vector<64x16xbf16>, vector<10x16xf32> -> vector<10x16xf32>
    %c0_81 = arith.constant 0 : index
    %c2_82 = arith.constant 2 : index
    %c0_83 = arith.constant 0 : index
    %c0_84 = arith.constant 0 : index
    %115 = vector.load %arg12[%c0_81, %c2_82, %c0_83, %c0_84] : memref<1x4x1x16xf32, #tpu.memory_space<vmem>>, vector<1x1x1x16xf32>
    %116 = vector.shape_cast %115 : vector<1x1x1x16xf32> to vector<1x16xf32>
    %117 = vector.broadcast %116 : vector<1x16xf32> to vector<10x16xf32>
    %118 = arith.addf %114, %117 : vector<10x16xf32>
    %c0_85 = arith.constant 0 : index
    %c2_86 = arith.constant 2 : index
    %c0_87 = arith.constant 0 : index
    %c0_88 = arith.constant 0 : index
    %119 = vector.load %arg10[%c0_85, %c2_86, %c0_87, %c0_88] : memref<1x4x64x16xbf16, #tpu.memory_space<vmem>>, vector<1x1x64x16xbf16>
    %120 = vector.shape_cast %119 : vector<1x1x64x16xbf16> to vector<64x16xbf16>
    %cst_89 = arith.constant dense<0.000000e+00> : vector<10x16xf32>
    %121 = tpu.matmul %30, %120, %cst_89 {dimension_numbers = #tpu.dot_dimension_numbers<[1], [0], [0], [1], [0, 0, 1, 1], [], []>} : vector<10x64xbf16>, vector<64x16xbf16>, vector<10x16xf32> -> vector<10x16xf32>
    %c0_90 = arith.constant 0 : index
    %c2_91 = arith.constant 2 : index
    %c0_92 = arith.constant 0 : index
    %c0_93 = arith.constant 0 : index
    %122 = vector.load %arg13[%c0_90, %c2_91, %c0_92, %c0_93] : memref<1x4x1x16xf32, #tpu.memory_space<vmem>>, vector<1x1x1x16xf32>
    %123 = vector.shape_cast %122 : vector<1x1x1x16xf32> to vector<1x16xf32>
    %124 = vector.broadcast %123 : vector<1x16xf32> to vector<10x16xf32>
    %125 = arith.addf %121, %124 : vector<10x16xf32>
    %c0_94 = arith.constant 0 : index
    %c2_95 = arith.constant 2 : index
    %c0_96 = arith.constant 0 : index
    %c0_97 = arith.constant 0 : index
    %126 = vector.load %arg11[%c0_94, %c2_95, %c0_96, %c0_97] : memref<1x4x64x16xbf16, #tpu.memory_space<vmem>>, vector<1x1x64x16xbf16>
    %127 = vector.shape_cast %126 : vector<1x1x64x16xbf16> to vector<64x16xbf16>
    %cst_98 = arith.constant dense<0.000000e+00> : vector<10x16xf32>
    %128 = tpu.matmul %30, %127, %cst_98 {dimension_numbers = #tpu.dot_dimension_numbers<[1], [0], [0], [1], [0, 0, 1, 1], [], []>} : vector<10x64xbf16>, vector<64x16xbf16>, vector<10x16xf32> -> vector<10x16xf32>
    %c0_99 = arith.constant 0 : index
    %c2_100 = arith.constant 2 : index
    %c0_101 = arith.constant 0 : index
    %c0_102 = arith.constant 0 : index
    %129 = vector.load %arg14[%c0_99, %c2_100, %c0_101, %c0_102] : memref<1x4x1x16xf32, #tpu.memory_space<vmem>>, vector<1x1x1x16xf32>
    %130 = vector.shape_cast %129 : vector<1x1x1x16xf32> to vector<1x16xf32>
    %131 = vector.broadcast %130 : vector<1x16xf32> to vector<10x16xf32>
    %132 = arith.addf %128, %131 : vector<10x16xf32>
    %133 = arith.truncf %118 : vector<10x16xf32> to vector<10x16xbf16>
    %134 = arith.truncf %125 : vector<10x16xf32> to vector<10x16xbf16>
    %cst_103 = arith.constant dense<0.000000e+00> : vector<10x10xf32>
    %135 = tpu.matmul %133, %134, %cst_103 {dimension_numbers = #tpu.dot_dimension_numbers<[1], [1], [0], [0], [0, 0, 1, 0], [], []>} : vector<10x16xbf16>, vector<10x16xbf16>, vector<10x10xf32> -> vector<10x10xf32>
    %cst_104 = arith.constant 2.500000e-01 : f32
    %136 = vector.broadcast %cst_104 : f32 to vector<10x10xf32>
    %137 = arith.mulf %135, %136 : vector<10x10xf32>
    %138 = arith.addf %137, %31 : vector<10x10xf32>
    %cst_105 = arith.constant dense<0xFF800000> : vector<10xf32>
    %139 = vector.multi_reduction <maximumf>, %138, %cst_105 [1] : vector<10x10xf32> to vector<10xf32>
    %140 = vector.shape_cast %139 : vector<10xf32> to vector<10x1xf32>
    %141 = vector.broadcast %140 : vector<10x1xf32> to vector<10x10xf32>
    %142 = arith.subf %138, %141 : vector<10x10xf32>
    %143 = math.exp %142 : vector<10x10xf32>
    %cst_106 = arith.constant dense<0.000000e+00> : vector<10xf32>
    %144 = vector.multi_reduction <add>, %143, %cst_106 [1] : vector<10x10xf32> to vector<10xf32>
    %145 = vector.shape_cast %144 : vector<10xf32> to vector<10x1xf32>
    %146 = tpu.reciprocal %145 {approx = true} : vector<10x1xf32> -> vector<10x1xf32>
    %147 = vector.broadcast %146 : vector<10x1xf32> to vector<10x10xf32>
    %148 = arith.mulf %143, %147 : vector<10x10xf32>
    %149 = arith.truncf %148 : vector<10x10xf32> to vector<10x10xbf16>
    %150 = arith.truncf %132 : vector<10x16xf32> to vector<10x16xbf16>
    %cst_107 = arith.constant dense<0.000000e+00> : vector<10x16xf32>
    %151 = tpu.matmul %149, %150, %cst_107 {dimension_numbers = #tpu.dot_dimension_numbers<[1], [0], [0], [1], [0, 0, 1, 1], [], []>} : vector<10x10xbf16>, vector<10x16xbf16>, vector<10x16xf32> -> vector<10x16xf32>
    %c0_108 = arith.constant 0 : index
    %c3 = arith.constant 3 : index
    %c0_109 = arith.constant 0 : index
    %c0_110 = arith.constant 0 : index
    %152 = vector.load %arg9[%c0_108, %c3, %c0_109, %c0_110] : memref<1x4x64x16xbf16, #tpu.memory_space<vmem>>, vector<1x1x64x16xbf16>
    %153 = vector.shape_cast %152 : vector<1x1x64x16xbf16> to vector<64x16xbf16>
    %cst_111 = arith.constant dense<0.000000e+00> : vector<10x16xf32>
    %154 = tpu.matmul %30, %153, %cst_111 {dimension_numbers = #tpu.dot_dimension_numbers<[1], [0], [0], [1], [0, 0, 1, 1], [], []>} : vector<10x64xbf16>, vector<64x16xbf16>, vector<10x16xf32> -> vector<10x16xf32>
    %c0_112 = arith.constant 0 : index
    %c3_113 = arith.constant 3 : index
    %c0_114 = arith.constant 0 : index
    %c0_115 = arith.constant 0 : index
    %155 = vector.load %arg12[%c0_112, %c3_113, %c0_114, %c0_115] : memref<1x4x1x16xf32, #tpu.memory_space<vmem>>, vector<1x1x1x16xf32>
    %156 = vector.shape_cast %155 : vector<1x1x1x16xf32> to vector<1x16xf32>
    %157 = vector.broadcast %156 : vector<1x16xf32> to vector<10x16xf32>
    %158 = arith.addf %154, %157 : vector<10x16xf32>
    %c0_116 = arith.constant 0 : index
    %c3_117 = arith.constant 3 : index
    %c0_118 = arith.constant 0 : index
    %c0_119 = arith.constant 0 : index
    %159 = vector.load %arg10[%c0_116, %c3_117, %c0_118, %c0_119] : memref<1x4x64x16xbf16, #tpu.memory_space<vmem>>, vector<1x1x64x16xbf16>
    %160 = vector.shape_cast %159 : vector<1x1x64x16xbf16> to vector<64x16xbf16>
    %cst_120 = arith.constant dense<0.000000e+00> : vector<10x16xf32>
    %161 = tpu.matmul %30, %160, %cst_120 {dimension_numbers = #tpu.dot_dimension_numbers<[1], [0], [0], [1], [0, 0, 1, 1], [], []>} : vector<10x64xbf16>, vector<64x16xbf16>, vector<10x16xf32> -> vector<10x16xf32>
    %c0_121 = arith.constant 0 : index
    %c3_122 = arith.constant 3 : index
    %c0_123 = arith.constant 0 : index
    %c0_124 = arith.constant 0 : index
    %162 = vector.load %arg13[%c0_121, %c3_122, %c0_123, %c0_124] : memref<1x4x1x16xf32, #tpu.memory_space<vmem>>, vector<1x1x1x16xf32>
    %163 = vector.shape_cast %162 : vector<1x1x1x16xf32> to vector<1x16xf32>
    %164 = vector.broadcast %163 : vector<1x16xf32> to vector<10x16xf32>
    %165 = arith.addf %161, %164 : vector<10x16xf32>
    %c0_125 = arith.constant 0 : index
    %c3_126 = arith.constant 3 : index
    %c0_127 = arith.constant 0 : index
    %c0_128 = arith.constant 0 : index
    %166 = vector.load %arg11[%c0_125, %c3_126, %c0_127, %c0_128] : memref<1x4x64x16xbf16, #tpu.memory_space<vmem>>, vector<1x1x64x16xbf16>
    %167 = vector.shape_cast %166 : vector<1x1x64x16xbf16> to vector<64x16xbf16>
    %cst_129 = arith.constant dense<0.000000e+00> : vector<10x16xf32>
    %168 = tpu.matmul %30, %167, %cst_129 {dimension_numbers = #tpu.dot_dimension_numbers<[1], [0], [0], [1], [0, 0, 1, 1], [], []>} : vector<10x64xbf16>, vector<64x16xbf16>, vector<10x16xf32> -> vector<10x16xf32>
    %c0_130 = arith.constant 0 : index
    %c3_131 = arith.constant 3 : index
    %c0_132 = arith.constant 0 : index
    %c0_133 = arith.constant 0 : index
    %169 = vector.load %arg14[%c0_130, %c3_131, %c0_132, %c0_133] : memref<1x4x1x16xf32, #tpu.memory_space<vmem>>, vector<1x1x1x16xf32>
    %170 = vector.shape_cast %169 : vector<1x1x1x16xf32> to vector<1x16xf32>
    %171 = vector.broadcast %170 : vector<1x16xf32> to vector<10x16xf32>
    %172 = arith.addf %168, %171 : vector<10x16xf32>
    %173 = arith.truncf %158 : vector<10x16xf32> to vector<10x16xbf16>
    %174 = arith.truncf %165 : vector<10x16xf32> to vector<10x16xbf16>
    %cst_134 = arith.constant dense<0.000000e+00> : vector<10x10xf32>
    %175 = tpu.matmul %173, %174, %cst_134 {dimension_numbers = #tpu.dot_dimension_numbers<[1], [1], [0], [0], [0, 0, 1, 0], [], []>} : vector<10x16xbf16>, vector<10x16xbf16>, vector<10x10xf32> -> vector<10x10xf32>
    %cst_135 = arith.constant 2.500000e-01 : f32
    %176 = vector.broadcast %cst_135 : f32 to vector<10x10xf32>
    %177 = arith.mulf %175, %176 : vector<10x10xf32>
    %178 = arith.addf %177, %31 : vector<10x10xf32>
    %cst_136 = arith.constant dense<0xFF800000> : vector<10xf32>
    %179 = vector.multi_reduction <maximumf>, %178, %cst_136 [1] : vector<10x10xf32> to vector<10xf32>
    %180 = vector.shape_cast %179 : vector<10xf32> to vector<10x1xf32>
    %181 = vector.broadcast %180 : vector<10x1xf32> to vector<10x10xf32>
    %182 = arith.subf %178, %181 : vector<10x10xf32>
    %183 = math.exp %182 : vector<10x10xf32>
    %cst_137 = arith.constant dense<0.000000e+00> : vector<10xf32>
    %184 = vector.multi_reduction <add>, %183, %cst_137 [1] : vector<10x10xf32> to vector<10xf32>
    %185 = vector.shape_cast %184 : vector<10xf32> to vector<10x1xf32>
    %186 = tpu.reciprocal %185 {approx = true} : vector<10x1xf32> -> vector<10x1xf32>
    %187 = vector.broadcast %186 : vector<10x1xf32> to vector<10x10xf32>
    %188 = arith.mulf %183, %187 : vector<10x10xf32>
    %189 = arith.truncf %188 : vector<10x10xf32> to vector<10x10xbf16>
    %190 = arith.truncf %172 : vector<10x16xf32> to vector<10x16xbf16>
    %cst_138 = arith.constant dense<0.000000e+00> : vector<10x16xf32>
    %191 = tpu.matmul %189, %190, %cst_138 {dimension_numbers = #tpu.dot_dimension_numbers<[1], [0], [0], [1], [0, 0, 1, 1], [], []>} : vector<10x10xbf16>, vector<10x16xbf16>, vector<10x16xf32> -> vector<10x16xf32>
    %192 = tpu.concatenate %71, %111, %151, %191 in 1 : vector<10x16xf32>, vector<10x16xf32>, vector<10x16xf32>, vector<10x16xf32> -> vector<10x64xf32>
    %193 = arith.truncf %192 : vector<10x64xf32> to vector<10x64xbf16>
    %c0_139 = arith.constant 0 : index
    %c0_140 = arith.constant 0 : index
    %c0_141 = arith.constant 0 : index
    %194 = vector.load %arg15[%c0_139, %c0_140, %c0_141] : memref<1x64x64xbf16, #tpu.memory_space<vmem>>, vector<1x64x64xbf16>
    %195 = vector.shape_cast %194 : vector<1x64x64xbf16> to vector<64x64xbf16>
    %cst_142 = arith.constant dense<0.000000e+00> : vector<10x64xf32>
    %196 = tpu.matmul %193, %195, %cst_142 {dimension_numbers = #tpu.dot_dimension_numbers<[1], [0], [0], [1], [0, 0, 1, 1], [], []>} : vector<10x64xbf16>, vector<64x64xbf16>, vector<10x64xf32> -> vector<10x64xf32>
    %c0_143 = arith.constant 0 : index
    %c0_144 = arith.constant 0 : index
    %c0_145 = arith.constant 0 : index
    %197 = vector.load %arg16[%c0_143, %c0_144, %c0_145] : memref<1x1x64xf32, #tpu.memory_space<vmem>>, vector<1x1x64xf32>
    %198 = vector.shape_cast %197 : vector<1x1x64xf32> to vector<1x64xf32>
    %199 = vector.broadcast %198 : vector<1x64xf32> to vector<10x64xf32>
    %200 = arith.addf %196, %199 : vector<10x64xf32>
    %201 = arith.addf %3, %200 : vector<10x64xf32>
    %c0_146 = arith.constant 0 : index
    %c0_147 = arith.constant 0 : index
    %c0_148 = arith.constant 0 : index
    %202 = vector.load %arg17[%c0_146, %c0_147, %c0_148] : memref<1x1x64xf32, #tpu.memory_space<vmem>>, vector<1x1x64xf32>
    %203 = vector.shape_cast %202 : vector<1x1x64xf32> to vector<1x64xf32>
    %c0_149 = arith.constant 0 : index
    %c0_150 = arith.constant 0 : index
    %c0_151 = arith.constant 0 : index
    %204 = vector.load %arg18[%c0_149, %c0_150, %c0_151] : memref<1x1x64xf32, #tpu.memory_space<vmem>>, vector<1x1x64xf32>
    %205 = vector.shape_cast %204 : vector<1x1x64xf32> to vector<1x64xf32>
    %cst_152 = arith.constant dense<0.000000e+00> : vector<10xf32>
    %206 = vector.multi_reduction <add>, %201, %cst_152 [1] : vector<10x64xf32> to vector<10xf32>
    %207 = vector.shape_cast %206 : vector<10xf32> to vector<10x1xf32>
    %cst_153 = arith.constant 6.400000e+01 : f32
    %208 = vector.broadcast %cst_153 : f32 to vector<10x1xf32>
    %209 = arith.divf %207, %208 : vector<10x1xf32>
    %210 = vector.broadcast %209 : vector<10x1xf32> to vector<10x64xf32>
    %211 = arith.subf %201, %210 : vector<10x64xf32>
    %212 = arith.mulf %211, %211 : vector<10x64xf32>
    %cst_154 = arith.constant dense<0.000000e+00> : vector<10xf32>
    %213 = vector.multi_reduction <add>, %212, %cst_154 [1] : vector<10x64xf32> to vector<10xf32>
    %214 = vector.shape_cast %213 : vector<10xf32> to vector<10x1xf32>
    %cst_155 = arith.constant 6.400000e+01 : f32
    %215 = vector.broadcast %cst_155 : f32 to vector<10x1xf32>
    %216 = arith.divf %214, %215 : vector<10x1xf32>
    %217 = vector.broadcast %209 : vector<10x1xf32> to vector<10x64xf32>
    %218 = arith.subf %201, %217 : vector<10x64xf32>
    %cst_156 = arith.constant 9.99999974E-6 : f32
    %219 = vector.broadcast %cst_156 : f32 to vector<10x1xf32>
    %220 = arith.addf %216, %219 : vector<10x1xf32>
    %221 = math.rsqrt %220 : vector<10x1xf32>
    %222 = vector.broadcast %221 : vector<10x1xf32> to vector<10x64xf32>
    %223 = arith.mulf %218, %222 : vector<10x64xf32>
    %224 = vector.broadcast %203 : vector<1x64xf32> to vector<10x64xf32>
    %225 = arith.mulf %223, %224 : vector<10x64xf32>
    %226 = vector.broadcast %205 : vector<1x64xf32> to vector<10x64xf32>
    %227 = arith.addf %225, %226 : vector<10x64xf32>
    %228 = arith.truncf %227 : vector<10x64xf32> to vector<10x64xbf16>
    %c0_157 = arith.constant 0 : index
    %c0_158 = arith.constant 0 : index
    %c0_159 = arith.constant 0 : index
    %229 = vector.load %arg19[%c0_157, %c0_158, %c0_159] : memref<1x64x256xbf16, #tpu.memory_space<vmem>>, vector<1x64x256xbf16>
    %230 = vector.shape_cast %229 : vector<1x64x256xbf16> to vector<64x256xbf16>
    %cst_160 = arith.constant dense<0.000000e+00> : vector<10x256xf32>
    %231 = tpu.matmul %228, %230, %cst_160 {dimension_numbers = #tpu.dot_dimension_numbers<[1], [0], [0], [1], [0, 0, 1, 1], [], []>} : vector<10x64xbf16>, vector<64x256xbf16>, vector<10x256xf32> -> vector<10x256xf32>
    %c0_161 = arith.constant 0 : index
    %c0_162 = arith.constant 0 : index
    %c0_163 = arith.constant 0 : index
    %232 = vector.load %arg20[%c0_161, %c0_162, %c0_163] : memref<1x1x256xf32, #tpu.memory_space<vmem>>, vector<1x1x256xf32>
    %233 = vector.shape_cast %232 : vector<1x1x256xf32> to vector<1x256xf32>
    %234 = vector.broadcast %233 : vector<1x256xf32> to vector<10x256xf32>
    %235 = arith.addf %231, %234 : vector<10x256xf32>
    %cst_164 = arith.constant -1.702000e+00 : f32
    %236 = vector.broadcast %cst_164 : f32 to vector<10x256xf32>
    %237 = arith.mulf %236, %235 : vector<10x256xf32>
    %238 = math.exp %237 : vector<10x256xf32>
    %cst_165 = arith.constant 1.000000e+00 : f32
    %239 = vector.broadcast %cst_165 : f32 to vector<10x256xf32>
    %240 = arith.addf %239, %238 : vector<10x256xf32>
    %241 = tpu.reciprocal %240 {approx = true} : vector<10x256xf32> -> vector<10x256xf32>
    %242 = arith.mulf %235, %241 : vector<10x256xf32>
    %243 = arith.truncf %242 : vector<10x256xf32> to vector<10x256xbf16>
    %c0_166 = arith.constant 0 : index
    %c0_167 = arith.constant 0 : index
    %c0_168 = arith.constant 0 : index
    %244 = vector.load %arg21[%c0_166, %c0_167, %c0_168] : memref<1x256x64xbf16, #tpu.memory_space<vmem>>, vector<1x256x64xbf16>
    %245 = vector.shape_cast %244 : vector<1x256x64xbf16> to vector<256x64xbf16>
    %cst_169 = arith.constant dense<0.000000e+00> : vector<10x64xf32>
    %246 = tpu.matmul %243, %245, %cst_169 {dimension_numbers = #tpu.dot_dimension_numbers<[1], [0], [0], [1], [0, 0, 1, 1], [], []>} : vector<10x256xbf16>, vector<256x64xbf16>, vector<10x64xf32> -> vector<10x64xf32>
    %c0_170 = arith.constant 0 : index
    %c0_171 = arith.constant 0 : index
    %c0_172 = arith.constant 0 : index
    %247 = vector.load %arg22[%c0_170, %c0_171, %c0_172] : memref<1x1x64xf32, #tpu.memory_space<vmem>>, vector<1x1x64xf32>
    %248 = vector.shape_cast %247 : vector<1x1x64xf32> to vector<1x64xf32>
    %249 = vector.broadcast %248 : vector<1x64xf32> to vector<10x64xf32>
    %250 = arith.addf %246, %249 : vector<10x64xf32>
    %251 = arith.addf %201, %250 : vector<10x64xf32>
    %c0_173 = arith.constant 0 : index
    %c0_174 = arith.constant 0 : index
    %252 = vector.load %arg28[%c0_173, %c0_174] : memref<10x64xf32, #tpu.memory_space<vmem>>, vector<10x64xf32>
    tpu.vector_store %arg28[%c0_173, %c0_174], %251 {strides = array<i32>} : memref<10x64xf32, #tpu.memory_space<vmem>>, vector<10x64xf32>,
    %c1_i32 = arith.constant 1 : i32
    %253 = arith.cmpi eq, %arg0, %c1_i32 : i32
    %254 = arith.extui %253 : i1 to i32
    %c0_i32_175 = arith.constant 0 : i32
    %255 = arith.cmpi ne, %254, %c0_i32_175 : i32
    scf.if %255 {
      %c0_176 = arith.constant 0 : index
      %c0_177 = arith.constant 0 : index
      %256 = vector.load %arg28[%c0_176, %c0_177] : memref<10x64xf32, #tpu.memory_space<vmem>>, vector<1x64xf32>
      %c5 = arith.constant 5 : index
      %c0_178 = arith.constant 0 : index
      %257 = vector.load %arg28[%c5, %c0_178] : memref<10x64xf32, #tpu.memory_space<vmem>>, vector<1x64xf32>
      %258 = tpu.concatenate %256, %257 in 0 : vector<1x64xf32>, vector<1x64xf32> -> vector<2x64xf32>
      %c0_179 = arith.constant 0 : index
      %c0_180 = arith.constant 0 : index
      %259 = vector.load %arg23[%c0_179, %c0_180] : memref<1x64xf32, #tpu.memory_space<vmem>>, vector<1x64xf32>
      %c0_181 = arith.constant 0 : index
      %c0_182 = arith.constant 0 : index
      %260 = vector.load %arg24[%c0_181, %c0_182] : memref<1x64xf32, #tpu.memory_space<vmem>>, vector<1x64xf32>
      %cst_183 = arith.constant dense<0.000000e+00> : vector<2xf32>
      %261 = vector.multi_reduction <add>, %258, %cst_183 [1] : vector<2x64xf32> to vector<2xf32>
      %262 = vector.shape_cast %261 : vector<2xf32> to vector<2x1xf32>
      %cst_184 = arith.constant 6.400000e+01 : f32
      %263 = vector.broadcast %cst_184 : f32 to vector<2x1xf32>
      %264 = arith.divf %262, %263 : vector<2x1xf32>
      %265 = vector.broadcast %264 : vector<2x1xf32> to vector<2x64xf32>
      %266 = arith.subf %258, %265 : vector<2x64xf32>
      %267 = arith.mulf %266, %266 : vector<2x64xf32>
      %cst_185 = arith.constant dense<0.000000e+00> : vector<2xf32>
      %268 = vector.multi_reduction <add>, %267, %cst_185 [1] : vector<2x64xf32> to vector<2xf32>
      %269 = vector.shape_cast %268 : vector<2xf32> to vector<2x1xf32>
      %cst_186 = arith.constant 6.400000e+01 : f32
      %270 = vector.broadcast %cst_186 : f32 to vector<2x1xf32>
      %271 = arith.divf %269, %270 : vector<2x1xf32>
      %272 = vector.broadcast %264 : vector<2x1xf32> to vector<2x64xf32>
      %273 = arith.subf %258, %272 : vector<2x64xf32>
      %cst_187 = arith.constant 9.99999974E-6 : f32
      %274 = vector.broadcast %cst_187 : f32 to vector<2x1xf32>
      %275 = arith.addf %271, %274 : vector<2x1xf32>
      %276 = math.rsqrt %275 : vector<2x1xf32>
      %277 = vector.broadcast %276 : vector<2x1xf32> to vector<2x64xf32>
      %278 = arith.mulf %273, %277 : vector<2x64xf32>
      %279 = vector.broadcast %259 : vector<1x64xf32> to vector<2x64xf32>
      %280 = arith.mulf %278, %279 : vector<2x64xf32>
      %281 = vector.broadcast %260 : vector<1x64xf32> to vector<2x64xf32>
      %282 = arith.addf %280, %281 : vector<2x64xf32>
      %283 = arith.truncf %282 : vector<2x64xf32> to vector<2x64xbf16>
      %c0_188 = arith.constant 0 : index
      %c0_189 = arith.constant 0 : index
      %284 = vector.load %arg25[%c0_188, %c0_189] : memref<64x384xbf16, #tpu.memory_space<vmem>>, vector<64x384xbf16>
      %cst_190 = arith.constant dense<0.000000e+00> : vector<2x384xf32>
      %285 = tpu.matmul %283, %284, %cst_190 {dimension_numbers = #tpu.dot_dimension_numbers<[1], [0], [0], [1], [0, 0, 1, 1], [], []>} : vector<2x64xbf16>, vector<64x384xbf16>, vector<2x384xf32> -> vector<2x384xf32>
      %c0_191 = arith.constant 0 : index
      %c0_192 = arith.constant 0 : index
      %286 = vector.load %arg26[%c0_191, %c0_192] : memref<1x384xf32, #tpu.memory_space<vmem>>, vector<1x384xf32>
      %287 = vector.broadcast %286 : vector<1x384xf32> to vector<2x384xf32>
      %288 = arith.addf %285, %287 : vector<2x384xf32>
      %c0_193 = arith.constant 0 : index
      %c0_194 = arith.constant 0 : index
      %289 = vector.load %arg27[%c0_193, %c0_194] : memref<2x384xf32, #tpu.memory_space<vmem>>, vector<2x384xf32>
      tpu.vector_store %arg27[%c0_193, %c0_194], %288 {strides = array<i32>} : memref<2x384xf32, #tpu.memory_space<vmem>>, vector<2x384xf32>,
    } else {
    }
    return
  }
  func.func @transform_0(%arg0: i32) -> (i32, i32) {
    %c0_i32 = arith.constant 0 : i32
    %c0_i32_0 = arith.constant 0 : i32
    %c0_i32_1 = arith.constant 0 : i32
    return %c0_i32, %c0_i32_0 : i32, i32
  }
  func.func @transform_1(%arg0: i32) -> (i32, i32) {
    %c0_i32 = arith.constant 0 : i32
    %c0_i32_0 = arith.constant 0 : i32
    %c0_i32_1 = arith.constant 0 : i32
    return %c0_i32, %c0_i32_0 : i32, i32
  }
  func.func @transform_2(%arg0: i32) -> (i32, i32) {
    %c0_i32 = arith.constant 0 : i32
    %c0_i32_0 = arith.constant 0 : i32
    %c0_i32_1 = arith.constant 0 : i32
    return %c0_i32, %c0_i32_0 : i32, i32
  }
  func.func @transform_3(%arg0: i32) -> (i32, i32) {
    %c0_i32 = arith.constant 0 : i32
    %c0_i32_0 = arith.constant 0 : i32
    %c0_i32_1 = arith.constant 0 : i32
    return %c0_i32, %c0_i32_0 : i32, i32
  }
  func.func @transform_4(%arg0: i32) -> (i32, i32) {
    %c0_i32 = arith.constant 0 : i32
    %c0_i32_0 = arith.constant 0 : i32
    %c0_i32_1 = arith.constant 0 : i32
    return %c0_i32, %c0_i32_0 : i32, i32
  }
  func.func @transform_5(%arg0: i32) -> (i32, i32) {
    %c0_i32 = arith.constant 0 : i32
    %c0_i32_0 = arith.constant 0 : i32
    %c0_i32_1 = arith.constant 0 : i32
    return %c0_i32, %c0_i32_0 : i32, i32
  }
  func.func @transform_6(%arg0: i32) -> (i32, i32, i32) {
    %c0_i32 = arith.constant 0 : i32
    %c0_i32_0 = arith.constant 0 : i32
    %c0_i32_1 = arith.constant 0 : i32
    return %arg0, %c0_i32, %c0_i32_0 : i32, i32, i32
  }
  func.func @transform_7(%arg0: i32) -> (i32, i32, i32) {
    %c0_i32 = arith.constant 0 : i32
    %c0_i32_0 = arith.constant 0 : i32
    %c0_i32_1 = arith.constant 0 : i32
    return %arg0, %c0_i32, %c0_i32_0 : i32, i32, i32
  }
  func.func @transform_8(%arg0: i32) -> (i32, i32, i32, i32) {
    %c0_i32 = arith.constant 0 : i32
    %c0_i32_0 = arith.constant 0 : i32
    %c0_i32_1 = arith.constant 0 : i32
    %c0_i32_2 = arith.constant 0 : i32
    return %arg0, %c0_i32, %c0_i32_0, %c0_i32_1 : i32, i32, i32, i32
  }
  func.func @transform_9(%arg0: i32) -> (i32, i32, i32, i32) {
    %c0_i32 = arith.constant 0 : i32
    %c0_i32_0 = arith.constant 0 : i32
    %c0_i32_1 = arith.constant 0 : i32
    %c0_i32_2 = arith.constant 0 : i32
    return %arg0, %c0_i32, %c0_i32_0, %c0_i32_1 : i32, i32, i32, i32
  }
  func.func @transform_10(%arg0: i32) -> (i32, i32, i32, i32) {
    %c0_i32 = arith.constant 0 : i32
    %c0_i32_0 = arith.constant 0 : i32
    %c0_i32_1 = arith.constant 0 : i32
    %c0_i32_2 = arith.constant 0 : i32
    return %arg0, %c0_i32, %c0_i32_0, %c0_i32_1 : i32, i32, i32, i32
  }
  func.func @transform_11(%arg0: i32) -> (i32, i32, i32, i32) {
    %c0_i32 = arith.constant 0 : i32
    %c0_i32_0 = arith.constant 0 : i32
    %c0_i32_1 = arith.constant 0 : i32
    %c0_i32_2 = arith.constant 0 : i32
    return %arg0, %c0_i32, %c0_i32_0, %c0_i32_1 : i32, i32, i32, i32
  }
  func.func @transform_12(%arg0: i32) -> (i32, i32, i32, i32) {
    %c0_i32 = arith.constant 0 : i32
    %c0_i32_0 = arith.constant 0 : i32
    %c0_i32_1 = arith.constant 0 : i32
    %c0_i32_2 = arith.constant 0 : i32
    return %arg0, %c0_i32, %c0_i32_0, %c0_i32_1 : i32, i32, i32, i32
  }
  func.func @transform_13(%arg0: i32) -> (i32, i32, i32, i32) {
    %c0_i32 = arith.constant 0 : i32
    %c0_i32_0 = arith.constant 0 : i32
    %c0_i32_1 = arith.constant 0 : i32
    %c0_i32_2 = arith.constant 0 : i32
    return %arg0, %c0_i32, %c0_i32_0, %c0_i32_1 : i32, i32, i32, i32
  }
  func.func @transform_14(%arg0: i32) -> (i32, i32, i32) {
    %c0_i32 = arith.constant 0 : i32
    %c0_i32_0 = arith.constant 0 : i32
    %c0_i32_1 = arith.constant 0 : i32
    return %arg0, %c0_i32, %c0_i32_0 : i32, i32, i32
  }
  func.func @transform_15(%arg0: i32) -> (i32, i32, i32) {
    %c0_i32 = arith.constant 0 : i32
    %c0_i32_0 = arith.constant 0 : i32
    %c0_i32_1 = arith.constant 0 : i32
    return %arg0, %c0_i32, %c0_i32_0 : i32, i32, i32
  }
  func.func @transform_16(%arg0: i32) -> (i32, i32, i32) {
    %c0_i32 = arith.constant 0 : i32
    %c0_i32_0 = arith.constant 0 : i32
    %c0_i32_1 = arith.constant 0 : i32
    return %arg0, %c0_i32, %c0_i32_0 : i32, i32, i32
  }
  func.func @transform_17(%arg0: i32) -> (i32, i32, i32) {
    %c0_i32 = arith.constant 0 : i32
    %c0_i32_0 = arith.constant 0 : i32
    %c0_i32_1 = arith.constant 0 : i32
    return %arg0, %c0_i32, %c0_i32_0 : i32, i32, i32
  }
  func.func @transform_18(%arg0: i32) -> (i32, i32, i32) {
    %c0_i32 = arith.constant 0 : i32
    %c0_i32_0 = arith.constant 0 : i32
    %c0_i32_1 = arith.constant 0 : i32
    return %arg0, %c0_i32, %c0_i32_0 : i32, i32, i32
  }
  func.func @transform_19(%arg0: i32) -> (i32, i32, i32) {
    %c0_i32 = arith.constant 0 : i32
    %c0_i32_0 = arith.constant 0 : i32
    %c0_i32_1 = arith.constant 0 : i32
    return %arg0, %c0_i32, %c0_i32_0 : i32, i32, i32
  }
  func.func @transform_20(%arg0: i32) -> (i32, i32, i32) {
    %c0_i32 = arith.constant 0 : i32
    %c0_i32_0 = arith.constant 0 : i32
    %c0_i32_1 = arith.constant 0 : i32
    return %arg0, %c0_i32, %c0_i32_0 : i32, i32, i32
  }
  func.func @transform_21(%arg0: i32) -> (i32, i32, i32) {
    %c0_i32 = arith.constant 0 : i32
    %c0_i32_0 = arith.constant 0 : i32
    %c0_i32_1 = arith.constant 0 : i32
    return %arg0, %c0_i32, %c0_i32_0 : i32, i32, i32
  }
  func.func @transform_22(%arg0: i32) -> (i32, i32) {
    %c0_i32 = arith.constant 0 : i32
    %c0_i32_0 = arith.constant 0 : i32
    %c0_i32_1 = arith.constant 0 : i32
    return %c0_i32, %c0_i32_0 : i32, i32
  }
  func.func @transform_23(%arg0: i32) -> (i32, i32) {
    %c0_i32 = arith.constant 0 : i32
    %c0_i32_0 = arith.constant 0 : i32
    %c0_i32_1 = arith.constant 0 : i32
    return %c0_i32, %c0_i32_0 : i32, i32
  }
  func.func @transform_24(%arg0: i32) -> (i32, i32) {
    %c0_i32 = arith.constant 0 : i32
    %c0_i32_0 = arith.constant 0 : i32
    %c0_i32_1 = arith.constant 0 : i32
    return %c0_i32, %c0_i32_0 : i32, i32
  }
  func.func @transform_25(%arg0: i32) -> (i32, i32) {
    %c0_i32 = arith.constant 0 : i32
    %c0_i32_0 = arith.constant 0 : i32
    %c0_i32_1 = arith.constant 0 : i32
    return %c0_i32, %c0_i32_0 : i32, i32
  }
  func.func @transform_26(%arg0: i32) -> (i32, i32) {
    %c0_i32 = arith.constant 0 : i32
    %c0_i32_0 = arith.constant 0 : i32
    %c0_i32_1 = arith.constant 0 : i32
    return %c0_i32, %c0_i32_0 : i32, i32
  }
}

</mosaic_0001>

<llo_original>
// kernel: clip_model_forward.1
$region0: #{clip_model_forward.1}
  #allocation0 [shape = 'u32[]', space=smem, size = 0x4, offset = 0x4, fixed_abs, tag = 'smem constant byte address 0x4 - core index']
  #allocation1 [shape = 'u32[144,128]{1,0:T(1,128)}', space=vmem, size = 0x12000, scoped, tag = 'internal scratch']
  #allocation2 [shape = 'f32[10,64]{1,0:T(8,128)}', space=vmem, size = 0x2000, scoped, tag = 'scratch operand']
  %s0 = inlined_call_operand.vmem [shape: bf16[10,192], index: 0, kind: input, shape index: {}]
  %s1 = inlined_call_operand.vmem [shape: bf16[192,64], index: 1, kind: input, shape index: {}]
  %s2 = inlined_call_operand.vmem [shape: f32[10,64], index: 2, kind: input, shape index: {}]
  %s3 = inlined_call_operand.vmem [shape: f32[1,64], index: 3, kind: input, shape index: {}]
  %s4 = inlined_call_operand.vmem [shape: f32[1,64], index: 4, kind: input, shape index: {}]
  %s5 = inlined_call_operand.vmem [shape: f32[10,10], index: 5, kind: input, shape index: {}]
  %s6 = inlined_call_operand.vmem [shape: f32[2,1,64], index: 6, kind: input, shape index: {}]
  %s7 = inlined_call_operand.vmem [shape: f32[2,1,64], index: 7, kind: input, shape index: {}]
  %s8 = inlined_call_operand.vmem [shape: bf16[2,4,64,16], index: 8, kind: input, shape index: {}]
  %s9 = inlined_call_operand.vmem [shape: bf16[2,4,64,16], index: 9, kind: input, shape index: {}]
  %s10 = inlined_call_operand.vmem [shape: bf16[2,4,64,16], index: 10, kind: input, shape index: {}]
  %s11 = inlined_call_operand.vmem [shape: f32[2,4,1,16], index: 11, kind: input, shape index: {}]
  %s12 = inlined_call_operand.vmem [shape: f32[2,4,1,16], index: 12, kind: input, shape index: {}]
  %s13 = inlined_call_operand.vmem [shape: f32[2,4,1,16], index: 13, kind: input, shape index: {}]
  %s14 = inlined_call_operand.vmem [shape: bf16[2,64,64], index: 14, kind: input, shape index: {}]
  %s15 = inlined_call_operand.vmem [shape: f32[2,1,64], index: 15, kind: input, shape index: {}]
  %s16 = inlined_call_operand.vmem [shape: f32[2,1,64], index: 16, kind: input, shape index: {}]
  %s17 = inlined_call_operand.vmem [shape: f32[2,1,64], index: 17, kind: input, shape index: {}]
  %s18 = inlined_call_operand.vmem [shape: bf16[2,64,256], index: 18, kind: input, shape index: {}]
  %s19 = inlined_call_operand.vmem [shape: f32[2,1,256], index: 19, kind: input, shape index: {}]
  %s20 = inlined_call_operand.vmem [shape: bf16[2,256,64], index: 20, kind: input, shape index: {}]
  %s21 = inlined_call_operand.vmem [shape: f32[2,1,64], index: 21, kind: input, shape index: {}]
  %s22 = inlined_call_operand.vmem [shape: f32[1,64], index: 22, kind: input, shape index: {}]
  %s23 = inlined_call_operand.vmem [shape: f32[1,64], index: 23, kind: input, shape index: {}]
  %s24 = inlined_call_operand.vmem [shape: bf16[64,384], index: 24, kind: input, shape index: {}]
  %s25 = inlined_call_operand.vmem [shape: f32[1,384], index: 25, kind: input, shape index: {}]
  %s26 = inlined_call_operand.hbm [shape: f32[2,384], index: 26, kind: output, shape index: {}]
  %s27 = sld [smem:[#allocation0]]
  $region145: #{clip_model_forward.1} parent=0
    _
  %s29 = ssub.s32 1, %s27
  %s30 = scalar_select 0, %s29, %s27
  $region1: #{clip_model_forward.1} parent=0
    #allocation3 [shape = 'u8[3072]{0}', space=vmem, size = 0xc00, scoped, tag = 'output window, operand 0, single buffered']
    #allocation4 [shape = 's32[2]{0}', space=sflag, size = 0x8, scoped, tag = 'scoped memory for clip_model_forward.1']
    %31 = vsyncpa [#allocation4], 0
    loop: start=0, step=1, limit=4
    $region2: #{clip_model_forward.1} parent=1 // loop_pre_header
      _
    $region3: #{clip_model_forward.1} parent=1 // loop_header
      %s33 = sphi 0, %s37
      %p34 = scmp.ge.s32.totalorder %s33, 4
      %s41 = sphi 0, %s41
      %s43 = sphi 0, %s41
      %s44 = sphi 0, %s43
      %s58 = sphi 0, %s44
      %s62 = sphi 0, %s62
      %s64 = sphi 0, %s62
      %s65 = sphi 0, %s64
      %s79 = sphi 0, %s65
      %s83 = sphi 0, %s83
      %s85 = sphi 0, %s83
      %s86 = sphi 0, %s85
      %s100 = sphi 0, %s86
      %s104 = sphi 0, %s104
      %s106 = sphi 0, %s104
      %s107 = sphi 0, %s106
      %s121 = sphi 0, %s107
      %s125 = sphi 0, %s125
      %s127 = sphi 0, %s125
      %s128 = sphi 0, %s127
      %s142 = sphi 0, %s128
      %s146 = sphi 0, %s146
      %s148 = sphi 0, %s146
      %s149 = sphi 0, %s148
      %s163 = sphi 0, %s149
      %s169 = sphi 0, %s171
      %s172 = sphi 0, %s169
      %s173 = sphi 0, %s172
      %s189 = sphi 0, %s173
      %s195 = sphi 0, %s197
      %s198 = sphi 0, %s195
      %s199 = sphi 0, %s198
      %s215 = sphi 0, %s199
      %s221 = sphi 0, %s223
      %s224 = sphi 0, %s221
      %s225 = sphi 0, %s224
      %s241 = sphi 0, %s225
      %s247 = sphi 0, %s249
      %s250 = sphi 0, %s247
      %s251 = sphi 0, %s250
      %s267 = sphi 0, %s251
      %s273 = sphi 0, %s275
      %s276 = sphi 0, %s273
      %s277 = sphi 0, %s276
      %s293 = sphi 0, %s277
      %s299 = sphi 0, %s301
      %s302 = sphi 0, %s299
      %s303 = sphi 0, %s302
      %s319 = sphi 0, %s303
      %s325 = sphi 0, %s327
      %s328 = sphi 0, %s325
      %s329 = sphi 0, %s328
      %s345 = sphi 0, %s329
      %s351 = sphi 0, %s353
      %s354 = sphi 0, %s351
      %s355 = sphi 0, %s354
      %s371 = sphi 0, %s355
      %s377 = sphi 0, %s379
      %s380 = sphi 0, %s377
      %s381 = sphi 0, %s380
      %s397 = sphi 0, %s381
      %s403 = sphi 0, %s405
      %s406 = sphi 0, %s403
      %s407 = sphi 0, %s406
      %s423 = sphi 0, %s407
      %s429 = sphi 0, %s431
      %s432 = sphi 0, %s429
      %s433 = sphi 0, %s432
      %s449 = sphi 0, %s433
      %s455 = sphi 0, %s457
      %s458 = sphi 0, %s455
      %s459 = sphi 0, %s458
      %s475 = sphi 0, %s459
      %s481 = sphi 0, %s483
      %s484 = sphi 0, %s481
      %s485 = sphi 0, %s484
      %s501 = sphi 0, %s485
      %s507 = sphi 0, %s509
      %s510 = sphi 0, %s507
      %s511 = sphi 0, %s510
      %s527 = sphi 0, %s511
      %s533 = sphi 0, %s535
      %s536 = sphi 0, %s533
      %s537 = sphi 0, %s536
      %s553 = sphi 0, %s537
      %s559 = sphi 0, %s561
      %s562 = sphi 0, %s559
      %s563 = sphi 0, %s562
      %s579 = sphi 0, %s563
      %s583 = sphi 0, %s583
      %s585 = sphi 0, %s583
      %s586 = sphi 0, %s585
      %s600 = sphi 0, %s586
      %s604 = sphi 0, %s604
      %s606 = sphi 0, %s604
      %s607 = sphi 0, %s606
      %s621 = sphi 0, %s607
      %s625 = sphi 0, %s625
      %s627 = sphi 0, %s625
      %s628 = sphi 0, %s627
      %s642 = sphi 0, %s628
      %s646 = sphi 0, %s646
      %s648 = sphi 0, %s646
      %s649 = sphi 0, %s648
      %s663 = sphi 0, %s649
      %s667 = sphi 0, %s667
      %s669 = sphi 0, %s667
      %s670 = sphi 0, %s669
      %s684 = sphi 0, %s670
    $region4: #{clip_model_forward.1} parent=1 // loop_header_branch
      %36 = sbr.rel (%p34) target = $region8
    $region5: #{clip_model_forward.1} parent=1 // loop_body
      %s38 = ssub.s32 %s33, 1
      %s39 = ssub.s32 %s33, 2
      %s40 = sadd.s32 %s33, 1
      %s42 = sadd.s32 %s41, 1
      %p45 = scmp.eq.s32.totalorder %s33, 1
      %p46 = scmp.ne.s32.totalorder %s41, %s43
      %p47 = scmp.eq.s32.totalorder %s33, 0
      %p48 = por %p46, %p47
      %p49 = scmp.ne.s32.totalorder %s41, %s43
      %p50 = scmp.eq.s32.totalorder %s38, 1
      %p51 = por %p49, %p50
      %p52 = scmp.ne.s32.totalorder %s43, %s44
      %p53 = scmp.eq.s32.totalorder %s38, 0
      %p54 = por %p52, %p53
      %p55 = scmp.ne.s32.totalorder %s43, %s44
      %p56 = scmp.eq.s32.totalorder %s39, 1
      %p57 = por %p55, %p56
      %p59 = scmp.ne.s32.totalorder %s44, %s58
      %p60 = scmp.eq.s32.totalorder %s39, 0
      %p61 = por %p59, %p60
      %s63 = sadd.s32 %s62, 1
      %p66 = scmp.eq.s32.totalorder %s33, 1
      %p67 = scmp.ne.s32.totalorder %s62, %s64
      %p68 = scmp.eq.s32.totalorder %s33, 0
      %p69 = por %p67, %p68
      %p70 = scmp.ne.s32.totalorder %s62, %s64
      %p71 = scmp.eq.s32.totalorder %s38, 1
      %p72 = por %p70, %p71
      %p73 = scmp.ne.s32.totalorder %s64, %s65
      %p74 = scmp.eq.s32.totalorder %s38, 0
      %p75 = por %p73, %p74
      %p76 = scmp.ne.s32.totalorder %s64, %s65
      %p77 = scmp.eq.s32.totalorder %s39, 1
      %p78 = por %p76, %p77
      %p80 = scmp.ne.s32.totalorder %s65, %s79
      %p81 = scmp.eq.s32.totalorder %s39, 0
      %p82 = por %p80, %p81
      %s84 = sadd.s32 %s83, 1
      %p87 = scmp.eq.s32.totalorder %s33, 1
      %p88 = scmp.ne.s32.totalorder %s83, %s85
      %p89 = scmp.eq.s32.totalorder %s33, 0
      %p90 = por %p88, %p89
      %p91 = scmp.ne.s32.totalorder %s83, %s85
      %p92 = scmp.eq.s32.totalorder %s38, 1
      %p93 = por %p91, %p92
      %p94 = scmp.ne.s32.totalorder %s85, %s86
      %p95 = scmp.eq.s32.totalorder %s38, 0
      %p96 = por %p94, %p95
      %p97 = scmp.ne.s32.totalorder %s85, %s86
      %p98 = scmp.eq.s32.totalorder %s39, 1
      %p99 = por %p97, %p98
      %p101 = scmp.ne.s32.totalorder %s86, %s100
      %p102 = scmp.eq.s32.totalorder %s39, 0
      %p103 = por %p101, %p102
      %s105 = sadd.s32 %s104, 1
      %p108 = scmp.eq.s32.totalorder %s33, 1
      %p109 = scmp.ne.s32.totalorder %s104, %s106
      %p110 = scmp.eq.s32.totalorder %s33, 0
      %p111 = por %p109, %p110
      %p112 = scmp.ne.s32.totalorder %s104, %s106
      %p113 = scmp.eq.s32.totalorder %s38, 1
      %p114 = por %p112, %p113
      %p115 = scmp.ne.s32.totalorder %s106, %s107
      %p116 = scmp.eq.s32.totalorder %s38, 0
      %p117 = por %p115, %p116
      %p118 = scmp.ne.s32.totalorder %s106, %s107
      %p119 = scmp.eq.s32.totalorder %s39, 1
      %p120 = por %p118, %p119
      %p122 = scmp.ne.s32.totalorder %s107, %s121
      %p123 = scmp.eq.s32.totalorder %s39, 0
      %p124 = por %p122, %p123
      %s126 = sadd.s32 %s125, 1
      %p129 = scmp.eq.s32.totalorder %s33, 1
      %p130 = scmp.ne.s32.totalorder %s125, %s127
      %p131 = scmp.eq.s32.totalorder %s33, 0
      %p132 = por %p130, %p131
      %p133 = scmp.ne.s32.totalorder %s125, %s127
      %p134 = scmp.eq.s32.totalorder %s38, 1
      %p135 = por %p133, %p134
      %p136 = scmp.ne.s32.totalorder %s127, %s128
      %p137 = scmp.eq.s32.totalorder %s38, 0
      %p138 = por %p136, %p137
      %p139 = scmp.ne.s32.totalorder %s127, %s128
      %p140 = scmp.eq.s32.totalorder %s39, 1
      %p141 = por %p139, %p140
      %p143 = scmp.ne.s32.totalorder %s128, %s142
      %p144 = scmp.eq.s32.totalorder %s39, 0
      %p145 = por %p143, %p144
      %s147 = sadd.s32 %s146, 1
      %p150 = scmp.eq.s32.totalorder %s33, 1
      %p151 = scmp.ne.s32.totalorder %s146, %s148
      %p152 = scmp.eq.s32.totalorder %s33, 0
      %p153 = por %p151, %p152
      %p154 = scmp.ne.s32.totalorder %s146, %s148
      %p155 = scmp.eq.s32.totalorder %s38, 1
      %p156 = por %p154, %p155
      %p157 = scmp.ne.s32.totalorder %s148, %s149
      %p158 = scmp.eq.s32.totalorder %s38, 0
      %p159 = por %p157, %p158
      %p160 = scmp.ne.s32.totalorder %s148, %s149
      %p161 = scmp.eq.s32.totalorder %s39, 1
      %p162 = por %p160, %p161
      %p164 = scmp.ne.s32.totalorder %s149, %s163
      %p165 = scmp.eq.s32.totalorder %s39, 0
      %p166 = por %p164, %p165
      %s167 = ssub.s32 %s33, %s40
      %p168 = scmp.eq.s32.totalorder %s167, 0
      %s170 = sadd.s32 %s169, 1
      %s171 = scalar_select %p168, %s169, %s170
      %p174 = pneg %p168
      %p175 = scmp.eq.s32.totalorder %s33, 1
      %p176 = por %p174, %p175
      %p177 = scmp.ne.s32.totalorder %s169, %s172
      %p178 = scmp.eq.s32.totalorder %s33, 0
      %p179 = por %p177, %p178
      %p180 = scmp.ne.s32.totalorder %s169, %s172
      %p181 = scmp.eq.s32.totalorder %s38, 1
      %p182 = por %p180, %p181
      %p183 = scmp.ne.s32.totalorder %s172, %s173
      %p184 = scmp.eq.s32.totalorder %s38, 0
      %p185 = por %p183, %p184
      %p186 = scmp.ne.s32.totalorder %s172, %s173
      %p187 = scmp.eq.s32.totalorder %s39, 1
      %p188 = por %p186, %p187
      %p190 = scmp.ne.s32.totalorder %s173, %s189
      %p191 = scmp.eq.s32.totalorder %s39, 0
      %p192 = por %p190, %p191
      %s193 = ssub.s32 %s33, %s40
      %p194 = scmp.eq.s32.totalorder %s193, 0
      %s196 = sadd.s32 %s195, 1
      %s197 = scalar_select %p194, %s195, %s196
      %p200 = pneg %p194
      %p201 = scmp.eq.s32.totalorder %s33, 1
      %p202 = por %p200, %p201
      %p203 = scmp.ne.s32.totalorder %s195, %s198
      %p204 = scmp.eq.s32.totalorder %s33, 0
      %p205 = por %p203, %p204
      %p206 = scmp.ne.s32.totalorder %s195, %s198
      %p207 = scmp.eq.s32.totalorder %s38, 1
      %p208 = por %p206, %p207
      %p209 = scmp.ne.s32.totalorder %s198, %s199
      %p210 = scmp.eq.s32.totalorder %s38, 0
      %p211 = por %p209, %p210
      %p212 = scmp.ne.s32.totalorder %s198, %s199
      %p213 = scmp.eq.s32.totalorder %s39, 1
      %p214 = por %p212, %p213
      %p216 = scmp.ne.s32.totalorder %s199, %s215
      %p217 = scmp.eq.s32.totalorder %s39, 0
      %p218 = por %p216, %p217
      %s219 = ssub.s32 %s33, %s40
      %p220 = scmp.eq.s32.totalorder %s219, 0
      %s222 = sadd.s32 %s221, 1
      %s223 = scalar_select %p220, %s221, %s222
      %p226 = pneg %p220
      %p227 = scmp.eq.s32.totalorder %s33, 1
      %p228 = por %p226, %p227
      %p229 = scmp.ne.s32.totalorder %s221, %s224
      %p230 = scmp.eq.s32.totalorder %s33, 0
      %p231 = por %p229, %p230
      %p232 = scmp.ne.s32.totalorder %s221, %s224
      %p233 = scmp.eq.s32.totalorder %s38, 1
      %p234 = por %p232, %p233
      %p235 = scmp.ne.s32.totalorder %s224, %s225
      %p236 = scmp.eq.s32.totalorder %s38, 0
      %p237 = por %p235, %p236
      %p238 = scmp.ne.s32.totalorder %s224, %s225
      %p239 = scmp.eq.s32.totalorder %s39, 1
      %p240 = por %p238, %p239
      %p242 = scmp.ne.s32.totalorder %s225, %s241
      %p243 = scmp.eq.s32.totalorder %s39, 0
      %p244 = por %p242, %p243
      %s245 = ssub.s32 %s33, %s40
      %p246 = scmp.eq.s32.totalorder %s245, 0
      %s248 = sadd.s32 %s247, 1
      %s249 = scalar_select %p246, %s247, %s248
      %p252 = pneg %p246
      %p253 = scmp.eq.s32.totalorder %s33, 1
      %p254 = por %p252, %p253
      %p255 = scmp.ne.s32.totalorder %s247, %s250
      %p256 = scmp.eq.s32.totalorder %s33, 0
      %p257 = por %p255, %p256
      %p258 = scmp.ne.s32.totalorder %s247, %s250
      %p259 = scmp.eq.s32.totalorder %s38, 1
      %p260 = por %p258, %p259
      %p261 = scmp.ne.s32.totalorder %s250, %s251
      %p262 = scmp.eq.s32.totalorder %s38, 0
      %p263 = por %p261, %p262
      %p264 = scmp.ne.s32.totalorder %s250, %s251
      %p265 = scmp.eq.s32.totalorder %s39, 1
      %p266 = por %p264, %p265
      %p268 = scmp.ne.s32.totalorder %s251, %s267
      %p269 = scmp.eq.s32.totalorder %s39, 0
      %p270 = por %p268, %p269
      %s271 = ssub.s32 %s33, %s40
      %p272 = scmp.eq.s32.totalorder %s271, 0
      %s274 = sadd.s32 %s273, 1
      %s275 = scalar_select %p272, %s273, %s274
      %p278 = pneg %p272
      %p279 = scmp.eq.s32.totalorder %s33, 1
      %p280 = por %p278, %p279
      %p281 = scmp.ne.s32.totalorder %s273, %s276
      %p282 = scmp.eq.s32.totalorder %s33, 0
      %p283 = por %p281, %p282
      %p284 = scmp.ne.s32.totalorder %s273, %s276
      %p285 = scmp.eq.s32.totalorder %s38, 1
      %p286 = por %p284, %p285
      %p287 = scmp.ne.s32.totalorder %s276, %s277
      %p288 = scmp.eq.s32.totalorder %s38, 0
      %p289 = por %p287, %p288
      %p290 = scmp.ne.s32.totalorder %s276, %s277
      %p291 = scmp.eq.s32.totalorder %s39, 1
      %p292 = por %p290, %p291
      %p294 = scmp.ne.s32.totalorder %s277, %s293
      %p295 = scmp.eq.s32.totalorder %s39, 0
      %p296 = por %p294, %p295
      %s297 = ssub.s32 %s33, %s40
      %p298 = scmp.eq.s32.totalorder %s297, 0
      %s300 = sadd.s32 %s299, 1
      %s301 = scalar_select %p298, %s299, %s300
      %p304 = pneg %p298
      %p305 = scmp.eq.s32.totalorder %s33, 1
      %p306 = por %p304, %p305
      %p307 = scmp.ne.s32.totalorder %s299, %s302
      %p308 = scmp.eq.s32.totalorder %s33, 0
      %p309 = por %p307, %p308
      %p310 = scmp.ne.s32.totalorder %s299, %s302
      %p311 = scmp.eq.s32.totalorder %s38, 1
      %p312 = por %p310, %p311
      %p313 = scmp.ne.s32.totalorder %s302, %s303
      %p314 = scmp.eq.s32.totalorder %s38, 0
      %p315 = por %p313, %p314
      %p316 = scmp.ne.s32.totalorder %s302, %s303
      %p317 = scmp.eq.s32.totalorder %s39, 1
      %p318 = por %p316, %p317
      %p320 = scmp.ne.s32.totalorder %s303, %s319
      %p321 = scmp.eq.s32.totalorder %s39, 0
      %p322 = por %p320, %p321
      %s323 = ssub.s32 %s33, %s40
      %p324 = scmp.eq.s32.totalorder %s323, 0
      %s326 = sadd.s32 %s325, 1
      %s327 = scalar_select %p324, %s325, %s326
      %p330 = pneg %p324
      %p331 = scmp.eq.s32.totalorder %s33, 1
      %p332 = por %p330, %p331
      %p333 = scmp.ne.s32.totalorder %s325, %s328
      %p334 = scmp.eq.s32.totalorder %s33, 0
      %p335 = por %p333, %p334
      %p336 = scmp.ne.s32.totalorder %s325, %s328
      %p337 = scmp.eq.s32.totalorder %s38, 1
      %p338 = por %p336, %p337
      %p339 = scmp.ne.s32.totalorder %s328, %s329
      %p340 = scmp.eq.s32.totalorder %s38, 0
      %p341 = por %p339, %p340
      %p342 = scmp.ne.s32.totalorder %s328, %s329
      %p343 = scmp.eq.s32.totalorder %s39, 1
      %p344 = por %p342, %p343
      %p346 = scmp.ne.s32.totalorder %s329, %s345
      %p347 = scmp.eq.s32.totalorder %s39, 0
      %p348 = por %p346, %p347
      %s349 = ssub.s32 %s33, %s40
      %p350 = scmp.eq.s32.totalorder %s349, 0
      %s352 = sadd.s32 %s351, 1
      %s353 = scalar_select %p350, %s351, %s352
      %p356 = pneg %p350
      %p357 = scmp.eq.s32.totalorder %s33, 1
      %p358 = por %p356, %p357
      %p359 = scmp.ne.s32.totalorder %s351, %s354
      %p360 = scmp.eq.s32.totalorder %s33, 0
      %p361 = por %p359, %p360
      %p362 = scmp.ne.s32.totalorder %s351, %s354
      %p363 = scmp.eq.s32.totalorder %s38, 1
      %p364 = por %p362, %p363
      %p365 = scmp.ne.s32.totalorder %s354, %s355
      %p366 = scmp.eq.s32.totalorder %s38, 0
      %p367 = por %p365, %p366
      %p368 = scmp.ne.s32.totalorder %s354, %s355
      %p369 = scmp.eq.s32.totalorder %s39, 1
      %p370 = por %p368, %p369
      %p372 = scmp.ne.s32.totalorder %s355, %s371
      %p373 = scmp.eq.s32.totalorder %s39, 0
      %p374 = por %p372, %p373
      %s375 = ssub.s32 %s33, %s40
      %p376 = scmp.eq.s32.totalorder %s375, 0
      %s378 = sadd.s32 %s377, 1
      %s379 = scalar_select %p376, %s377, %s378
      %p382 = pneg %p376
      %p383 = scmp.eq.s32.totalorder %s33, 1
      %p384 = por %p382, %p383
      %p385 = scmp.ne.s32.totalorder %s377, %s380
      %p386 = scmp.eq.s32.totalorder %s33, 0
      %p387 = por %p385, %p386
      %p388 = scmp.ne.s32.totalorder %s377, %s380
      %p389 = scmp.eq.s32.totalorder %s38, 1
      %p390 = por %p388, %p389
      %p391 = scmp.ne.s32.totalorder %s380, %s381
      %p392 = scmp.eq.s32.totalorder %s38, 0
      %p393 = por %p391, %p392
      %p394 = scmp.ne.s32.totalorder %s380, %s381
      %p395 = scmp.eq.s32.totalorder %s39, 1
      %p396 = por %p394, %p395
      %p398 = scmp.ne.s32.totalorder %s381, %s397
      %p399 = scmp.eq.s32.totalorder %s39, 0
      %p400 = por %p398, %p399
      %s401 = ssub.s32 %s33, %s40
      %p402 = scmp.eq.s32.totalorder %s401, 0
      %s404 = sadd.s32 %s403, 1
      %s405 = scalar_select %p402, %s403, %s404
      %p408 = pneg %p402
      %p409 = scmp.eq.s32.totalorder %s33, 1
      %p410 = por %p408, %p409
      %p411 = scmp.ne.s32.totalorder %s403, %s406
      %p412 = scmp.eq.s32.totalorder %s33, 0
      %p413 = por %p411, %p412
      %p414 = scmp.ne.s32.totalorder %s403, %s406
      %p415 = scmp.eq.s32.totalorder %s38, 1
      %p416 = por %p414, %p415
      %p417 = scmp.ne.s32.totalorder %s406, %s407
      %p418 = scmp.eq.s32.totalorder %s38, 0
      %p419 = por %p417, %p418
      %p420 = scmp.ne.s32.totalorder %s406, %s407
      %p421 = scmp.eq.s32.totalorder %s39, 1
      %p422 = por %p420, %p421
      %p424 = scmp.ne.s32.totalorder %s407, %s423
      %p425 = scmp.eq.s32.totalorder %s39, 0
      %p426 = por %p424, %p425
      %s427 = ssub.s32 %s33, %s40
      %p428 = scmp.eq.s32.totalorder %s427, 0
      %s430 = sadd.s32 %s429, 1
      %s431 = scalar_select %p428, %s429, %s430
      %p434 = pneg %p428
      %p435 = scmp.eq.s32.totalorder %s33, 1
      %p436 = por %p434, %p435
      %p437 = scmp.ne.s32.totalorder %s429, %s432
      %p438 = scmp.eq.s32.totalorder %s33, 0
      %p439 = por %p437, %p438
      %p440 = scmp.ne.s32.totalorder %s429, %s432
      %p441 = scmp.eq.s32.totalorder %s38, 1
      %p442 = por %p440, %p441
      %p443 = scmp.ne.s32.totalorder %s432, %s433
      %p444 = scmp.eq.s32.totalorder %s38, 0
      %p445 = por %p443, %p444
      %p446 = scmp.ne.s32.totalorder %s432, %s433
      %p447 = scmp.eq.s32.totalorder %s39, 1
      %p448 = por %p446, %p447
      %p450 = scmp.ne.s32.totalorder %s433, %s449
      %p451 = scmp.eq.s32.totalorder %s39, 0
      %p452 = por %p450, %p451
      %s453 = ssub.s32 %s33, %s40
      %p454 = scmp.eq.s32.totalorder %s453, 0
      %s456 = sadd.s32 %s455, 1
      %s457 = scalar_select %p454, %s455, %s456
      %p460 = pneg %p454
      %p461 = scmp.eq.s32.totalorder %s33, 1
      %p462 = por %p460, %p461
      %p463 = scmp.ne.s32.totalorder %s455, %s458
      %p464 = scmp.eq.s32.totalorder %s33, 0
      %p465 = por %p463, %p464
      %p466 = scmp.ne.s32.totalorder %s455, %s458
      %p467 = scmp.eq.s32.totalorder %s38, 1
      %p468 = por %p466, %p467
      %p469 = scmp.ne.s32.totalorder %s458, %s459
      %p470 = scmp.eq.s32.totalorder %s38, 0
      %p471 = por %p469, %p470
      %p472 = scmp.ne.s32.totalorder %s458, %s459
      %p473 = scmp.eq.s32.totalorder %s39, 1
      %p474 = por %p472, %p473
      %p476 = scmp.ne.s32.totalorder %s459, %s475
      %p477 = scmp.eq.s32.totalorder %s39, 0
      %p478 = por %p476, %p477
      %s479 = ssub.s32 %s33, %s40
      %p480 = scmp.eq.s32.totalorder %s479, 0
      %s482 = sadd.s32 %s481, 1
      %s483 = scalar_select %p480, %s481, %s482
      %p486 = pneg %p480
      %p487 = scmp.eq.s32.totalorder %s33, 1
      %p488 = por %p486, %p487
      %p489 = scmp.ne.s32.totalorder %s481, %s484
      %p490 = scmp.eq.s32.totalorder %s33, 0
      %p491 = por %p489, %p490
      %p492 = scmp.ne.s32.totalorder %s481, %s484
      %p493 = scmp.eq.s32.totalorder %s38, 1
      %p494 = por %p492, %p493
      %p495 = scmp.ne.s32.totalorder %s484, %s485
      %p496 = scmp.eq.s32.totalorder %s38, 0
      %p497 = por %p495, %p496
      %p498 = scmp.ne.s32.totalorder %s484, %s485
      %p499 = scmp.eq.s32.totalorder %s39, 1
      %p500 = por %p498, %p499
      %p502 = scmp.ne.s32.totalorder %s485, %s501
      %p503 = scmp.eq.s32.totalorder %s39, 0
      %p504 = por %p502, %p503
      %s505 = ssub.s32 %s33, %s40
      %p506 = scmp.eq.s32.totalorder %s505, 0
      %s508 = sadd.s32 %s507, 1
      %s509 = scalar_select %p506, %s507, %s508
      %p512 = pneg %p506
      %p513 = scmp.eq.s32.totalorder %s33, 1
      %p514 = por %p512, %p513
      %p515 = scmp.ne.s32.totalorder %s507, %s510
      %p516 = scmp.eq.s32.totalorder %s33, 0
      %p517 = por %p515, %p516
      %p518 = scmp.ne.s32.totalorder %s507, %s510
      %p519 = scmp.eq.s32.totalorder %s38, 1
      %p520 = por %p518, %p519
      %p521 = scmp.ne.s32.totalorder %s510, %s511
      %p522 = scmp.eq.s32.totalorder %s38, 0
      %p523 = por %p521, %p522
      %p524 = scmp.ne.s32.totalorder %s510, %s511
      %p525 = scmp.eq.s32.totalorder %s39, 1
      %p526 = por %p524, %p525
      %p528 = scmp.ne.s32.totalorder %s511, %s527
      %p529 = scmp.eq.s32.totalorder %s39, 0
      %p530 = por %p528, %p529
      %s531 = ssub.s32 %s33, %s40
      %p532 = scmp.eq.s32.totalorder %s531, 0
      %s534 = sadd.s32 %s533, 1
      %s535 = scalar_select %p532, %s533, %s534
      %p538 = pneg %p532
      %p539 = scmp.eq.s32.totalorder %s33, 1
      %p540 = por %p538, %p539
      %p541 = scmp.ne.s32.totalorder %s533, %s536
      %p542 = scmp.eq.s32.totalorder %s33, 0
      %p543 = por %p541, %p542
      %p544 = scmp.ne.s32.totalorder %s533, %s536
      %p545 = scmp.eq.s32.totalorder %s38, 1
      %p546 = por %p544, %p545
      %p547 = scmp.ne.s32.totalorder %s536, %s537
      %p548 = scmp.eq.s32.totalorder %s38, 0
      %p549 = por %p547, %p548
      %p550 = scmp.ne.s32.totalorder %s536, %s537
      %p551 = scmp.eq.s32.totalorder %s39, 1
      %p552 = por %p550, %p551
      %p554 = scmp.ne.s32.totalorder %s537, %s553
      %p555 = scmp.eq.s32.totalorder %s39, 0
      %p556 = por %p554, %p555
      %s557 = ssub.s32 %s33, %s40
      %p558 = scmp.eq.s32.totalorder %s557, 0
      %s560 = sadd.s32 %s559, 1
      %s561 = scalar_select %p558, %s559, %s560
      %p564 = pneg %p558
      %p565 = scmp.eq.s32.totalorder %s33, 1
      %p566 = por %p564, %p565
      %p567 = scmp.ne.s32.totalorder %s559, %s562
      %p568 = scmp.eq.s32.totalorder %s33, 0
      %p569 = por %p567, %p568
      %p570 = scmp.ne.s32.totalorder %s559, %s562
      %p571 = scmp.eq.s32.totalorder %s38, 1
      %p572 = por %p570, %p571
      %p573 = scmp.ne.s32.totalorder %s562, %s563
      %p574 = scmp.eq.s32.totalorder %s38, 0
      %p575 = por %p573, %p574
      %p576 = scmp.ne.s32.totalorder %s562, %s563
      %p577 = scmp.eq.s32.totalorder %s39, 1
      %p578 = por %p576, %p577
      %p580 = scmp.ne.s32.totalorder %s563, %s579
      %p581 = scmp.eq.s32.totalorder %s39, 0
      %p582 = por %p580, %p581
      %s584 = sadd.s32 %s583, 1
      %p587 = scmp.eq.s32.totalorder %s33, 1
      %p588 = scmp.ne.s32.totalorder %s583, %s585
      %p589 = scmp.eq.s32.totalorder %s33, 0
      %p590 = por %p588, %p589
      %p591 = scmp.ne.s32.totalorder %s583, %s585
      %p592 = scmp.eq.s32.totalorder %s38, 1
      %p593 = por %p591, %p592
      %p594 = scmp.ne.s32.totalorder %s585, %s586
      %p595 = scmp.eq.s32.totalorder %s38, 0
      %p596 = por %p594, %p595
      %p597 = scmp.ne.s32.totalorder %s585, %s586
      %p598 = scmp.eq.s32.totalorder %s39, 1
      %p599 = por %p597, %p598
      %p601 = scmp.ne.s32.totalorder %s586, %s600
      %p602 = scmp.eq.s32.totalorder %s39, 0
      %p603 = por %p601, %p602
      %s605 = sadd.s32 %s604, 1
      %p608 = scmp.eq.s32.totalorder %s33, 1
      %p609 = scmp.ne.s32.totalorder %s604, %s606
      %p610 = scmp.eq.s32.totalorder %s33, 0
      %p611 = por %p609, %p610
      %p612 = scmp.ne.s32.totalorder %s604, %s606
      %p613 = scmp.eq.s32.totalorder %s38, 1
      %p614 = por %p612, %p613
      %p615 = scmp.ne.s32.totalorder %s606, %s607
      %p616 = scmp.eq.s32.totalorder %s38, 0
      %p617 = por %p615, %p616
      %p618 = scmp.ne.s32.totalorder %s606, %s607
      %p619 = scmp.eq.s32.totalorder %s39, 1
      %p620 = por %p618, %p619
      %p622 = scmp.ne.s32.totalorder %s607, %s621
      %p623 = scmp.eq.s32.totalorder %s39, 0
      %p624 = por %p622, %p623
      %s626 = sadd.s32 %s625, 1
      %p629 = scmp.eq.s32.totalorder %s33, 1
      %p630 = scmp.ne.s32.totalorder %s625, %s627
      %p631 = scmp.eq.s32.totalorder %s33, 0
      %p632 = por %p630, %p631
      %p633 = scmp.ne.s32.totalorder %s625, %s627
      %p634 = scmp.eq.s32.totalorder %s38, 1
      %p635 = por %p633, %p634
      %p636 = scmp.ne.s32.totalorder %s627, %s628
      %p637 = scmp.eq.s32.totalorder %s38, 0
      %p638 = por %p636, %p637
      %p639 = scmp.ne.s32.totalorder %s627, %s628
      %p640 = scmp.eq.s32.totalorder %s39, 1
      %p641 = por %p639, %p640
      %p643 = scmp.ne.s32.totalorder %s628, %s642
      %p644 = scmp.eq.s32.totalorder %s39, 0
      %p645 = por %p643, %p644
      %s647 = sadd.s32 %s646, 1
      %p650 = scmp.eq.s32.totalorder %s33, 1
      %p651 = scmp.ne.s32.totalorder %s646, %s648
      %p652 = scmp.eq.s32.totalorder %s33, 0
      %p653 = por %p651, %p652
      %p654 = scmp.ne.s32.totalorder %s646, %s648
      %p655 = scmp.eq.s32.totalorder %s38, 1
      %p656 = por %p654, %p655
      %p657 = scmp.ne.s32.totalorder %s648, %s649
      %p658 = scmp.eq.s32.totalorder %s38, 0
      %p659 = por %p657, %p658
      %p660 = scmp.ne.s32.totalorder %s648, %s649
      %p661 = scmp.eq.s32.totalorder %s39, 1
      %p662 = por %p660, %p661
      %p664 = scmp.ne.s32.totalorder %s649, %s663
      %p665 = scmp.eq.s32.totalorder %s39, 0
      %p666 = por %p664, %p665
      %s668 = sadd.s32 %s667, 1
      %p671 = scmp.eq.s32.totalorder %s33, 1
      %p672 = scmp.ne.s32.totalorder %s667, %s669
      %p673 = scmp.eq.s32.totalorder %s33, 0
      %p674 = por %p672, %p673
      %p675 = scmp.ne.s32.totalorder %s667, %s669
      %p676 = scmp.eq.s32.totalorder %s38, 1
      %p677 = por %p675, %p676
      %p678 = scmp.ne.s32.totalorder %s669, %s670
      %p679 = scmp.eq.s32.totalorder %s38, 0
      %p680 = por %p678, %p679
      %p681 = scmp.ne.s32.totalorder %s669, %s670
      %p682 = scmp.eq.s32.totalorder %s39, 1
      %p683 = por %p681, %p682
      %p685 = scmp.ne.s32.totalorder %s670, %s684
      %p686 = scmp.eq.s32.totalorder %s39, 0
      %p687 = por %p685, %p686
      %p688 = scmp.le.s32.totalorder 1, %s33
      %p689 = scmp.lt.s32.totalorder %s33, 3
      %p690 = pnand %p688, %p689
      %p691 = pneg %p690
      // Predicated region
      $region9: #{clip_model_forward.1} parent=5 // pred_check
        _
      $region10: #{clip_model_forward.1} parent=5 // pred_check_branch
        %693 = sbr.rel (%p690) target = $region12
      $region11: #{clip_model_forward.1} parent=5 // pred_region
        %s694 = ssub.s32 %s33, 1
        // Predicated region
        $region13: #{clip_model_forward.1} parent=11 // pred_check
          %p695 = pneg %p54
        $region14: #{clip_model_forward.1} parent=11 // pred_check_branch
          %697 = sbr.rel (%p695) target = $region16
        $region15: #{clip_model_forward.1} parent=11 // pred_region
          _
        $region16: #{clip_model_forward.1} parent=11 // pred_fallthru
          _
        // Predicated region
        $region17: #{clip_model_forward.1} parent=11 // pred_check
          %p698 = pneg %p75
        $region18: #{clip_model_forward.1} parent=11 // pred_check_branch
          %700 = sbr.rel (%p698) target = $region20
        $region19: #{clip_model_forward.1} parent=11 // pred_region
          _
        $region20: #{clip_model_forward.1} parent=11 // pred_fallthru
          _
        // Predicated region
        $region21: #{clip_model_forward.1} parent=11 // pred_check
          %p701 = pneg %p96
        $region22: #{clip_model_forward.1} parent=11 // pred_check_branch
          %703 = sbr.rel (%p701) target = $region24
        $region23: #{clip_model_forward.1} parent=11 // pred_region
          _
        $region24: #{clip_model_forward.1} parent=11 // pred_fallthru
          _
        // Predicated region
        $region25: #{clip_model_forward.1} parent=11 // pred_check
          %p704 = pneg %p117
        $region26: #{clip_model_forward.1} parent=11 // pred_check_branch
          %706 = sbr.rel (%p704) target = $region28
        $region27: #{clip_model_forward.1} parent=11 // pred_region
          _
        $region28: #{clip_model_forward.1} parent=11 // pred_fallthru
          _
        // Predicated region
        $region29: #{clip_model_forward.1} parent=11 // pred_check
          %p707 = pneg %p138
        $region30: #{clip_model_forward.1} parent=11 // pred_check_branch
          %709 = sbr.rel (%p707) target = $region32
        $region31: #{clip_model_forward.1} parent=11 // pred_region
          _
        $region32: #{clip_model_forward.1} parent=11 // pred_fallthru
          _
        // Predicated region
        $region33: #{clip_model_forward.1} parent=11 // pred_check
          %p710 = pneg %p159
        $region34: #{clip_model_forward.1} parent=11 // pred_check_branch
          %712 = sbr.rel (%p710) target = $region36
        $region35: #{clip_model_forward.1} parent=11 // pred_region
          _
        $region36: #{clip_model_forward.1} parent=11 // pred_fallthru
          _
        // Predicated region
        $region37: #{clip_model_forward.1} parent=11 // pred_check
          %p713 = pneg %p596
        $region38: #{clip_model_forward.1} parent=11 // pred_check_branch
          %715 = sbr.rel (%p713) target = $region40
        $region39: #{clip_model_forward.1} parent=11 // pred_region
          _
        $region40: #{clip_model_forward.1} parent=11 // pred_fallthru
          _
        // Predicated region
        $region41: #{clip_model_forward.1} parent=11 // pred_check
          %p716 = pneg %p617
        $region42: #{clip_model_forward.1} parent=11 // pred_check_branch
          %718 = sbr.rel (%p716) target = $region44
        $region43: #{clip_model_forward.1} parent=11 // pred_region
          _
        $region44: #{clip_model_forward.1} parent=11 // pred_fallthru
          _
        // Predicated region
        $region45: #{clip_model_forward.1} parent=11 // pred_check
          %p719 = pneg %p638
        $region46: #{clip_model_forward.1} parent=11 // pred_check_branch
          %721 = sbr.rel (%p719) target = $region48
        $region47: #{clip_model_forward.1} parent=11 // pred_region
          _
        $region48: #{clip_model_forward.1} parent=11 // pred_fallthru
          _
        // Predicated region
        $region49: #{clip_model_forward.1} parent=11 // pred_check
          %p722 = pneg %p659
        $region50: #{clip_model_forward.1} parent=11 // pred_check_branch
          %724 = sbr.rel (%p722) target = $region52
        $region51: #{clip_model_forward.1} parent=11 // pred_region
          _
        $region52: #{clip_model_forward.1} parent=11 // pred_fallthru
          _
      $region12: #{clip_model_forward.1} parent=5 // pred_fallthru
        _
      %p725 = scmp.lt.s32.totalorder %s33, 2
      // Predicated region
      $region53: #{clip_model_forward.1} parent=5 // pred_check
        %p726 = pneg %p725
      $region54: #{clip_model_forward.1} parent=5 // pred_check_branch
        %728 = sbr.rel (%p726) target = $region56
      $region55: #{clip_model_forward.1} parent=5 // pred_region
        // Predicated region
        $region57: #{clip_model_forward.1} parent=55 // pred_check
          %p729 = pneg %p179
        $region58: #{clip_model_forward.1} parent=55 // pred_check_branch
          %731 = sbr.rel (%p729) target = $region60
        $region59: #{clip_model_forward.1} parent=55 // pred_region
          %p732 = scmp.lt.s32.totalorder %s33, 1
          %s733 = scalar_select %p732, %s33, 1
          %s734 = scalar_lea.vmem %s6, %s733
        $region60: #{clip_model_forward.1} parent=55 // pred_fallthru
          _
        // Predicated region
        $region61: #{clip_model_forward.1} parent=55 // pred_check
          %p735 = pneg %p205
        $region62: #{clip_model_forward.1} parent=55 // pred_check_branch
          %737 = sbr.rel (%p735) target = $region64
        $region63: #{clip_model_forward.1} parent=55 // pred_region
          %p738 = scmp.lt.s32.totalorder %s33, 1
          %s739 = scalar_select %p738, %s33, 1
          %s740 = scalar_lea.vmem %s7, %s739
        $region64: #{clip_model_forward.1} parent=55 // pred_fallthru
          _
        // Predicated region
        $region65: #{clip_model_forward.1} parent=55 // pred_check
          %p741 = pneg %p231
        $region66: #{clip_model_forward.1} parent=55 // pred_check_branch
          %743 = sbr.rel (%p741) target = $region68
        $region67: #{clip_model_forward.1} parent=55 // pred_region
          %p744 = scmp.lt.s32.totalorder %s33, 1
          %s745 = scalar_select %p744, %s33, 1
          %s746 = smul.addr %s745, 32
          %s747 = smul.addr %s746, 4
          %s748 = scalar_lea.vmem %s8, %s747
        $region68: #{clip_model_forward.1} parent=55 // pred_fallthru
          _
        // Predicated region
        $region69: #{clip_model_forward.1} parent=55 // pred_check
          %p749 = pneg %p257
        $region70: #{clip_model_forward.1} parent=55 // pred_check_branch
          %751 = sbr.rel (%p749) target = $region72
        $region71: #{clip_model_forward.1} parent=55 // pred_region
          %p752 = scmp.lt.s32.totalorder %s33, 1
          %s753 = scalar_select %p752, %s33, 1
          %s754 = smul.addr %s753, 32
          %s755 = smul.addr %s754, 4
          %s756 = scalar_lea.vmem %s9, %s755
        $region72: #{clip_model_forward.1} parent=55 // pred_fallthru
          _
        // Predicated region
        $region73: #{clip_model_forward.1} parent=55 // pred_check
          %p757 = pneg %p283
        $region74: #{clip_model_forward.1} parent=55 // pred_check_branch
          %759 = sbr.rel (%p757) target = $region76
        $region75: #{clip_model_forward.1} parent=55 // pred_region
          %p760 = scmp.lt.s32.totalorder %s33, 1
          %s761 = scalar_select %p760, %s33, 1
          %s762 = smul.addr %s761, 32
          %s763 = smul.addr %s762, 4
          %s764 = scalar_lea.vmem %s10, %s763
        $region76: #{clip_model_forward.1} parent=55 // pred_fallthru
          _
        // Predicated region
        $region77: #{clip_model_forward.1} parent=55 // pred_check
          %p765 = pneg %p309
        $region78: #{clip_model_forward.1} parent=55 // pred_check_branch
          %767 = sbr.rel (%p765) target = $region80
        $region79: #{clip_model_forward.1} parent=55 // pred_region
          %p768 = scmp.lt.s32.totalorder %s33, 1
          %s769 = scalar_select %p768, %s33, 1
          %s770 = smul.addr %s769, 4
          %s771 = scalar_lea.vmem %s11, %s770
        $region80: #{clip_model_forward.1} parent=55 // pred_fallthru
          _
        // Predicated region
        $region81: #{clip_model_forward.1} parent=55 // pred_check
          %p772 = pneg %p335
        $region82: #{clip_model_forward.1} parent=55 // pred_check_branch
          %774 = sbr.rel (%p772) target = $region84
        $region83: #{clip_model_forward.1} parent=55 // pred_region
          %p775 = scmp.lt.s32.totalorder %s33, 1
          %s776 = scalar_select %p775, %s33, 1
          %s777 = smul.addr %s776, 4
          %s778 = scalar_lea.vmem %s12, %s777
        $region84: #{clip_model_forward.1} parent=55 // pred_fallthru
          _
        // Predicated region
        $region85: #{clip_model_forward.1} parent=55 // pred_check
          %p779 = pneg %p361
        $region86: #{clip_model_forward.1} parent=55 // pred_check_branch
          %781 = sbr.rel (%p779) target = $region88
        $region87: #{clip_model_forward.1} parent=55 // pred_region
          %p782 = scmp.lt.s32.totalorder %s33, 1
          %s783 = scalar_select %p782, %s33, 1
          %s784 = smul.addr %s783, 4
          %s785 = scalar_lea.vmem %s13, %s784
        $region88: #{clip_model_forward.1} parent=55 // pred_fallthru
          _
        // Predicated region
        $region89: #{clip_model_forward.1} parent=55 // pred_check
          %p786 = pneg %p387
        $region90: #{clip_model_forward.1} parent=55 // pred_check_branch
          %788 = sbr.rel (%p786) target = $region92
        $region91: #{clip_model_forward.1} parent=55 // pred_region
          %p789 = scmp.lt.s32.totalorder %s33, 1
          %s790 = scalar_select %p789, %s33, 1
          %s791 = smul.addr %s790, 8
          %s792 = smul.addr %s791, 4
          %s793 = scalar_lea.vmem %s14, %s792
        $region92: #{clip_model_forward.1} parent=55 // pred_fallthru
          _
        // Predicated region
        $region93: #{clip_model_forward.1} parent=55 // pred_check
          %p794 = pneg %p413
        $region94: #{clip_model_forward.1} parent=55 // pred_check_branch
          %796 = sbr.rel (%p794) target = $region96
        $region95: #{clip_model_forward.1} parent=55 // pred_region
          %p797 = scmp.lt.s32.totalorder %s33, 1
          %s798 = scalar_select %p797, %s33, 1
          %s799 = scalar_lea.vmem %s15, %s798
        $region96: #{clip_model_forward.1} parent=55 // pred_fallthru
          _
        // Predicated region
        $region97: #{clip_model_forward.1} parent=55 // pred_check
          %p800 = pneg %p439
        $region98: #{clip_model_forward.1} parent=55 // pred_check_branch
          %802 = sbr.rel (%p800) target = $region100
        $region99: #{clip_model_forward.1} parent=55 // pred_region
          %p803 = scmp.lt.s32.totalorder %s33, 1
          %s804 = scalar_select %p803, %s33, 1
          %s805 = scalar_lea.vmem %s16, %s804
        $region100: #{clip_model_forward.1} parent=55 // pred_fallthru
          _
        // Predicated region
        $region101: #{clip_model_forward.1} parent=55 // pred_check
          %p806 = pneg %p465
        $region102: #{clip_model_forward.1} parent=55 // pred_check_branch
          %808 = sbr.rel (%p806) target = $region104
        $region103: #{clip_model_forward.1} parent=55 // pred_region
          %p809 = scmp.lt.s32.totalorder %s33, 1
          %s810 = scalar_select %p809, %s33, 1
          %s811 = scalar_lea.vmem %s17, %s810
        $region104: #{clip_model_forward.1} parent=55 // pred_fallthru
          _
        // Predicated region
        $region105: #{clip_model_forward.1} parent=55 // pred_check
          %p812 = pneg %p491
        $region106: #{clip_model_forward.1} parent=55 // pred_check_branch
          %814 = sbr.rel (%p812) target = $region108
        $region107: #{clip_model_forward.1} parent=55 // pred_region
          %p815 = scmp.lt.s32.totalorder %s33, 1
          %s816 = scalar_select %p815, %s33, 1
          %s817 = smul.addr %s816, 16
          %s818 = smul.addr %s817, 4
          %s819 = scalar_lea.vmem %s18, %s818
        $region108: #{clip_model_forward.1} parent=55 // pred_fallthru
          _
        // Predicated region
        $region109: #{clip_model_forward.1} parent=55 // pred_check
          %p820 = pneg %p517
        $region110: #{clip_model_forward.1} parent=55 // pred_check_branch
          %822 = sbr.rel (%p820) target = $region112
        $region111: #{clip_model_forward.1} parent=55 // pred_region
          %p823 = scmp.lt.s32.totalorder %s33, 1
          %s824 = scalar_select %p823, %s33, 1
          %s825 = smul.addr %s824, 2
          %s826 = scalar_lea.vmem %s19, %s825
        $region112: #{clip_model_forward.1} parent=55 // pred_fallthru
          _
        // Predicated region
        $region113: #{clip_model_forward.1} parent=55 // pred_check
          %p827 = pneg %p543
        $region114: #{clip_model_forward.1} parent=55 // pred_check_branch
          %829 = sbr.rel (%p827) target = $region116
        $region115: #{clip_model_forward.1} parent=55 // pred_region
          %p830 = scmp.lt.s32.totalorder %s33, 1
          %s831 = scalar_select %p830, %s33, 1
          %s832 = smul.addr %s831, 32
          %s833 = smul.addr %s832, 4
          %s834 = scalar_lea.vmem %s20, %s833
        $region116: #{clip_model_forward.1} parent=55 // pred_fallthru
          _
        // Predicated region
        $region117: #{clip_model_forward.1} parent=55 // pred_check
          %p835 = pneg %p569
        $region118: #{clip_model_forward.1} parent=55 // pred_check_branch
          %837 = sbr.rel (%p835) target = $region120
        $region119: #{clip_model_forward.1} parent=55 // pred_region
          %p838 = scmp.lt.s32.totalorder %s33, 1
          %s839 = scalar_select %p838, %s33, 1
          %s840 = scalar_lea.vmem %s21, %s839
        $region120: #{clip_model_forward.1} parent=55 // pred_fallthru
          _
      $region56: #{clip_model_forward.1} parent=5 // pred_fallthru
        _
      %p841 = scmp.le.s32.totalorder 1, %s33
      %p842 = scmp.lt.s32.totalorder %s33, 3
      %p843 = pnand %p841, %p842
      %p844 = pneg %p843
      // Predicated region
      $region121: #{clip_model_forward.1} parent=5 // pred_check
        _
      $region122: #{clip_model_forward.1} parent=5 // pred_check_branch
        %846 = sbr.rel (%p843) target = $region124
      $region123: #{clip_model_forward.1} parent=5 // pred_region
        %s847 = ssub.s32 %s33, 1
        %p848 = pneg %p54
        %p849 = pneg %p51
        %p850 = pneg %p75
        %p851 = pneg %p72
        %p852 = pneg %p96
        %p853 = pneg %p93
        %p854 = pneg %p117
        %p855 = pneg %p114
        %p856 = pneg %p138
        %p857 = pneg %p135
        %p858 = pneg %p159
        %p859 = pneg %p156
        %p860 = scmp.lt.s32.totalorder %s38, 1
        %s861 = scalar_select %p860, %s38, 1
        %s862 = scalar_lea.vmem %s6, %s861
        %p863 = pneg %p185
        %p864 = pneg %p182
        %p865 = scmp.lt.s32.totalorder %s38, 1
        %s866 = scalar_select %p865, %s38, 1
        %s867 = scalar_lea.vmem %s7, %s866
        %p868 = pneg %p211
        %p869 = pneg %p208
        %p870 = scmp.lt.s32.totalorder %s38, 1
        %s871 = scalar_select %p870, %s38, 1
        %s872 = smul.addr %s871, 32
        %s873 = smul.addr %s872, 4
        %s874 = scalar_lea.vmem %s8, %s873
        %p875 = pneg %p237
        %p876 = pneg %p234
        %p877 = scmp.lt.s32.totalorder %s38, 1
        %s878 = scalar_select %p877, %s38, 1
        %s879 = smul.addr %s878, 32
        %s880 = smul.addr %s879, 4
        %s881 = scalar_lea.vmem %s9, %s880
        %p882 = pneg %p263
        %p883 = pneg %p260
        %p884 = scmp.lt.s32.totalorder %s38, 1
        %s885 = scalar_select %p884, %s38, 1
        %s886 = smul.addr %s885, 32
        %s887 = smul.addr %s886, 4
        %s888 = scalar_lea.vmem %s10, %s887
        %p889 = pneg %p289
        %p890 = pneg %p286
        %p891 = scmp.lt.s32.totalorder %s38, 1
        %s892 = scalar_select %p891, %s38, 1
        %s893 = smul.addr %s892, 4
        %s894 = scalar_lea.vmem %s11, %s893
        %p895 = pneg %p315
        %p896 = pneg %p312
        %p897 = scmp.lt.s32.totalorder %s38, 1
        %s898 = scalar_select %p897, %s38, 1
        %s899 = smul.addr %s898, 4
        %s900 = scalar_lea.vmem %s12, %s899
        %p901 = pneg %p341
        %p902 = pneg %p338
        %p903 = scmp.lt.s32.totalorder %s38, 1
        %s904 = scalar_select %p903, %s38, 1
        %s905 = smul.addr %s904, 4
        %s906 = scalar_lea.vmem %s13, %s905
        %p907 = pneg %p367
        %p908 = pneg %p364
        %p909 = scmp.lt.s32.totalorder %s38, 1
        %s910 = scalar_select %p909, %s38, 1
        %s911 = smul.addr %s910, 8
        %s912 = smul.addr %s911, 4
        %s913 = scalar_lea.vmem %s14, %s912
        %p914 = pneg %p393
        %p915 = pneg %p390
        %p916 = scmp.lt.s32.totalorder %s38, 1
        %s917 = scalar_select %p916, %s38, 1
        %s918 = scalar_lea.vmem %s15, %s917
        %p919 = pneg %p419
        %p920 = pneg %p416
        %p921 = scmp.lt.s32.totalorder %s38, 1
        %s922 = scalar_select %p921, %s38, 1
        %s923 = scalar_lea.vmem %s16, %s922
        %p924 = pneg %p445
        %p925 = pneg %p442
        %p926 = scmp.lt.s32.totalorder %s38, 1
        %s927 = scalar_select %p926, %s38, 1
        %s928 = scalar_lea.vmem %s17, %s927
        %p929 = pneg %p471
        %p930 = pneg %p468
        %p931 = scmp.lt.s32.totalorder %s38, 1
        %s932 = scalar_select %p931, %s38, 1
        %s933 = smul.addr %s932, 16
        %s934 = smul.addr %s933, 4
        %s935 = scalar_lea.vmem %s18, %s934
        %p936 = pneg %p497
        %p937 = pneg %p494
        %p938 = scmp.lt.s32.totalorder %s38, 1
        %s939 = scalar_select %p938, %s38, 1
        %s940 = smul.addr %s939, 2
        %s941 = scalar_lea.vmem %s19, %s940
        %p942 = pneg %p523
        %p943 = pneg %p520
        %p944 = scmp.lt.s32.totalorder %s38, 1
        %s945 = scalar_select %p944, %s38, 1
        %s946 = smul.addr %s945, 32
        %s947 = smul.addr %s946, 4
        %s948 = scalar_lea.vmem %s20, %s947
        %p949 = pneg %p549
        %p950 = pneg %p546
        %p951 = scmp.lt.s32.totalorder %s38, 1
        %s952 = scalar_select %p951, %s38, 1
        %s953 = scalar_lea.vmem %s21, %s952
        %p954 = pneg %p575
        %p955 = pneg %p572
        %p956 = pneg %p596
        %p957 = pneg %p593
        %p958 = pneg %p617
        %p959 = pneg %p614
        %p960 = pneg %p638
        %p961 = pneg %p635
        %p962 = pneg %p659
        %p963 = pneg %p656
        %p964 = pneg %p680
        %p965 = pneg %p677
        %p966 = scmp.lt.s32.totalorder %s38, 1
        %s967 = scalar_select %p966, %s38, 1
        %s968 = scalar_lea.vmem %s6, %s967
        %p969 = scmp.lt.s32.totalorder %s38, 1
        %s970 = scalar_select %p969, %s38, 1
        %s971 = scalar_lea.vmem %s7, %s970
        %p972 = scmp.lt.s32.totalorder %s38, 1
        %s973 = scalar_select %p972, %s38, 1
        %s974 = smul.addr %s973, 32
        %s975 = smul.addr %s974, 4
        %s976 = scalar_lea.vmem %s8, %s975
        %p977 = scmp.lt.s32.totalorder %s38, 1
        %s978 = scalar_select %p977, %s38, 1
        %s979 = smul.addr %s978, 32
        %s980 = smul.addr %s979, 4
        %s981 = scalar_lea.vmem %s9, %s980
        %p982 = scmp.lt.s32.totalorder %s38, 1
        %s983 = scalar_select %p982, %s38, 1
        %s984 = smul.addr %s983, 32
        %s985 = smul.addr %s984, 4
        %s986 = scalar_lea.vmem %s10, %s985
        %p987 = scmp.lt.s32.totalorder %s38, 1
        %s988 = scalar_select %p987, %s38, 1
        %s989 = smul.addr %s988, 4
        %s990 = scalar_lea.vmem %s11, %s989
        %p991 = scmp.lt.s32.totalorder %s38, 1
        %s992 = scalar_select %p991, %s38, 1
        %s993 = smul.addr %s992, 4
        %s994 = scalar_lea.vmem %s12, %s993
        %p995 = scmp.lt.s32.totalorder %s38, 1
        %s996 = scalar_select %p995, %s38, 1
        %s997 = smul.addr %s996, 4
        %s998 = scalar_lea.vmem %s13, %s997
        %p999 = scmp.lt.s32.totalorder %s38, 1
        %s1000 = scalar_select %p999, %s38, 1
        %s1001 = smul.addr %s1000, 8
        %s1002 = smul.addr %s1001, 4
        %s1003 = scalar_lea.vmem %s14, %s1002
        %p1004 = scmp.lt.s32.totalorder %s38, 1
        %s1005 = scalar_select %p1004, %s38, 1
        %s1006 = scalar_lea.vmem %s15, %s1005
        %p1007 = scmp.lt.s32.totalorder %s38, 1
        %s1008 = scalar_select %p1007, %s38, 1
        %s1009 = scalar_lea.vmem %s16, %s1008
        %p1010 = scmp.lt.s32.totalorder %s38, 1
        %s1011 = scalar_select %p1010, %s38, 1
        %s1012 = scalar_lea.vmem %s17, %s1011
        %p1013 = scmp.lt.s32.totalorder %s38, 1
        %s1014 = scalar_select %p1013, %s38, 1
        %s1015 = smul.addr %s1014, 16
        %s1016 = smul.addr %s1015, 4
        %s1017 = scalar_lea.vmem %s18, %s1016
        %p1018 = scmp.lt.s32.totalorder %s38, 1
        %s1019 = scalar_select %p1018, %s38, 1
        %s1020 = smul.addr %s1019, 2
        %s1021 = scalar_lea.vmem %s19, %s1020
        %p1022 = scmp.lt.s32.totalorder %s38, 1
        %s1023 = scalar_select %p1022, %s38, 1
        %s1024 = smul.addr %s1023, 32
        %s1025 = smul.addr %s1024, 4
        %s1026 = scalar_lea.vmem %s20, %s1025
        %p1027 = scmp.lt.s32.totalorder %s38, 1
        %s1028 = scalar_select %p1027, %s38, 1
        %s1029 = scalar_lea.vmem %s21, %s1028
        %p1031 = scmp.eq.s32.totalorder %s38, 0
        // Predicated region
        $region125: #{clip_model_forward.1} parent=123 // pred_check
          %p1032 = pneg %p1031
        $region126: #{clip_model_forward.1} parent=123 // pred_check_branch
          %1034 = sbr.rel (%p1032) target = $region128
        $region127: #{clip_model_forward.1} parent=123 // pred_region
          %v1035 = vld [vmem:[%s0] sm:$0xff]
          %v1036 = vld [vmem:[%s0 + $0x8] sm:$0x11]
          %v1037 = vld [vmem:[%s1] sm:$0xf]
          %v1038 = vld [vmem:[%s1 + $0x4] sm:$0xf]
          %v1039 = vld [vmem:[%s1 + $0x8] sm:$0xf]
          %v1040 = vld [vmem:[%s1 + $0xc] sm:$0xf]
          %v1041 = vld [vmem:[%s1 + $0x10] sm:$0xf]
          %v1042 = vld [vmem:[%s1 + $0x14] sm:$0xf]
          %v1043 = vld [vmem:[%s1 + $0x18] sm:$0xf]
          %v1044 = vld [vmem:[%s1 + $0x1c] sm:$0xf]
          %v1045 = vld [vmem:[%s1 + $0x20] sm:$0xf]
          %v1046 = vld [vmem:[%s1 + $0x24] sm:$0xf]
          %v1047 = vld [vmem:[%s1 + $0x28] sm:$0xf]
          %v1048 = vld [vmem:[%s1 + $0x2c] sm:$0xf]
          %v1049 = vld [vmem:[%s1 + $0x30] sm:$0xf]
          %v1050 = vld [vmem:[%s1 + $0x34] sm:$0xf]
          %v1051 = vld [vmem:[%s1 + $0x38] sm:$0xf]
          %v1052 = vld [vmem:[%s1 + $0x3c] sm:$0xf]
          %v1053 = vld [vmem:[%s1 + $0x40] sm:$0xf]
          %v1054 = vld [vmem:[%s1 + $0x44] sm:$0xf]
          %v1055 = vld [vmem:[%s1 + $0x48] sm:$0xf]
          %v1056 = vld [vmem:[%s1 + $0x4c] sm:$0xf]
          %v1057 = vld [vmem:[%s1 + $0x50] sm:$0xf]
          %v1058 = vld [vmem:[%s1 + $0x54] sm:$0xf]
          %v1059 = vld [vmem:[%s1 + $0x58] sm:$0xf]
          %v1060 = vld [vmem:[%s1 + $0x5c] sm:$0xf]
          %v1061 = vld [vmem:[%s2] sm:$0xff]
          %v1062 = vld [vmem:[%s2 + $0x8] sm:$0x3]
          %v1065 = vunpack.c.l.b16 %v1035
          %v1066 = vunpack.c.h.b16 %v1035
          %v1067 = vunpack.c.l.b16 %v1036
          %v1068 = vunpack.c.h.b16 %v1036
          %v1069 = vpack.c.b16 %v1067, %v1065
          %v1070 = vpack.c.b16 %v1068, %v1066
          %v1096 = vunpack.c.l.b16 %v1037
          %v1097 = vunpack.c.l.b16 %v1038
          %v1098 = vunpack.c.l.b16 %v1039
          %v1099 = vunpack.c.l.b16 %v1040
          %v1100 = vunpack.c.l.b16 %v1041
          %v1101 = vunpack.c.l.b16 %v1042
          %v1102 = vunpack.c.l.b16 %v1043
          %v1103 = vunpack.c.l.b16 %v1044
          %v1104 = vunpack.c.l.b16 %v1045
          %v1105 = vunpack.c.l.b16 %v1046
          %v1106 = vunpack.c.l.b16 %v1047
          %v1107 = vunpack.c.l.b16 %v1048
          %v1108 = vunpack.c.l.b16 %v1049
          %v1109 = vunpack.c.l.b16 %v1050
          %v1110 = vunpack.c.l.b16 %v1051
          %v1111 = vunpack.c.l.b16 %v1052
          %v1112 = vunpack.c.l.b16 %v1053
          %v1113 = vunpack.c.l.b16 %v1054
          %v1114 = vunpack.c.l.b16 %v1055
          %v1115 = vunpack.c.l.b16 %v1056
          %v1116 = vunpack.c.l.b16 %v1057
          %v1117 = vunpack.c.l.b16 %v1058
          %v1118 = vunpack.c.l.b16 %v1059
          %v1119 = vunpack.c.l.b16 %v1060
          %v1120 = vpack.c.b16 %v1097, %v1096
          %v1121 = vpack.c.b16 %v1099, %v1098
          %v1122 = vpack.c.b16 %v1101, %v1100
          %v1123 = vpack.c.b16 %v1103, %v1102
          %v1124 = vpack.c.b16 %v1105, %v1104
          %v1125 = vpack.c.b16 %v1107, %v1106
          %v1126 = vpack.c.b16 %v1109, %v1108
          %v1127 = vpack.c.b16 %v1111, %v1110
          %v1128 = vpack.c.b16 %v1113, %v1112
          %v1129 = vpack.c.b16 %v1115, %v1114
          %v1130 = vpack.c.b16 %v1117, %v1116
          %v1131 = vpack.c.b16 %v1119, %v1118
          %vm1144 = vcmask 523264
          %v1146 = vsel %vm1144, %v1070, 0
          %1148 = vmatprep.subr.bf16.mxu0 0
          %1149 = vmatpush1.bf16.msra.mxu0 %v1120
          %1150 = vmatprep.subr.bf16.mxu0 0
          %1151 = vmatpush1.bf16.msra.mxu0 %v1121
          %1152 = vmatprep.subr.bf16.mxu0 0
          %1153 = vmatpush1.bf16.msra.mxu0 %v1122
          %1154 = vmatprep.subr.bf16.mxu0 0
          %1155 = vmatpush1.bf16.msra.mxu0 %v1123
          %1156 = vmatprep.subr.bf16.mxu0 0
          %1157 = vmatpush1.bf16.msra.mxu0 %v1124
          %1158 = vmatprep.subr.bf16.mxu0 0
          %1159 = vmatpush1.bf16.msra.mxu0 %v1125
          %1160 = vmatprep.subr.bf16.mxu0 0
          %1161 = vmatpush1.bf16.msra.mxu0 %v1126
          %1162 = vmatprep.subr.bf16.mxu0 0
          %1163 = vmatpush1.bf16.msra.mxu0 %v1127
          %1164 = vmatprep.subr.bf16.mxu0 0
          %1165 = vmatpush1.bf16.msra.mxu0 %v1128
          %1166 = vmatprep.subr.bf16.mxu0 0
          %1167 = vmatpush1.bf16.msra.mxu0 %v1129
          %1168 = vmatprep.subr.bf16.mxu0 0
          %1169 = vmatpush1.bf16.msra.mxu0 %v1130
          %1170 = vmatprep.subr.bf16.mxu0 0
          %1171 = vmatpush1.bf16.msra.mxu0 %v1131
          %1172 = vmatprep.subr.bf16.mxu0 0
          %1173 = vmatpush1.bf16.msra.mxu0 0
          %1174 = vmatprep.subr.bf16.mxu0 0
          %1175 = vmatpush1.bf16.msra.mxu0 0
          %1176 = vmatprep.subr.bf16.mxu0 0
          %1177 = vmatpush1.bf16.msra.mxu0 0
          %1178 = vmatprep.subr.bf16.mxu0 0
          %1179 = vmatpush1.bf16.msra.mxu0 0
          %1180 = vmatprep.mubr.bf16.mxu0 %v1146
          %1181 = vmatmul.mubr.bf16.gmra.mrb[0].mxu0 %v1069
          %v1182 = vpop.f32.mrb[0].mxu0
          %v1183 = vadd.f32 %v1061, %v1182
          %v1184 = vpop.f32.mrb[0].mxu0
          %v1185 = vpop.f32.mrb[0].mxu0
          %v1186 = vadd.f32 %v1062, %v1185
          %v1187 = vpop.f32.mrb[0].mxu0
          %1188 = vdwg.mxu0
          %v1189 = vld [vmem:[%s3] sm:$0x1]
          %v1190 = vld [vmem:[%s4] sm:$0x1]
          %v1191 = vsel %vm1144, %v1183, 0.0
          %1192 = vadd.xlane.f32.xlu0 %v1191
          %v1193 = vpop.xlane.xlu0 %1192
          %vm1194 = vcmask 517120
          %v1195 = vsel %vm1194, %v1186, 0.0
          %1196 = vadd.xlane.f32.xlu0 %v1195
          %v1197 = vpop.xlane.xlu0 %1196
          %v1198 = vrcp.pop 64.0
          %v1199 = vmul.f32 %v1193, %v1198
          %v1200 = vmul.f32 %v1197, %v1198
          %v1201 = vsub.f32 %v1183, %v1199
          %v1202 = vsub.f32 %v1186, %v1200
          %v1203 = vmul.f32 %v1201, %v1201
          %v1204 = vmul.f32 %v1202, %v1202
          %v1205 = vsel %vm1144, %v1203, 0.0
          %1206 = vadd.xlane.f32.xlu0 %v1205
          %v1207 = vpop.xlane.xlu0 %1206
          %v1208 = vsel %vm1194, %v1204, 0.0
          %1209 = vadd.xlane.f32.xlu0 %v1208
          %v1210 = vpop.xlane.xlu0 %1209
          %v1211 = vmul.f32 %v1207, %v1198
          %v1212 = vmul.f32 %v1210, %v1198
          %v1213 = vadd.f32 %v1211, 1e-05
          %v1214 = vadd.f32 %v1212, 1e-05
          %v1215 = vrsqrt.pop %v1213
          %v1216 = vrsqrt.pop %v1214
          %v1217 = vmul.f32 %v1201, %v1215
          %v1218 = vmul.f32 %v1202, %v1216
          %v1220 = vlaneseq
          %v1221 = vshrl.u32 %v1220, 7
          %v1222 = vsub.s32 0, %v1221
          %v1223 = vrot.slane %v1189, %v1222
          %v1225 = vmul.f32 %v1217, %v1223
          %v1226 = vmul.f32 %v1218, %v1223
          %v1228 = vlaneseq
          %v1229 = vshrl.u32 %v1228, 7
          %v1230 = vsub.s32 0, %v1229
          %v1231 = vrot.slane %v1190, %v1230
          %v1233 = vadd.f32 %v1225, %v1231
          %v1234 = vadd.f32 %v1226, %v1231
          %1235 = vst.msk [vmem:[#allocation2] sm:$0xff] %vm1144, %v1233
          %1236 = vst.msk [vmem:[#allocation2 + $0x8] sm:$0x3] %vm1194, %v1234
        $region128: #{clip_model_forward.1} parent=123 // pred_fallthru
          _
        %v1237 = vld [vmem:[#allocation2] sm:$0xff]
        %v1238 = vld [vmem:[#allocation2 + $0x8] sm:$0x3]
        %v1239 = vld [vmem:[%s968] sm:$0x1]
        %v1240 = vld [vmem:[%s971] sm:$0x1]
        %vm1241 = vcmask 523264
        %v1242 = vsel %vm1241, %v1237, 0.0
        %1243 = vadd.xlane.f32.xlu0 %v1242
        %v1244 = vpop.xlane.xlu0 %1243
        %vm1245 = vcmask 517120
        %v1246 = vsel %vm1245, %v1238, 0.0
        %1247 = vadd.xlane.f32.xlu0 %v1246
        %v1248 = vpop.xlane.xlu0 %1247
        %v1249 = vrcp.pop 64.0
        %v1250 = vmul.f32 %v1244, %v1249
        %v1251 = vmul.f32 %v1248, %v1249
        %v1252 = vsub.f32 %v1237, %v1250
        %v1253 = vsub.f32 %v1238, %v1251
        %v1254 = vmul.f32 %v1252, %v1252
        %v1255 = vmul.f32 %v1253, %v1253
        %v1256 = vsel %vm1241, %v1254, 0.0
        %1257 = vadd.xlane.f32.xlu0 %v1256
        %v1258 = vpop.xlane.xlu0 %1257
        %v1259 = vsel %vm1245, %v1255, 0.0
        %1260 = vadd.xlane.f32.xlu0 %v1259
        %v1261 = vpop.xlane.xlu0 %1260
        %v1262 = vmul.f32 %v1258, %v1249
        %v1263 = vmul.f32 %v1261, %v1249
        %v1264 = vadd.f32 %v1262, 1e-05
        %v1265 = vadd.f32 %v1263, 1e-05
        %v1266 = vrsqrt.pop %v1264
        %v1267 = vrsqrt.pop %v1265
        %v1268 = vmul.f32 %v1252, %v1266
        %v1269 = vmul.f32 %v1253, %v1267
        %v1271 = vlaneseq
        %v1272 = vshrl.u32 %v1271, 7
        %v1273 = vsub.s32 0, %v1272
        %v1274 = vrot.slane %v1239, %v1273
        %v1276 = vmul.f32 %v1268, %v1274
        %v1277 = vmul.f32 %v1269, %v1274
        %v1279 = vlaneseq
        %v1280 = vshrl.u32 %v1279, 7
        %v1281 = vsub.s32 0, %v1280
        %v1282 = vrot.slane %v1240, %v1281
        %v1284 = vadd.f32 %v1276, %v1282
        %v1285 = vadd.f32 %v1277, %v1282
        %v1286 = vpack.c.bf16 %v1285, %v1284
        %v1287 = vld [vmem:[%s5] sm:$0xff]
        %v1288 = vld [vmem:[%s5 + $0x8] sm:$0x3]
        %v1289 = vld [vmem:[%s976] sm:$0xf]
        %v1290 = vld [vmem:[%s976 + $0x4] sm:$0xf]
        %v1291 = vld [vmem:[%s976 + $0x8] sm:$0xf]
        %v1292 = vld [vmem:[%s976 + $0xc] sm:$0xf]
        %v1293 = vld [vmem:[%s976 + $0x10] sm:$0xf]
        %v1294 = vld [vmem:[%s976 + $0x14] sm:$0xf]
        %v1295 = vld [vmem:[%s976 + $0x18] sm:$0xf]
        %v1296 = vld [vmem:[%s976 + $0x1c] sm:$0xf]
        %v1297 = vld [vmem:[%s990] sm:$0x1]
        %v1299 = vlaneseq
        %v1300 = vshrl.u32 %v1299, 7
        %v1301 = vsub.s32 0, %v1300
        %v1302 = vrot.slane %v1297, %v1301
        %v1312 = vunpack.c.l.b16 %v1289
        %v1313 = vunpack.c.l.b16 %v1290
        %v1314 = vunpack.c.l.b16 %v1291
        %v1315 = vunpack.c.l.b16 %v1292
        %v1316 = vunpack.c.l.b16 %v1293
        %v1317 = vunpack.c.l.b16 %v1294
        %v1318 = vunpack.c.l.b16 %v1295
        %v1319 = vunpack.c.l.b16 %v1296
        %v1320 = vpack.c.b16 %v1313, %v1312
        %v1321 = vpack.c.b16 %v1315, %v1314
        %v1322 = vpack.c.b16 %v1317, %v1316
        %v1323 = vpack.c.b16 %v1319, %v1318
        %v1329 = vsel %vm1241, %v1286, 0
        %1331 = vmatprep.subr.bf16.mxu0 0
        %1332 = vmatpush1.bf16.msra.mxu0 %v1320
        %1333 = vmatprep.subr.bf16.mxu0 0
        %1334 = vmatpush1.bf16.msra.mxu0 %v1321
        %1335 = vmatprep.subr.bf16.mxu0 0
        %1336 = vmatpush1.bf16.msra.mxu0 %v1322
        %1337 = vmatprep.subr.bf16.mxu0 0
        %1338 = vmatpush1.bf16.msra.mxu0 %v1323
        %1339 = vmatprep.subr.bf16.mxu0 0
        %1340 = vmatpush1.bf16.msra.mxu0 0
        %1341 = vmatprep.subr.bf16.mxu0 0
        %1342 = vmatpush1.bf16.msra.mxu0 0
        %1343 = vmatprep.subr.bf16.mxu0 0
        %1344 = vmatpush1.bf16.msra.mxu0 0
        %1345 = vmatprep.subr.bf16.mxu0 0
        %1346 = vmatpush1.bf16.msra.mxu0 0
        %1347 = vmatprep.subr.bf16.mxu0 0
        %1348 = vmatpush1.bf16.msra.mxu0 0
        %1349 = vmatprep.subr.bf16.mxu0 0
        %1350 = vmatpush1.bf16.msra.mxu0 0
        %1351 = vmatprep.subr.bf16.mxu0 0
        %1352 = vmatpush1.bf16.msra.mxu0 0
        %1353 = vmatprep.subr.bf16.mxu0 0
        %1354 = vmatpush1.bf16.msra.mxu0 0
        %1355 = vmatprep.subr.bf16.mxu0 0
        %1356 = vmatpush1.bf16.msra.mxu0 0
        %1357 = vmatprep.subr.bf16.mxu0 0
        %1358 = vmatpush1.bf16.msra.mxu0 0
        %1359 = vmatprep.subr.bf16.mxu0 0
        %1360 = vmatpush1.bf16.msra.mxu0 0
        %1361 = vmatprep.subr.bf16.mxu0 0
        %1362 = vmatpush1.bf16.msra.mxu0 0
        %1363 = vmatprep.mubr.bf16.mxu0 0
        %1364 = vmatmul.mubr.bf16.gmra.mrb[0].mxu0 %v1329
        %v1365 = vpop.f32.mrb[0].mxu0
        %v1366 = vadd.f32 %v1302, %v1365
        %v1367 = vpop.f32.mrb[0].mxu0
        %v1368 = vpop.f32.mrb[0].mxu0
        %v1369 = vadd.f32 %v1302, %v1368
        %v1370 = vpop.f32.mrb[0].mxu0
        %1371 = vdwg.mxu0
        %v1372 = vld [vmem:[%s981] sm:$0xf]
        %v1373 = vld [vmem:[%s981 + $0x4] sm:$0xf]
        %v1374 = vld [vmem:[%s981 + $0x8] sm:$0xf]
        %v1375 = vld [vmem:[%s981 + $0xc] sm:$0xf]
        %v1376 = vld [vmem:[%s981 + $0x10] sm:$0xf]
        %v1377 = vld [vmem:[%s981 + $0x14] sm:$0xf]
        %v1378 = vld [vmem:[%s981 + $0x18] sm:$0xf]
        %v1379 = vld [vmem:[%s981 + $0x1c] sm:$0xf]
        %v1380 = vld [vmem:[%s994] sm:$0x1]
        %v1382 = vlaneseq
        %v1383 = vshrl.u32 %v1382, 7
        %v1384 = vsub.s32 0, %v1383
        %v1385 = vrot.slane %v1380, %v1384
        %v1395 = vunpack.c.l.b16 %v1372
        %v1396 = vunpack.c.l.b16 %v1373
        %v1397 = vunpack.c.l.b16 %v1374
        %v1398 = vunpack.c.l.b16 %v1375
        %v1399 = vunpack.c.l.b16 %v1376
        %v1400 = vunpack.c.l.b16 %v1377
        %v1401 = vunpack.c.l.b16 %v1378
        %v1402 = vunpack.c.l.b16 %v1379
        %v1403 = vpack.c.b16 %v1396, %v1395
        %v1404 = vpack.c.b16 %v1398, %v1397
        %v1405 = vpack.c.b16 %v1400, %v1399
        %v1406 = vpack.c.b16 %v1402, %v1401
        %1411 = vmatprep.subr.bf16.mxu0 0
        %1412 = vmatpush1.bf16.msra.mxu0 %v1403
        %1413 = vmatprep.subr.bf16.mxu0 0
        %1414 = vmatpush1.bf16.msra.mxu0 %v1404
        %1415 = vmatprep.subr.bf16.mxu0 0
        %1416 = vmatpush1.bf16.msra.mxu0 %v1405
        %1417 = vmatprep.subr.bf16.mxu0 0
        %1418 = vmatpush1.bf16.msra.mxu0 %v1406
        %1419 = vmatprep.subr.bf16.mxu0 0
        %1420 = vmatpush1.bf16.msra.mxu0 0
        %1421 = vmatprep.subr.bf16.mxu0 0
        %1422 = vmatpush1.bf16.msra.mxu0 0
        %1423 = vmatprep.subr.bf16.mxu0 0
        %1424 = vmatpush1.bf16.msra.mxu0 0
        %1425 = vmatprep.subr.bf16.mxu0 0
        %1426 = vmatpush1.bf16.msra.mxu0 0
        %1427 = vmatprep.subr.bf16.mxu0 0
        %1428 = vmatpush1.bf16.msra.mxu0 0
        %1429 = vmatprep.subr.bf16.mxu0 0
        %1430 = vmatpush1.bf16.msra.mxu0 0
        %1431 = vmatprep.subr.bf16.mxu0 0
        %1432 = vmatpush1.bf16.msra.mxu0 0
        %1433 = vmatprep.subr.bf16.mxu0 0
        %1434 = vmatpush1.bf16.msra.mxu0 0
        %1435 = vmatprep.subr.bf16.mxu0 0
        %1436 = vmatpush1.bf16.msra.mxu0 0
        %1437 = vmatprep.subr.bf16.mxu0 0
        %1438 = vmatpush1.bf16.msra.mxu0 0
        %1439 = vmatprep.subr.bf16.mxu0 0
        %1440 = vmatpush1.bf16.msra.mxu0 0
        %1441 = vmatprep.subr.bf16.mxu0 0
        %1442 = vmatpush1.bf16.msra.mxu0 0
        %1443 = vmatprep.mubr.bf16.mxu0 0
        %1444 = vmatmul.mubr.bf16.gmra.mrb[0].mxu0 %v1329
        %v1445 = vpop.f32.mrb[0].mxu0
        %v1446 = vadd.f32 %v1385, %v1445
        %v1447 = vpop.f32.mrb[0].mxu0
        %v1448 = vpop.f32.mrb[0].mxu0
        %v1449 = vadd.f32 %v1385, %v1448
        %v1450 = vpop.f32.mrb[0].mxu0
        %1451 = vdwg.mxu0
        %v1452 = vld [vmem:[%s986] sm:$0xf]
        %v1453 = vld [vmem:[%s986 + $0x4] sm:$0xf]
        %v1454 = vld [vmem:[%s986 + $0x8] sm:$0xf]
        %v1455 = vld [vmem:[%s986 + $0xc] sm:$0xf]
        %v1456 = vld [vmem:[%s986 + $0x10] sm:$0xf]
        %v1457 = vld [vmem:[%s986 + $0x14] sm:$0xf]
        %v1458 = vld [vmem:[%s986 + $0x18] sm:$0xf]
        %v1459 = vld [vmem:[%s986 + $0x1c] sm:$0xf]
        %v1460 = vld [vmem:[%s998] sm:$0x1]
        %v1462 = vlaneseq
        %v1463 = vshrl.u32 %v1462, 7
        %v1464 = vsub.s32 0, %v1463
        %v1465 = vrot.slane %v1460, %v1464
        %v1475 = vunpack.c.l.b16 %v1452
        %v1476 = vunpack.c.l.b16 %v1453
        %v1477 = vunpack.c.l.b16 %v1454
        %v1478 = vunpack.c.l.b16 %v1455
        %v1479 = vunpack.c.l.b16 %v1456
        %v1480 = vunpack.c.l.b16 %v1457
        %v1481 = vunpack.c.l.b16 %v1458
        %v1482 = vunpack.c.l.b16 %v1459
        %v1483 = vpack.c.b16 %v1476, %v1475
        %v1484 = vpack.c.b16 %v1478, %v1477
        %v1485 = vpack.c.b16 %v1480, %v1479
        %v1486 = vpack.c.b16 %v1482, %v1481
        %1491 = vmatprep.subr.bf16.mxu0 0
        %1492 = vmatpush1.bf16.msra.mxu0 %v1483
        %1493 = vmatprep.subr.bf16.mxu0 0
        %1494 = vmatpush1.bf16.msra.mxu0 %v1484
        %1495 = vmatprep.subr.bf16.mxu0 0
        %1496 = vmatpush1.bf16.msra.mxu0 %v1485
        %1497 = vmatprep.subr.bf16.mxu0 0
        %1498 = vmatpush1.bf16.msra.mxu0 %v1486
        %1499 = vmatprep.subr.bf16.mxu0 0
        %1500 = vmatpush1.bf16.msra.mxu0 0
        %1501 = vmatprep.subr.bf16.mxu0 0
        %1502 = vmatpush1.bf16.msra.mxu0 0
        %1503 = vmatprep.subr.bf16.mxu0 0
        %1504 = vmatpush1.bf16.msra.mxu0 0
        %1505 = vmatprep.subr.bf16.mxu0 0
        %1506 = vmatpush1.bf16.msra.mxu0 0
        %1507 = vmatprep.subr.bf16.mxu0 0
        %1508 = vmatpush1.bf16.msra.mxu0 0
        %1509 = vmatprep.subr.bf16.mxu0 0
        %1510 = vmatpush1.bf16.msra.mxu0 0
        %1511 = vmatprep.subr.bf16.mxu0 0
        %1512 = vmatpush1.bf16.msra.mxu0 0
        %1513 = vmatprep.subr.bf16.mxu0 0
        %1514 = vmatpush1.bf16.msra.mxu0 0
        %1515 = vmatprep.subr.bf16.mxu0 0
        %1516 = vmatpush1.bf16.msra.mxu0 0
        %1517 = vmatprep.subr.bf16.mxu0 0
        %1518 = vmatpush1.bf16.msra.mxu0 0
        %1519 = vmatprep.subr.bf16.mxu0 0
        %1520 = vmatpush1.bf16.msra.mxu0 0
        %1521 = vmatprep.subr.bf16.mxu0 0
        %1522 = vmatpush1.bf16.msra.mxu0 0
        %1523 = vmatprep.mubr.bf16.mxu0 0
        %1524 = vmatmul.mubr.bf16.gmra.mrb[0].mxu0 %v1329
        %v1525 = vpop.f32.mrb[0].mxu0
        %v1526 = vadd.f32 %v1465, %v1525
        %v1527 = vpop.f32.mrb[0].mxu0
        %v1528 = vpop.f32.mrb[0].mxu0
        %v1529 = vadd.f32 %v1465, %v1528
        %v1530 = vpop.f32.mrb[0].mxu0
        %1531 = vdwg.mxu0
        %v1532 = vpack.c.bf16 %v1369, %v1366
        %v1533 = vpack.c.bf16 %v1449, %v1446
        %vm1534 = vcmask 130048
        %v1536 = vsel %vm1534, %v1532, 0
        %v1539 = vsel %vm1534, %v1533, 0
        %1541 = vmatprep.subr.bf16.mxu0 0
        %1542 = vmatpush1.bf16.xpose.msra.mxu0 %v1539
        %1543 = vmatprep.subr.bf16.mxu0 0
        %1544 = vmatpush1.bf16.xpose.msra.mxu0 0
        %1545 = vmatprep.subr.bf16.mxu0 0
        %1546 = vmatpush1.bf16.xpose.msra.mxu0 0
        %1547 = vmatprep.subr.bf16.mxu0 0
        %1548 = vmatpush1.bf16.xpose.msra.mxu0 0
        %1549 = vmatprep.subr.bf16.mxu0 0
        %1550 = vmatpush1.bf16.xpose.msra.mxu0 0
        %1551 = vmatprep.subr.bf16.mxu0 0
        %1552 = vmatpush1.bf16.xpose.msra.mxu0 0
        %1553 = vmatprep.subr.bf16.mxu0 0
        %1554 = vmatpush1.bf16.xpose.msra.mxu0 0
        %1555 = vmatprep.subr.bf16.mxu0 0
        %1556 = vmatpush1.bf16.xpose.msra.mxu0 0
        %1557 = vmatprep.subr.bf16.mxu0 0
        %1558 = vmatpush1.bf16.xpose.msra.mxu0 0
        %1559 = vmatprep.subr.bf16.mxu0 0
        %1560 = vmatpush1.bf16.xpose.msra.mxu0 0
        %1561 = vmatprep.subr.bf16.mxu0 0
        %1562 = vmatpush1.bf16.xpose.msra.mxu0 0
        %1563 = vmatprep.subr.bf16.mxu0 0
        %1564 = vmatpush1.bf16.xpose.msra.mxu0 0
        %1565 = vmatprep.subr.bf16.mxu0 0
        %1566 = vmatpush1.bf16.xpose.msra.mxu0 0
        %1567 = vmatprep.subr.bf16.mxu0 0
        %1568 = vmatpush1.bf16.xpose.msra.mxu0 0
        %1569 = vmatprep.subr.bf16.mxu0 0
        %1570 = vmatpush1.bf16.xpose.msra.mxu0 0
        %1571 = vmatprep.subr.bf16.mxu0 0
        %1572 = vmatpush1.bf16.xpose.msra.mxu0 0
        %1573 = vmatprep.mubr.bf16.mxu0 0
        %1574 = vmatmul.mubr.bf16.gmra.mrb[0].mxu0 %v1536
        %v1575 = vpop.f32.mrb[0].mxu0
        %v1576 = vadd.f32 0.0, %v1575
        %v1577 = vpop.f32.mrb[0].mxu0
        %v1578 = vpop.f32.mrb[0].mxu0
        %v1579 = vadd.f32 0.0, %v1578
        %v1580 = vpop.f32.mrb[0].mxu0
        %1581 = vdwg.mxu0
        %v1582 = vmul.f32 %v1576, 0.25
        %v1583 = vmul.f32 %v1579, 0.25
        %v1584 = vadd.f32 %v1582, %v1287
        %v1585 = vadd.f32 %v1583, %v1288
        %vm1586 = vcmask 80896
        %v1587 = vsel %vm1586, %v1584, -inf
        %1588 = vmax.xlane.f32.xlu0 %v1587
        %v1589 = vpop.xlane.xlu0 %1588
        %vm1590 = vcmask 74752
        %v1591 = vsel %vm1590, %v1585, -inf
        %1592 = vmax.xlane.f32.xlu0 %v1591
        %v1593 = vpop.xlane.xlu0 %1592
        %v1594 = vsub.f32 %v1584, %v1589
        %v1595 = vsub.f32 %v1585, %v1593
        %v1596 = vmul.f32 %v1594, 1.442695
        %v1597 = vpow.pop %v1596
        %v1598 = vmul.f32 %v1595, 1.442695
        %v1599 = vpow.pop %v1598
        %v1600 = vsel %vm1586, %v1597, 0.0
        %1601 = vadd.xlane.f32.xlu0 %v1600
        %v1602 = vpop.xlane.xlu0 %1601
        %v1603 = vsel %vm1590, %v1599, 0.0
        %1604 = vadd.xlane.f32.xlu0 %v1603
        %v1605 = vpop.xlane.xlu0 %1604
        %v1606 = vrcp.pop %v1602
        %v1607 = vrcp.pop %v1605
        %v1608 = vmul.f32 %v1597, %v1606
        %v1609 = vmul.f32 %v1599, %v1607
        %v1610 = vpack.c.bf16 %v1609, %v1608
        %v1611 = vpack.c.bf16 %v1529, %v1526
        %v1613 = vsel %vm1586, %v1610, 0
        %vm1615 = vcmask 1044480
        %v1617 = vsel %vm1615, %v1611, 0
        %1619 = vmatprep.subr.bf16.mxu0 0
        %1620 = vmatpush1.bf16.msra.mxu0 %v1617
        %1621 = vmatprep.subr.bf16.mxu0 0
        %1622 = vmatpush1.bf16.msra.mxu0 0
        %1623 = vmatprep.subr.bf16.mxu0 0
        %1624 = vmatpush1.bf16.msra.mxu0 0
        %1625 = vmatprep.subr.bf16.mxu0 0
        %1626 = vmatpush1.bf16.msra.mxu0 0
        %1627 = vmatprep.subr.bf16.mxu0 0
        %1628 = vmatpush1.bf16.msra.mxu0 0
        %1629 = vmatprep.subr.bf16.mxu0 0
        %1630 = vmatpush1.bf16.msra.mxu0 0
        %1631 = vmatprep.subr.bf16.mxu0 0
        %1632 = vmatpush1.bf16.msra.mxu0 0
        %1633 = vmatprep.subr.bf16.mxu0 0
        %1634 = vmatpush1.bf16.msra.mxu0 0
        %1635 = vmatprep.subr.bf16.mxu0 0
        %1636 = vmatpush1.bf16.msra.mxu0 0
        %1637 = vmatprep.subr.bf16.mxu0 0
        %1638 = vmatpush1.bf16.msra.mxu0 0
        %1639 = vmatprep.subr.bf16.mxu0 0
        %1640 = vmatpush1.bf16.msra.mxu0 0
        %1641 = vmatprep.subr.bf16.mxu0 0
        %1642 = vmatpush1.bf16.msra.mxu0 0
        %1643 = vmatprep.subr.bf16.mxu0 0
        %1644 = vmatpush1.bf16.msra.mxu0 0
        %1645 = vmatprep.subr.bf16.mxu0 0
        %1646 = vmatpush1.bf16.msra.mxu0 0
        %1647 = vmatprep.subr.bf16.mxu0 0
        %1648 = vmatpush1.bf16.msra.mxu0 0
        %1649 = vmatprep.subr.bf16.mxu0 0
        %1650 = vmatpush1.bf16.msra.mxu0 0
        %1651 = vmatprep.mubr.bf16.mxu0 0
        %1652 = vmatmul.mubr.bf16.gmra.mrb[0].mxu0 %v1613
        %v1653 = vpop.f32.mrb[0].mxu0
        %v1654 = vadd.f32 0.0, %v1653
        %v1655 = vpop.f32.mrb[0].mxu0
        %v1656 = vpop.f32.mrb[0].mxu0
        %v1657 = vadd.f32 0.0, %v1656
        %v1658 = vpop.f32.mrb[0].mxu0
        %1659 = vdwg.mxu0
        %s1660 = scalar_lea.vmem %s976, 32
        %v1661 = vld [vmem:[%s1660] sm:$0xf]
        %v1662 = vld [vmem:[%s1660 + $0x4] sm:$0xf]
        %v1663 = vld [vmem:[%s1660 + $0x8] sm:$0xf]
        %v1664 = vld [vmem:[%s1660 + $0xc] sm:$0xf]
        %v1665 = vld [vmem:[%s1660 + $0x10] sm:$0xf]
        %v1666 = vld [vmem:[%s1660 + $0x14] sm:$0xf]
        %v1667 = vld [vmem:[%s1660 + $0x18] sm:$0xf]
        %v1668 = vld [vmem:[%s1660 + $0x1c] sm:$0xf]
        %s1669 = scalar_lea.vmem %s990, 1
        %v1670 = vld [vmem:[%s1669] sm:$0x1]
        %v1672 = vlaneseq
        %v1673 = vshrl.u32 %v1672, 7
        %v1674 = vsub.s32 0, %v1673
        %v1675 = vrot.slane %v1670, %v1674
        %v1685 = vunpack.c.l.b16 %v1661
        %v1686 = vunpack.c.l.b16 %v1662
        %v1687 = vunpack.c.l.b16 %v1663
        %v1688 = vunpack.c.l.b16 %v1664
        %v1689 = vunpack.c.l.b16 %v1665
        %v1690 = vunpack.c.l.b16 %v1666
        %v1691 = vunpack.c.l.b16 %v1667
        %v1692 = vunpack.c.l.b16 %v1668
        %v1693 = vpack.c.b16 %v1686, %v1685
        %v1694 = vpack.c.b16 %v1688, %v1687
        %v1695 = vpack.c.b16 %v1690, %v1689
        %v1696 = vpack.c.b16 %v1692, %v1691
        %1701 = vmatprep.subr.bf16.mxu0 0
        %1702 = vmatpush1.bf16.msra.mxu0 %v1693
        %1703 = vmatprep.subr.bf16.mxu0 0
        %1704 = vmatpush1.bf16.msra.mxu0 %v1694
        %1705 = vmatprep.subr.bf16.mxu0 0
        %1706 = vmatpush1.bf16.msra.mxu0 %v1695
        %1707 = vmatprep.subr.bf16.mxu0 0
        %1708 = vmatpush1.bf16.msra.mxu0 %v1696
        %1709 = vmatprep.subr.bf16.mxu0 0
        %1710 = vmatpush1.bf16.msra.mxu0 0
        %1711 = vmatprep.subr.bf16.mxu0 0
        %1712 = vmatpush1.bf16.msra.mxu0 0
        %1713 = vmatprep.subr.bf16.mxu0 0
        %1714 = vmatpush1.bf16.msra.mxu0 0
        %1715 = vmatprep.subr.bf16.mxu0 0
        %1716 = vmatpush1.bf16.msra.mxu0 0
        %1717 = vmatprep.subr.bf16.mxu0 0
        %1718 = vmatpush1.bf16.msra.mxu0 0
        %1719 = vmatprep.subr.bf16.mxu0 0
        %1720 = vmatpush1.bf16.msra.mxu0 0
        %1721 = vmatprep.subr.bf16.mxu0 0
        %1722 = vmatpush1.bf16.msra.mxu0 0
        %1723 = vmatprep.subr.bf16.mxu0 0
        %1724 = vmatpush1.bf16.msra.mxu0 0
        %1725 = vmatprep.subr.bf16.mxu0 0
        %1726 = vmatpush1.bf16.msra.mxu0 0
        %1727 = vmatprep.subr.bf16.mxu0 0
        %1728 = vmatpush1.bf16.msra.mxu0 0
        %1729 = vmatprep.subr.bf16.mxu0 0
        %1730 = vmatpush1.bf16.msra.mxu0 0
        %1731 = vmatprep.subr.bf16.mxu0 0
        %1732 = vmatpush1.bf16.msra.mxu0 0
        %1733 = vmatprep.mubr.bf16.mxu0 0
        %1734 = vmatmul.mubr.bf16.gmra.mrb[0].mxu0 %v1329
        %v1735 = vpop.f32.mrb[0].mxu0
        %v1736 = vadd.f32 %v1675, %v1735
        %v1737 = vpop.f32.mrb[0].mxu0
        %v1738 = vpop.f32.mrb[0].mxu0
        %v1739 = vadd.f32 %v1675, %v1738
        %v1740 = vpop.f32.mrb[0].mxu0
        %1741 = vdwg.mxu0
        %s1742 = scalar_lea.vmem %s981, 32
        %v1743 = vld [vmem:[%s1742] sm:$0xf]
        %v1744 = vld [vmem:[%s1742 + $0x4] sm:$0xf]
        %v1745 = vld [vmem:[%s1742 + $0x8] sm:$0xf]
        %v1746 = vld [vmem:[%s1742 + $0xc] sm:$0xf]
        %v1747 = vld [vmem:[%s1742 + $0x10] sm:$0xf]
        %v1748 = vld [vmem:[%s1742 + $0x14] sm:$0xf]
        %v1749 = vld [vmem:[%s1742 + $0x18] sm:$0xf]
        %v1750 = vld [vmem:[%s1742 + $0x1c] sm:$0xf]
        %s1751 = scalar_lea.vmem %s994, 1
        %v1752 = vld [vmem:[%s1751] sm:$0x1]
        %v1754 = vlaneseq
        %v1755 = vshrl.u32 %v1754, 7
        %v1756 = vsub.s32 0, %v1755
        %v1757 = vrot.slane %v1752, %v1756
        %v1767 = vunpack.c.l.b16 %v1743
        %v1768 = vunpack.c.l.b16 %v1744
        %v1769 = vunpack.c.l.b16 %v1745
        %v1770 = vunpack.c.l.b16 %v1746
        %v1771 = vunpack.c.l.b16 %v1747
        %v1772 = vunpack.c.l.b16 %v1748
        %v1773 = vunpack.c.l.b16 %v1749
        %v1774 = vunpack.c.l.b16 %v1750
        %v1775 = vpack.c.b16 %v1768, %v1767
        %v1776 = vpack.c.b16 %v1770, %v1769
        %v1777 = vpack.c.b16 %v1772, %v1771
        %v1778 = vpack.c.b16 %v1774, %v1773
        %1783 = vmatprep.subr.bf16.mxu0 0
        %1784 = vmatpush1.bf16.msra.mxu0 %v1775
        %1785 = vmatprep.subr.bf16.mxu0 0
        %1786 = vmatpush1.bf16.msra.mxu0 %v1776
        %1787 = vmatprep.subr.bf16.mxu0 0
        %1788 = vmatpush1.bf16.msra.mxu0 %v1777
        %1789 = vmatprep.subr.bf16.mxu0 0
        %1790 = vmatpush1.bf16.msra.mxu0 %v1778
        %1791 = vmatprep.subr.bf16.mxu0 0
        %1792 = vmatpush1.bf16.msra.mxu0 0
        %1793 = vmatprep.subr.bf16.mxu0 0
        %1794 = vmatpush1.bf16.msra.mxu0 0
        %1795 = vmatprep.subr.bf16.mxu0 0
        %1796 = vmatpush1.bf16.msra.mxu0 0
        %1797 = vmatprep.subr.bf16.mxu0 0
        %1798 = vmatpush1.bf16.msra.mxu0 0
        %1799 = vmatprep.subr.bf16.mxu0 0
        %1800 = vmatpush1.bf16.msra.mxu0 0
        %1801 = vmatprep.subr.bf16.mxu0 0
        %1802 = vmatpush1.bf16.msra.mxu0 0
        %1803 = vmatprep.subr.bf16.mxu0 0
        %1804 = vmatpush1.bf16.msra.mxu0 0
        %1805 = vmatprep.subr.bf16.mxu0 0
        %1806 = vmatpush1.bf16.msra.mxu0 0
        %1807 = vmatprep.subr.bf16.mxu0 0
        %1808 = vmatpush1.bf16.msra.mxu0 0
        %1809 = vmatprep.subr.bf16.mxu0 0
        %1810 = vmatpush1.bf16.msra.mxu0 0
        %1811 = vmatprep.subr.bf16.mxu0 0
        %1812 = vmatpush1.bf16.msra.mxu0 0
        %1813 = vmatprep.subr.bf16.mxu0 0
        %1814 = vmatpush1.bf16.msra.mxu0 0
        %1815 = vmatprep.mubr.bf16.mxu0 0
        %1816 = vmatmul.mubr.bf16.gmra.mrb[0].mxu0 %v1329
        %v1817 = vpop.f32.mrb[0].mxu0
        %v1818 = vadd.f32 %v1757, %v1817
        %v1819 = vpop.f32.mrb[0].mxu0
        %v1820 = vpop.f32.mrb[0].mxu0
        %v1821 = vadd.f32 %v1757, %v1820
        %v1822 = vpop.f32.mrb[0].mxu0
        %1823 = vdwg.mxu0
        %s1824 = scalar_lea.vmem %s986, 32
        %v1825 = vld [vmem:[%s1824] sm:$0xf]
        %v1826 = vld [vmem:[%s1824 + $0x4] sm:$0xf]
        %v1827 = vld [vmem:[%s1824 + $0x8] sm:$0xf]
        %v1828 = vld [vmem:[%s1824 + $0xc] sm:$0xf]
        %v1829 = vld [vmem:[%s1824 + $0x10] sm:$0xf]
        %v1830 = vld [vmem:[%s1824 + $0x14] sm:$0xf]
        %v1831 = vld [vmem:[%s1824 + $0x18] sm:$0xf]
        %v1832 = vld [vmem:[%s1824 + $0x1c] sm:$0xf]
        %s1833 = scalar_lea.vmem %s998, 1
        %v1834 = vld [vmem:[%s1833] sm:$0x1]
        %v1836 = vlaneseq
        %v1837 = vshrl.u32 %v1836, 7
        %v1838 = vsub.s32 0, %v1837
        %v1839 = vrot.slane %v1834, %v1838
        %v1849 = vunpack.c.l.b16 %v1825
        %v1850 = vunpack.c.l.b16 %v1826
        %v1851 = vunpack.c.l.b16 %v1827
        %v1852 = vunpack.c.l.b16 %v1828
        %v1853 = vunpack.c.l.b16 %v1829
        %v1854 = vunpack.c.l.b16 %v1830
        %v1855 = vunpack.c.l.b16 %v1831
        %v1856 = vunpack.c.l.b16 %v1832
        %v1857 = vpack.c.b16 %v1850, %v1849
        %v1858 = vpack.c.b16 %v1852, %v1851
        %v1859 = vpack.c.b16 %v1854, %v1853
        %v1860 = vpack.c.b16 %v1856, %v1855
        %1865 = vmatprep.subr.bf16.mxu0 0
        %1866 = vmatpush1.bf16.msra.mxu0 %v1857
        %1867 = vmatprep.subr.bf16.mxu0 0
        %1868 = vmatpush1.bf16.msra.mxu0 %v1858
        %1869 = vmatprep.subr.bf16.mxu0 0
        %1870 = vmatpush1.bf16.msra.mxu0 %v1859
        %1871 = vmatprep.subr.bf16.mxu0 0
        %1872 = vmatpush1.bf16.msra.mxu0 %v1860
        %1873 = vmatprep.subr.bf16.mxu0 0
        %1874 = vmatpush1.bf16.msra.mxu0 0
        %1875 = vmatprep.subr.bf16.mxu0 0
        %1876 = vmatpush1.bf16.msra.mxu0 0
        %1877 = vmatprep.subr.bf16.mxu0 0
        %1878 = vmatpush1.bf16.msra.mxu0 0
        %1879 = vmatprep.subr.bf16.mxu0 0
        %1880 = vmatpush1.bf16.msra.mxu0 0
        %1881 = vmatprep.subr.bf16.mxu0 0
        %1882 = vmatpush1.bf16.msra.mxu0 0
        %1883 = vmatprep.subr.bf16.mxu0 0
        %1884 = vmatpush1.bf16.msra.mxu0 0
        %1885 = vmatprep.subr.bf16.mxu0 0
        %1886 = vmatpush1.bf16.msra.mxu0 0
        %1887 = vmatprep.subr.bf16.mxu0 0
        %1888 = vmatpush1.bf16.msra.mxu0 0
        %1889 = vmatprep.subr.bf16.mxu0 0
        %1890 = vmatpush1.bf16.msra.mxu0 0
        %1891 = vmatprep.subr.bf16.mxu0 0
        %1892 = vmatpush1.bf16.msra.mxu0 0
        %1893 = vmatprep.subr.bf16.mxu0 0
        %1894 = vmatpush1.bf16.msra.mxu0 0
        %1895 = vmatprep.subr.bf16.mxu0 0
        %1896 = vmatpush1.bf16.msra.mxu0 0
        %1897 = vmatprep.mubr.bf16.mxu0 0
        %1898 = vmatmul.mubr.bf16.gmra.mrb[0].mxu0 %v1329
        %v1899 = vpop.f32.mrb[0].mxu0
        %v1900 = vadd.f32 %v1839, %v1899
        %v1901 = vpop.f32.mrb[0].mxu0
        %v1902 = vpop.f32.mrb[0].mxu0
        %v1903 = vadd.f32 %v1839, %v1902
        %v1904 = vpop.f32.mrb[0].mxu0
        %1905 = vdwg.mxu0
        %v1906 = vpack.c.bf16 %v1739, %v1736
        %v1907 = vpack.c.bf16 %v1821, %v1818
        %v1909 = vsel %vm1534, %v1906, 0
        %v1912 = vsel %vm1534, %v1907, 0
        %1914 = vmatprep.subr.bf16.mxu0 0
        %1915 = vmatpush1.bf16.xpose.msra.mxu0 %v1912
        %1916 = vmatprep.subr.bf16.mxu0 0
        %1917 = vmatpush1.bf16.xpose.msra.mxu0 0
        %1918 = vmatprep.subr.bf16.mxu0 0
        %1919 = vmatpush1.bf16.xpose.msra.mxu0 0
        %1920 = vmatprep.subr.bf16.mxu0 0
        %1921 = vmatpush1.bf16.xpose.msra.mxu0 0
        %1922 = vmatprep.subr.bf16.mxu0 0
        %1923 = vmatpush1.bf16.xpose.msra.mxu0 0
        %1924 = vmatprep.subr.bf16.mxu0 0
        %1925 = vmatpush1.bf16.xpose.msra.mxu0 0
        %1926 = vmatprep.subr.bf16.mxu0 0
        %1927 = vmatpush1.bf16.xpose.msra.mxu0 0
        %1928 = vmatprep.subr.bf16.mxu0 0
        %1929 = vmatpush1.bf16.xpose.msra.mxu0 0
        %1930 = vmatprep.subr.bf16.mxu0 0
        %1931 = vmatpush1.bf16.xpose.msra.mxu0 0
        %1932 = vmatprep.subr.bf16.mxu0 0
        %1933 = vmatpush1.bf16.xpose.msra.mxu0 0
        %1934 = vmatprep.subr.bf16.mxu0 0
        %1935 = vmatpush1.bf16.xpose.msra.mxu0 0
        %1936 = vmatprep.subr.bf16.mxu0 0
        %1937 = vmatpush1.bf16.xpose.msra.mxu0 0
        %1938 = vmatprep.subr.bf16.mxu0 0
        %1939 = vmatpush1.bf16.xpose.msra.mxu0 0
        %1940 = vmatprep.subr.bf16.mxu0 0
        %1941 = vmatpush1.bf16.xpose.msra.mxu0 0
        %1942 = vmatprep.subr.bf16.mxu0 0
        %1943 = vmatpush1.bf16.xpose.msra.mxu0 0
        %1944 = vmatprep.subr.bf16.mxu0 0
        %1945 = vmatpush1.bf16.xpose.msra.mxu0 0
        %1946 = vmatprep.mubr.bf16.mxu0 0
        %1947 = vmatmul.mubr.bf16.gmra.mrb[0].mxu0 %v1909
        %v1948 = vpop.f32.mrb[0].mxu0
        %v1949 = vadd.f32 0.0, %v1948
        %v1950 = vpop.f32.mrb[0].mxu0
        %v1951 = vpop.f32.mrb[0].mxu0
        %v1952 = vadd.f32 0.0, %v1951
        %v1953 = vpop.f32.mrb[0].mxu0
        %1954 = vdwg.mxu0
        %v1955 = vmul.f32 %v1949, 0.25
        %v1956 = vmul.f32 %v1952, 0.25
        %v1957 = vadd.f32 %v1955, %v1287
        %v1958 = vadd.f32 %v1956, %v1288
        %v1959 = vsel %vm1586, %v1957, -inf
        %1960 = vmax.xlane.f32.xlu0 %v1959
        %v1961 = vpop.xlane.xlu0 %1960
        %v1962 = vsel %vm1590, %v1958, -inf
        %1963 = vmax.xlane.f32.xlu0 %v1962
        %v1964 = vpop.xlane.xlu0 %1963
        %v1965 = vsub.f32 %v1957, %v1961
        %v1966 = vsub.f32 %v1958, %v1964
        %v1967 = vmul.f32 %v1965, 1.442695
        %v1968 = vpow.pop %v1967
        %v1969 = vmul.f32 %v1966, 1.442695
        %v1970 = vpow.pop %v1969
        %v1971 = vsel %vm1586, %v1968, 0.0
        %1972 = vadd.xlane.f32.xlu0 %v1971
        %v1973 = vpop.xlane.xlu0 %1972
        %v1974 = vsel %vm1590, %v1970, 0.0
        %1975 = vadd.xlane.f32.xlu0 %v1974
        %v1976 = vpop.xlane.xlu0 %1975
        %v1977 = vrcp.pop %v1973
        %v1978 = vrcp.pop %v1976
        %v1979 = vmul.f32 %v1968, %v1977
        %v1980 = vmul.f32 %v1970, %v1978
        %v1981 = vpack.c.bf16 %v1980, %v1979
        %v1982 = vpack.c.bf16 %v1903, %v1900
        %v1984 = vsel %vm1586, %v1981, 0
        %v1987 = vsel %vm1615, %v1982, 0
        %1989 = vmatprep.subr.bf16.mxu0 0
        %1990 = vmatpush1.bf16.msra.mxu0 %v1987
        %1991 = vmatprep.subr.bf16.mxu0 0
        %1992 = vmatpush1.bf16.msra.mxu0 0
        %1993 = vmatprep.subr.bf16.mxu0 0
        %1994 = vmatpush1.bf16.msra.mxu0 0
        %1995 = vmatprep.subr.bf16.mxu0 0
        %1996 = vmatpush1.bf16.msra.mxu0 0
        %1997 = vmatprep.subr.bf16.mxu0 0
        %1998 = vmatpush1.bf16.msra.mxu0 0
        %1999 = vmatprep.subr.bf16.mxu0 0
        %2000 = vmatpush1.bf16.msra.mxu0 0
        %2001 = vmatprep.subr.bf16.mxu0 0
        %2002 = vmatpush1.bf16.msra.mxu0 0
        %2003 = vmatprep.subr.bf16.mxu0 0
        %2004 = vmatpush1.bf16.msra.mxu0 0
        %2005 = vmatprep.subr.bf16.mxu0 0
        %2006 = vmatpush1.bf16.msra.mxu0 0
        %2007 = vmatprep.subr.bf16.mxu0 0
        %2008 = vmatpush1.bf16.msra.mxu0 0
        %2009 = vmatprep.subr.bf16.mxu0 0
        %2010 = vmatpush1.bf16.msra.mxu0 0
        %2011 = vmatprep.subr.bf16.mxu0 0
        %2012 = vmatpush1.bf16.msra.mxu0 0
        %2013 = vmatprep.subr.bf16.mxu0 0
        %2014 = vmatpush1.bf16.msra.mxu0 0
        %2015 = vmatprep.subr.bf16.mxu0 0
        %2016 = vmatpush1.bf16.msra.mxu0 0
        %2017 = vmatprep.subr.bf16.mxu0 0
        %2018 = vmatpush1.bf16.msra.mxu0 0
        %2019 = vmatprep.subr.bf16.mxu0 0
        %2020 = vmatpush1.bf16.msra.mxu0 0
        %2021 = vmatprep.mubr.bf16.mxu0 0
        %2022 = vmatmul.mubr.bf16.gmra.mrb[0].mxu0 %v1984
        %v2023 = vpop.f32.mrb[0].mxu0
        %v2024 = vadd.f32 0.0, %v2023
        %v2025 = vpop.f32.mrb[0].mxu0
        %v2026 = vpop.f32.mrb[0].mxu0
        %v2027 = vadd.f32 0.0, %v2026
        %v2028 = vpop.f32.mrb[0].mxu0
        %2029 = vdwg.mxu0
        %s2030 = scalar_lea.vmem %s976, 64
        %v2031 = vld [vmem:[%s2030] sm:$0xf]
        %v2032 = vld [vmem:[%s2030 + $0x4] sm:$0xf]
        %v2033 = vld [vmem:[%s2030 + $0x8] sm:$0xf]
        %v2034 = vld [vmem:[%s2030 + $0xc] sm:$0xf]
        %v2035 = vld [vmem:[%s2030 + $0x10] sm:$0xf]
        %v2036 = vld [vmem:[%s2030 + $0x14] sm:$0xf]
        %v2037 = vld [vmem:[%s2030 + $0x18] sm:$0xf]
        %v2038 = vld [vmem:[%s2030 + $0x1c] sm:$0xf]
        %s2039 = scalar_lea.vmem %s990, 2
        %v2040 = vld [vmem:[%s2039] sm:$0x1]
        %v2042 = vlaneseq
        %v2043 = vshrl.u32 %v2042, 7
        %v2044 = vsub.s32 0, %v2043
        %v2045 = vrot.slane %v2040, %v2044
        %v2055 = vunpack.c.l.b16 %v2031
        %v2056 = vunpack.c.l.b16 %v2032
        %v2057 = vunpack.c.l.b16 %v2033
        %v2058 = vunpack.c.l.b16 %v2034
        %v2059 = vunpack.c.l.b16 %v2035
        %v2060 = vunpack.c.l.b16 %v2036
        %v2061 = vunpack.c.l.b16 %v2037
        %v2062 = vunpack.c.l.b16 %v2038
        %v2063 = vpack.c.b16 %v2056, %v2055
        %v2064 = vpack.c.b16 %v2058, %v2057
        %v2065 = vpack.c.b16 %v2060, %v2059
        %v2066 = vpack.c.b16 %v2062, %v2061
        %2071 = vmatprep.subr.bf16.mxu0 0
        %2072 = vmatpush1.bf16.msra.mxu0 %v2063
        %2073 = vmatprep.subr.bf16.mxu0 0
        %2074 = vmatpush1.bf16.msra.mxu0 %v2064
        %2075 = vmatprep.subr.bf16.mxu0 0
        %2076 = vmatpush1.bf16.msra.mxu0 %v2065
        %2077 = vmatprep.subr.bf16.mxu0 0
        %2078 = vmatpush1.bf16.msra.mxu0 %v2066
        %2079 = vmatprep.subr.bf16.mxu0 0
        %2080 = vmatpush1.bf16.msra.mxu0 0
        %2081 = vmatprep.subr.bf16.mxu0 0
        %2082 = vmatpush1.bf16.msra.mxu0 0
        %2083 = vmatprep.subr.bf16.mxu0 0
        %2084 = vmatpush1.bf16.msra.mxu0 0
        %2085 = vmatprep.subr.bf16.mxu0 0
        %2086 = vmatpush1.bf16.msra.mxu0 0
        %2087 = vmatprep.subr.bf16.mxu0 0
        %2088 = vmatpush1.bf16.msra.mxu0 0
        %2089 = vmatprep.subr.bf16.mxu0 0
        %2090 = vmatpush1.bf16.msra.mxu0 0
        %2091 = vmatprep.subr.bf16.mxu0 0
        %2092 = vmatpush1.bf16.msra.mxu0 0
        %2093 = vmatprep.subr.bf16.mxu0 0
        %2094 = vmatpush1.bf16.msra.mxu0 0
        %2095 = vmatprep.subr.bf16.mxu0 0
        %2096 = vmatpush1.bf16.msra.mxu0 0
        %2097 = vmatprep.subr.bf16.mxu0 0
        %2098 = vmatpush1.bf16.msra.mxu0 0
        %2099 = vmatprep.subr.bf16.mxu0 0
        %2100 = vmatpush1.bf16.msra.mxu0 0
        %2101 = vmatprep.subr.bf16.mxu0 0
        %2102 = vmatpush1.bf16.msra.mxu0 0
        %2103 = vmatprep.mubr.bf16.mxu0 0
        %2104 = vmatmul.mubr.bf16.gmra.mrb[0].mxu0 %v1329
        %v2105 = vpop.f32.mrb[0].mxu0
        %v2106 = vadd.f32 %v2045, %v2105
        %v2107 = vpop.f32.mrb[0].mxu0
        %v2108 = vpop.f32.mrb[0].mxu0
        %v2109 = vadd.f32 %v2045, %v2108
        %v2110 = vpop.f32.mrb[0].mxu0
        %2111 = vdwg.mxu0
        %s2112 = scalar_lea.vmem %s981, 64
        %v2113 = vld [vmem:[%s2112] sm:$0xf]
        %v2114 = vld [vmem:[%s2112 + $0x4] sm:$0xf]
        %v2115 = vld [vmem:[%s2112 + $0x8] sm:$0xf]
        %v2116 = vld [vmem:[%s2112 + $0xc] sm:$0xf]
        %v2117 = vld [vmem:[%s2112 + $0x10] sm:$0xf]
        %v2118 = vld [vmem:[%s2112 + $0x14] sm:$0xf]
        %v2119 = vld [vmem:[%s2112 + $0x18] sm:$0xf]
        %v2120 = vld [vmem:[%s2112 + $0x1c] sm:$0xf]
        %s2121 = scalar_lea.vmem %s994, 2
        %v2122 = vld [vmem:[%s2121] sm:$0x1]
        %v2124 = vlaneseq
        %v2125 = vshrl.u32 %v2124, 7
        %v2126 = vsub.s32 0, %v2125
        %v2127 = vrot.slane %v2122, %v2126
        %v2137 = vunpack.c.l.b16 %v2113
        %v2138 = vunpack.c.l.b16 %v2114
        %v2139 = vunpack.c.l.b16 %v2115
        %v2140 = vunpack.c.l.b16 %v2116
        %v2141 = vunpack.c.l.b16 %v2117
        %v2142 = vunpack.c.l.b16 %v2118
        %v2143 = vunpack.c.l.b16 %v2119
        %v2144 = vunpack.c.l.b16 %v2120
        %v2145 = vpack.c.b16 %v2138, %v2137
        %v2146 = vpack.c.b16 %v2140, %v2139
        %v2147 = vpack.c.b16 %v2142, %v2141
        %v2148 = vpack.c.b16 %v2144, %v2143
        %2153 = vmatprep.subr.bf16.mxu0 0
        %2154 = vmatpush1.bf16.msra.mxu0 %v2145
        %2155 = vmatprep.subr.bf16.mxu0 0
        %2156 = vmatpush1.bf16.msra.mxu0 %v2146
        %2157 = vmatprep.subr.bf16.mxu0 0
        %2158 = vmatpush1.bf16.msra.mxu0 %v2147
        %2159 = vmatprep.subr.bf16.mxu0 0
        %2160 = vmatpush1.bf16.msra.mxu0 %v2148
        %2161 = vmatprep.subr.bf16.mxu0 0
        %2162 = vmatpush1.bf16.msra.mxu0 0
        %2163 = vmatprep.subr.bf16.mxu0 0
        %2164 = vmatpush1.bf16.msra.mxu0 0
        %2165 = vmatprep.subr.bf16.mxu0 0
        %2166 = vmatpush1.bf16.msra.mxu0 0
        %2167 = vmatprep.subr.bf16.mxu0 0
        %2168 = vmatpush1.bf16.msra.mxu0 0
        %2169 = vmatprep.subr.bf16.mxu0 0
        %2170 = vmatpush1.bf16.msra.mxu0 0
        %2171 = vmatprep.subr.bf16.mxu0 0
        %2172 = vmatpush1.bf16.msra.mxu0 0
        %2173 = vmatprep.subr.bf16.mxu0 0
        %2174 = vmatpush1.bf16.msra.mxu0 0
        %2175 = vmatprep.subr.bf16.mxu0 0
        %2176 = vmatpush1.bf16.msra.mxu0 0
        %2177 = vmatprep.subr.bf16.mxu0 0
        %2178 = vmatpush1.bf16.msra.mxu0 0
        %2179 = vmatprep.subr.bf16.mxu0 0
        %2180 = vmatpush1.bf16.msra.mxu0 0
        %2181 = vmatprep.subr.bf16.mxu0 0
        %2182 = vmatpush1.bf16.msra.mxu0 0
        %2183 = vmatprep.subr.bf16.mxu0 0
        %2184 = vmatpush1.bf16.msra.mxu0 0
        %2185 = vmatprep.mubr.bf16.mxu0 0
        %2186 = vmatmul.mubr.bf16.gmra.mrb[0].mxu0 %v1329
        %v2187 = vpop.f32.mrb[0].mxu0
        %v2188 = vadd.f32 %v2127, %v2187
        %v2189 = vpop.f32.mrb[0].mxu0
        %v2190 = vpop.f32.mrb[0].mxu0
        %v2191 = vadd.f32 %v2127, %v2190
        %v2192 = vpop.f32.mrb[0].mxu0
        %2193 = vdwg.mxu0
        %s2194 = scalar_lea.vmem %s986, 64
        %v2195 = vld [vmem:[%s2194] sm:$0xf]
        %v2196 = vld [vmem:[%s2194 + $0x4] sm:$0xf]
        %v2197 = vld [vmem:[%s2194 + $0x8] sm:$0xf]
        %v2198 = vld [vmem:[%s2194 + $0xc] sm:$0xf]
        %v2199 = vld [vmem:[%s2194 + $0x10] sm:$0xf]
        %v2200 = vld [vmem:[%s2194 + $0x14] sm:$0xf]
        %v2201 = vld [vmem:[%s2194 + $0x18] sm:$0xf]
        %v2202 = vld [vmem:[%s2194 + $0x1c] sm:$0xf]
        %s2203 = scalar_lea.vmem %s998, 2
        %v2204 = vld [vmem:[%s2203] sm:$0x1]
        %v2206 = vlaneseq
        %v2207 = vshrl.u32 %v2206, 7
        %v2208 = vsub.s32 0, %v2207
        %v2209 = vrot.slane %v2204, %v2208
        %v2219 = vunpack.c.l.b16 %v2195
        %v2220 = vunpack.c.l.b16 %v2196
        %v2221 = vunpack.c.l.b16 %v2197
        %v2222 = vunpack.c.l.b16 %v2198
        %v2223 = vunpack.c.l.b16 %v2199
        %v2224 = vunpack.c.l.b16 %v2200
        %v2225 = vunpack.c.l.b16 %v2201
        %v2226 = vunpack.c.l.b16 %v2202
        %v2227 = vpack.c.b16 %v2220, %v2219
        %v2228 = vpack.c.b16 %v2222, %v2221
        %v2229 = vpack.c.b16 %v2224, %v2223
        %v2230 = vpack.c.b16 %v2226, %v2225
        %2235 = vmatprep.subr.bf16.mxu0 0
        %2236 = vmatpush1.bf16.msra.mxu0 %v2227
        %2237 = vmatprep.subr.bf16.mxu0 0
        %2238 = vmatpush1.bf16.msra.mxu0 %v2228
        %2239 = vmatprep.subr.bf16.mxu0 0
        %2240 = vmatpush1.bf16.msra.mxu0 %v2229
        %2241 = vmatprep.subr.bf16.mxu0 0
        %2242 = vmatpush1.bf16.msra.mxu0 %v2230
        %2243 = vmatprep.subr.bf16.mxu0 0
        %2244 = vmatpush1.bf16.msra.mxu0 0
        %2245 = vmatprep.subr.bf16.mxu0 0
        %2246 = vmatpush1.bf16.msra.mxu0 0
        %2247 = vmatprep.subr.bf16.mxu0 0
        %2248 = vmatpush1.bf16.msra.mxu0 0
        %2249 = vmatprep.subr.bf16.mxu0 0
        %2250 = vmatpush1.bf16.msra.mxu0 0
        %2251 = vmatprep.subr.bf16.mxu0 0
        %2252 = vmatpush1.bf16.msra.mxu0 0
        %2253 = vmatprep.subr.bf16.mxu0 0
        %2254 = vmatpush1.bf16.msra.mxu0 0
        %2255 = vmatprep.subr.bf16.mxu0 0
        %2256 = vmatpush1.bf16.msra.mxu0 0
        %2257 = vmatprep.subr.bf16.mxu0 0
        %2258 = vmatpush1.bf16.msra.mxu0 0
        %2259 = vmatprep.subr.bf16.mxu0 0
        %2260 = vmatpush1.bf16.msra.mxu0 0
        %2261 = vmatprep.subr.bf16.mxu0 0
        %2262 = vmatpush1.bf16.msra.mxu0 0
        %2263 = vmatprep.subr.bf16.mxu0 0
        %2264 = vmatpush1.bf16.msra.mxu0 0
        %2265 = vmatprep.subr.bf16.mxu0 0
        %2266 = vmatpush1.bf16.msra.mxu0 0
        %2267 = vmatprep.mubr.bf16.mxu0 0
        %2268 = vmatmul.mubr.bf16.gmra.mrb[0].mxu0 %v1329
        %v2269 = vpop.f32.mrb[0].mxu0
        %v2270 = vadd.f32 %v2209, %v2269
        %v2271 = vpop.f32.mrb[0].mxu0
        %v2272 = vpop.f32.mrb[0].mxu0
        %v2273 = vadd.f32 %v2209, %v2272
        %v2274 = vpop.f32.mrb[0].mxu0
        %2275 = vdwg.mxu0
        %v2276 = vpack.c.bf16 %v2109, %v2106
        %v2277 = vpack.c.bf16 %v2191, %v2188
        %v2279 = vsel %vm1534, %v2276, 0
        %v2282 = vsel %vm1534, %v2277, 0
        %2284 = vmatprep.subr.bf16.mxu0 0
        %2285 = vmatpush1.bf16.xpose.msra.mxu0 %v2282
        %2286 = vmatprep.subr.bf16.mxu0 0
        %2287 = vmatpush1.bf16.xpose.msra.mxu0 0
        %2288 = vmatprep.subr.bf16.mxu0 0
        %2289 = vmatpush1.bf16.xpose.msra.mxu0 0
        %2290 = vmatprep.subr.bf16.mxu0 0
        %2291 = vmatpush1.bf16.xpose.msra.mxu0 0
        %2292 = vmatprep.subr.bf16.mxu0 0
        %2293 = vmatpush1.bf16.xpose.msra.mxu0 0
        %2294 = vmatprep.subr.bf16.mxu0 0
        %2295 = vmatpush1.bf16.xpose.msra.mxu0 0
        %2296 = vmatprep.subr.bf16.mxu0 0
        %2297 = vmatpush1.bf16.xpose.msra.mxu0 0
        %2298 = vmatprep.subr.bf16.mxu0 0
        %2299 = vmatpush1.bf16.xpose.msra.mxu0 0
        %2300 = vmatprep.subr.bf16.mxu0 0
        %2301 = vmatpush1.bf16.xpose.msra.mxu0 0
        %2302 = vmatprep.subr.bf16.mxu0 0
        %2303 = vmatpush1.bf16.xpose.msra.mxu0 0
        %2304 = vmatprep.subr.bf16.mxu0 0
        %2305 = vmatpush1.bf16.xpose.msra.mxu0 0
        %2306 = vmatprep.subr.bf16.mxu0 0
        %2307 = vmatpush1.bf16.xpose.msra.mxu0 0
        %2308 = vmatprep.subr.bf16.mxu0 0
        %2309 = vmatpush1.bf16.xpose.msra.mxu0 0
        %2310 = vmatprep.subr.bf16.mxu0 0
        %2311 = vmatpush1.bf16.xpose.msra.mxu0 0
        %2312 = vmatprep.subr.bf16.mxu0 0
        %2313 = vmatpush1.bf16.xpose.msra.mxu0 0
        %2314 = vmatprep.subr.bf16.mxu0 0
        %2315 = vmatpush1.bf16.xpose.msra.mxu0 0
        %2316 = vmatprep.mubr.bf16.mxu0 0
        %2317 = vmatmul.mubr.bf16.gmra.mrb[0].mxu0 %v2279
        %v2318 = vpop.f32.mrb[0].mxu0
        %v2319 = vadd.f32 0.0, %v2318
        %v2320 = vpop.f32.mrb[0].mxu0
        %v2321 = vpop.f32.mrb[0].mxu0
        %v2322 = vadd.f32 0.0, %v2321
        %v2323 = vpop.f32.mrb[0].mxu0
        %2324 = vdwg.mxu0
        %v2325 = vmul.f32 %v2319, 0.25
        %v2326 = vmul.f32 %v2322, 0.25
        %v2327 = vadd.f32 %v2325, %v1287
        %v2328 = vadd.f32 %v2326, %v1288
        %v2329 = vsel %vm1586, %v2327, -inf
        %2330 = vmax.xlane.f32.xlu0 %v2329
        %v2331 = vpop.xlane.xlu0 %2330
        %v2332 = vsel %vm1590, %v2328, -inf
        %2333 = vmax.xlane.f32.xlu0 %v2332
        %v2334 = vpop.xlane.xlu0 %2333
        %v2335 = vsub.f32 %v2327, %v2331
        %v2336 = vsub.f32 %v2328, %v2334
        %v2337 = vmul.f32 %v2335, 1.442695
        %v2338 = vpow.pop %v2337
        %v2339 = vmul.f32 %v2336, 1.442695
        %v2340 = vpow.pop %v2339
        %v2341 = vsel %vm1586, %v2338, 0.0
        %2342 = vadd.xlane.f32.xlu0 %v2341
        %v2343 = vpop.xlane.xlu0 %2342
        %v2344 = vsel %vm1590, %v2340, 0.0
        %2345 = vadd.xlane.f32.xlu0 %v2344
        %v2346 = vpop.xlane.xlu0 %2345
        %v2347 = vrcp.pop %v2343
        %v2348 = vrcp.pop %v2346
        %v2349 = vmul.f32 %v2338, %v2347
        %v2350 = vmul.f32 %v2340, %v2348
        %v2351 = vpack.c.bf16 %v2350, %v2349
        %v2352 = vpack.c.bf16 %v2273, %v2270
        %v2354 = vsel %vm1586, %v2351, 0
        %v2357 = vsel %vm1615, %v2352, 0
        %2359 = vmatprep.subr.bf16.mxu0 0
        %2360 = vmatpush1.bf16.msra.mxu0 %v2357
        %2361 = vmatprep.subr.bf16.mxu0 0
        %2362 = vmatpush1.bf16.msra.mxu0 0
        %2363 = vmatprep.subr.bf16.mxu0 0
        %2364 = vmatpush1.bf16.msra.mxu0 0
        %2365 = vmatprep.subr.bf16.mxu0 0
        %2366 = vmatpush1.bf16.msra.mxu0 0
        %2367 = vmatprep.subr.bf16.mxu0 0
        %2368 = vmatpush1.bf16.msra.mxu0 0
        %2369 = vmatprep.subr.bf16.mxu0 0
        %2370 = vmatpush1.bf16.msra.mxu0 0
        %2371 = vmatprep.subr.bf16.mxu0 0
        %2372 = vmatpush1.bf16.msra.mxu0 0
        %2373 = vmatprep.subr.bf16.mxu0 0
        %2374 = vmatpush1.bf16.msra.mxu0 0
        %2375 = vmatprep.subr.bf16.mxu0 0
        %2376 = vmatpush1.bf16.msra.mxu0 0
        %2377 = vmatprep.subr.bf16.mxu0 0
        %2378 = vmatpush1.bf16.msra.mxu0 0
        %2379 = vmatprep.subr.bf16.mxu0 0
        %2380 = vmatpush1.bf16.msra.mxu0 0
        %2381 = vmatprep.subr.bf16.mxu0 0
        %2382 = vmatpush1.bf16.msra.mxu0 0
        %2383 = vmatprep.subr.bf16.mxu0 0
        %2384 = vmatpush1.bf16.msra.mxu0 0
        %2385 = vmatprep.subr.bf16.mxu0 0
        %2386 = vmatpush1.bf16.msra.mxu0 0
        %2387 = vmatprep.subr.bf16.mxu0 0
        %2388 = vmatpush1.bf16.msra.mxu0 0
        %2389 = vmatprep.subr.bf16.mxu0 0
        %2390 = vmatpush1.bf16.msra.mxu0 0
        %2391 = vmatprep.mubr.bf16.mxu0 0
        %2392 = vmatmul.mubr.bf16.gmra.mrb[0].mxu0 %v2354
        %v2393 = vpop.f32.mrb[0].mxu0
        %v2394 = vadd.f32 0.0, %v2393
        %v2395 = vpop.f32.mrb[0].mxu0
        %v2396 = vpop.f32.mrb[0].mxu0
        %v2397 = vadd.f32 0.0, %v2396
        %v2398 = vpop.f32.mrb[0].mxu0
        %2399 = vdwg.mxu0
        %s2400 = scalar_lea.vmem %s976, 96
        %v2401 = vld [vmem:[%s2400] sm:$0xf]
        %v2402 = vld [vmem:[%s2400 + $0x4] sm:$0xf]
        %v2403 = vld [vmem:[%s2400 + $0x8] sm:$0xf]
        %v2404 = vld [vmem:[%s2400 + $0xc] sm:$0xf]
        %v2405 = vld [vmem:[%s2400 + $0x10] sm:$0xf]
        %v2406 = vld [vmem:[%s2400 + $0x14] sm:$0xf]
        %v2407 = vld [vmem:[%s2400 + $0x18] sm:$0xf]
        %v2408 = vld [vmem:[%s2400 + $0x1c] sm:$0xf]
        %s2409 = scalar_lea.vmem %s990, 3
        %v2410 = vld [vmem:[%s2409] sm:$0x1]
        %v2412 = vlaneseq
        %v2413 = vshrl.u32 %v2412, 7
        %v2414 = vsub.s32 0, %v2413
        %v2415 = vrot.slane %v2410, %v2414
        %v2425 = vunpack.c.l.b16 %v2401
        %v2426 = vunpack.c.l.b16 %v2402
        %v2427 = vunpack.c.l.b16 %v2403
        %v2428 = vunpack.c.l.b16 %v2404
        %v2429 = vunpack.c.l.b16 %v2405
        %v2430 = vunpack.c.l.b16 %v2406
        %v2431 = vunpack.c.l.b16 %v2407
        %v2432 = vunpack.c.l.b16 %v2408
        %v2433 = vpack.c.b16 %v2426, %v2425
        %v2434 = vpack.c.b16 %v2428, %v2427
        %v2435 = vpack.c.b16 %v2430, %v2429
        %v2436 = vpack.c.b16 %v2432, %v2431
        %2441 = vmatprep.subr.bf16.mxu0 0
        %2442 = vmatpush1.bf16.msra.mxu0 %v2433
        %2443 = vmatprep.subr.bf16.mxu0 0
        %2444 = vmatpush1.bf16.msra.mxu0 %v2434
        %2445 = vmatprep.subr.bf16.mxu0 0
        %2446 = vmatpush1.bf16.msra.mxu0 %v2435
        %2447 = vmatprep.subr.bf16.mxu0 0
        %2448 = vmatpush1.bf16.msra.mxu0 %v2436
        %2449 = vmatprep.subr.bf16.mxu0 0
        %2450 = vmatpush1.bf16.msra.mxu0 0
        %2451 = vmatprep.subr.bf16.mxu0 0
        %2452 = vmatpush1.bf16.msra.mxu0 0
        %2453 = vmatprep.subr.bf16.mxu0 0
        %2454 = vmatpush1.bf16.msra.mxu0 0
        %2455 = vmatprep.subr.bf16.mxu0 0
        %2456 = vmatpush1.bf16.msra.mxu0 0
        %2457 = vmatprep.subr.bf16.mxu0 0
        %2458 = vmatpush1.bf16.msra.mxu0 0
        %2459 = vmatprep.subr.bf16.mxu0 0
        %2460 = vmatpush1.bf16.msra.mxu0 0
        %2461 = vmatprep.subr.bf16.mxu0 0
        %2462 = vmatpush1.bf16.msra.mxu0 0
        %2463 = vmatprep.subr.bf16.mxu0 0
        %2464 = vmatpush1.bf16.msra.mxu0 0
        %2465 = vmatprep.subr.bf16.mxu0 0
        %2466 = vmatpush1.bf16.msra.mxu0 0
        %2467 = vmatprep.subr.bf16.mxu0 0
        %2468 = vmatpush1.bf16.msra.mxu0 0
        %2469 = vmatprep.subr.bf16.mxu0 0
        %2470 = vmatpush1.bf16.msra.mxu0 0
        %2471 = vmatprep.subr.bf16.mxu0 0
        %2472 = vmatpush1.bf16.msra.mxu0 0
        %2473 = vmatprep.mubr.bf16.mxu0 0
        %2474 = vmatmul.mubr.bf16.gmra.mrb[0].mxu0 %v1329
        %v2475 = vpop.f32.mrb[0].mxu0
        %v2476 = vadd.f32 %v2415, %v2475
        %v2477 = vpop.f32.mrb[0].mxu0
        %v2478 = vpop.f32.mrb[0].mxu0
        %v2479 = vadd.f32 %v2415, %v2478
        %v2480 = vpop.f32.mrb[0].mxu0
        %2481 = vdwg.mxu0
        %s2482 = scalar_lea.vmem %s981, 96
        %v2483 = vld [vmem:[%s2482] sm:$0xf]
        %v2484 = vld [vmem:[%s2482 + $0x4] sm:$0xf]
        %v2485 = vld [vmem:[%s2482 + $0x8] sm:$0xf]
        %v2486 = vld [vmem:[%s2482 + $0xc] sm:$0xf]
        %v2487 = vld [vmem:[%s2482 + $0x10] sm:$0xf]
        %v2488 = vld [vmem:[%s2482 + $0x14] sm:$0xf]
        %v2489 = vld [vmem:[%s2482 + $0x18] sm:$0xf]
        %v2490 = vld [vmem:[%s2482 + $0x1c] sm:$0xf]
        %s2491 = scalar_lea.vmem %s994, 3
        %v2492 = vld [vmem:[%s2491] sm:$0x1]
        %v2494 = vlaneseq
        %v2495 = vshrl.u32 %v2494, 7
        %v2496 = vsub.s32 0, %v2495
        %v2497 = vrot.slane %v2492, %v2496
        %v2507 = vunpack.c.l.b16 %v2483
        %v2508 = vunpack.c.l.b16 %v2484
        %v2509 = vunpack.c.l.b16 %v2485
        %v2510 = vunpack.c.l.b16 %v2486
        %v2511 = vunpack.c.l.b16 %v2487
        %v2512 = vunpack.c.l.b16 %v2488
        %v2513 = vunpack.c.l.b16 %v2489
        %v2514 = vunpack.c.l.b16 %v2490
        %v2515 = vpack.c.b16 %v2508, %v2507
        %v2516 = vpack.c.b16 %v2510, %v2509
        %v2517 = vpack.c.b16 %v2512, %v2511
        %v2518 = vpack.c.b16 %v2514, %v2513
        %2523 = vmatprep.subr.bf16.mxu0 0
        %2524 = vmatpush1.bf16.msra.mxu0 %v2515
        %2525 = vmatprep.subr.bf16.mxu0 0
        %2526 = vmatpush1.bf16.msra.mxu0 %v2516
        %2527 = vmatprep.subr.bf16.mxu0 0
        %2528 = vmatpush1.bf16.msra.mxu0 %v2517
        %2529 = vmatprep.subr.bf16.mxu0 0
        %2530 = vmatpush1.bf16.msra.mxu0 %v2518
        %2531 = vmatprep.subr.bf16.mxu0 0
        %2532 = vmatpush1.bf16.msra.mxu0 0
        %2533 = vmatprep.subr.bf16.mxu0 0
        %2534 = vmatpush1.bf16.msra.mxu0 0
        %2535 = vmatprep.subr.bf16.mxu0 0
        %2536 = vmatpush1.bf16.msra.mxu0 0
        %2537 = vmatprep.subr.bf16.mxu0 0
        %2538 = vmatpush1.bf16.msra.mxu0 0
        %2539 = vmatprep.subr.bf16.mxu0 0
        %2540 = vmatpush1.bf16.msra.mxu0 0
        %2541 = vmatprep.subr.bf16.mxu0 0
        %2542 = vmatpush1.bf16.msra.mxu0 0
        %2543 = vmatprep.subr.bf16.mxu0 0
        %2544 = vmatpush1.bf16.msra.mxu0 0
        %2545 = vmatprep.subr.bf16.mxu0 0
        %2546 = vmatpush1.bf16.msra.mxu0 0
        %2547 = vmatprep.subr.bf16.mxu0 0
        %2548 = vmatpush1.bf16.msra.mxu0 0
        %2549 = vmatprep.subr.bf16.mxu0 0
        %2550 = vmatpush1.bf16.msra.mxu0 0
        %2551 = vmatprep.subr.bf16.mxu0 0
        %2552 = vmatpush1.bf16.msra.mxu0 0
        %2553 = vmatprep.subr.bf16.mxu0 0
        %2554 = vmatpush1.bf16.msra.mxu0 0
        %2555 = vmatprep.mubr.bf16.mxu0 0
        %2556 = vmatmul.mubr.bf16.gmra.mrb[0].mxu0 %v1329
        %v2557 = vpop.f32.mrb[0].mxu0
        %v2558 = vadd.f32 %v2497, %v2557
        %v2559 = vpop.f32.mrb[0].mxu0
        %v2560 = vpop.f32.mrb[0].mxu0
        %v2561 = vadd.f32 %v2497, %v2560
        %v2562 = vpop.f32.mrb[0].mxu0
        %2563 = vdwg.mxu0
        %s2564 = scalar_lea.vmem %s986, 96
        %v2565 = vld [vmem:[%s2564] sm:$0xf]
        %v2566 = vld [vmem:[%s2564 + $0x4] sm:$0xf]
        %v2567 = vld [vmem:[%s2564 + $0x8] sm:$0xf]
        %v2568 = vld [vmem:[%s2564 + $0xc] sm:$0xf]
        %v2569 = vld [vmem:[%s2564 + $0x10] sm:$0xf]
        %v2570 = vld [vmem:[%s2564 + $0x14] sm:$0xf]
        %v2571 = vld [vmem:[%s2564 + $0x18] sm:$0xf]
        %v2572 = vld [vmem:[%s2564 + $0x1c] sm:$0xf]
        %s2573 = scalar_lea.vmem %s998, 3
        %v2574 = vld [vmem:[%s2573] sm:$0x1]
        %v2576 = vlaneseq
        %v2577 = vshrl.u32 %v2576, 7
        %v2578 = vsub.s32 0, %v2577
        %v2579 = vrot.slane %v2574, %v2578
        %v2589 = vunpack.c.l.b16 %v2565
        %v2590 = vunpack.c.l.b16 %v2566
        %v2591 = vunpack.c.l.b16 %v2567
        %v2592 = vunpack.c.l.b16 %v2568
        %v2593 = vunpack.c.l.b16 %v2569
        %v2594 = vunpack.c.l.b16 %v2570
        %v2595 = vunpack.c.l.b16 %v2571
        %v2596 = vunpack.c.l.b16 %v2572
        %v2597 = vpack.c.b16 %v2590, %v2589
        %v2598 = vpack.c.b16 %v2592, %v2591
        %v2599 = vpack.c.b16 %v2594, %v2593
        %v2600 = vpack.c.b16 %v2596, %v2595
        %2605 = vmatprep.subr.bf16.mxu0 0
        %2606 = vmatpush1.bf16.msra.mxu0 %v2597
        %2607 = vmatprep.subr.bf16.mxu0 0
        %2608 = vmatpush1.bf16.msra.mxu0 %v2598
        %2609 = vmatprep.subr.bf16.mxu0 0
        %2610 = vmatpush1.bf16.msra.mxu0 %v2599
        %2611 = vmatprep.subr.bf16.mxu0 0
        %2612 = vmatpush1.bf16.msra.mxu0 %v2600
        %2613 = vmatprep.subr.bf16.mxu0 0
        %2614 = vmatpush1.bf16.msra.mxu0 0
        %2615 = vmatprep.subr.bf16.mxu0 0
        %2616 = vmatpush1.bf16.msra.mxu0 0
        %2617 = vmatprep.subr.bf16.mxu0 0
        %2618 = vmatpush1.bf16.msra.mxu0 0
        %2619 = vmatprep.subr.bf16.mxu0 0
        %2620 = vmatpush1.bf16.msra.mxu0 0
        %2621 = vmatprep.subr.bf16.mxu0 0
        %2622 = vmatpush1.bf16.msra.mxu0 0
        %2623 = vmatprep.subr.bf16.mxu0 0
        %2624 = vmatpush1.bf16.msra.mxu0 0
        %2625 = vmatprep.subr.bf16.mxu0 0
        %2626 = vmatpush1.bf16.msra.mxu0 0
        %2627 = vmatprep.subr.bf16.mxu0 0
        %2628 = vmatpush1.bf16.msra.mxu0 0
        %2629 = vmatprep.subr.bf16.mxu0 0
        %2630 = vmatpush1.bf16.msra.mxu0 0
        %2631 = vmatprep.subr.bf16.mxu0 0
        %2632 = vmatpush1.bf16.msra.mxu0 0
        %2633 = vmatprep.subr.bf16.mxu0 0
        %2634 = vmatpush1.bf16.msra.mxu0 0
        %2635 = vmatprep.subr.bf16.mxu0 0
        %2636 = vmatpush1.bf16.msra.mxu0 0
        %2637 = vmatprep.mubr.bf16.mxu0 0
        %2638 = vmatmul.mubr.bf16.gmra.mrb[0].mxu0 %v1329
        %v2639 = vpop.f32.mrb[0].mxu0
        %v2640 = vadd.f32 %v2579, %v2639
        %v2641 = vpop.f32.mrb[0].mxu0
        %v2642 = vpop.f32.mrb[0].mxu0
        %v2643 = vadd.f32 %v2579, %v2642
        %v2644 = vpop.f32.mrb[0].mxu0
        %2645 = vdwg.mxu0
        %v2646 = vpack.c.bf16 %v2479, %v2476
        %v2647 = vpack.c.bf16 %v2561, %v2558
        %v2649 = vsel %vm1534, %v2646, 0
        %v2652 = vsel %vm1534, %v2647, 0
        %2654 = vmatprep.subr.bf16.mxu0 0
        %2655 = vmatpush1.bf16.xpose.msra.mxu0 %v2652
        %2656 = vmatprep.subr.bf16.mxu0 0
        %2657 = vmatpush1.bf16.xpose.msra.mxu0 0
        %2658 = vmatprep.subr.bf16.mxu0 0
        %2659 = vmatpush1.bf16.xpose.msra.mxu0 0
        %2660 = vmatprep.subr.bf16.mxu0 0
        %2661 = vmatpush1.bf16.xpose.msra.mxu0 0
        %2662 = vmatprep.subr.bf16.mxu0 0
        %2663 = vmatpush1.bf16.xpose.msra.mxu0 0
        %2664 = vmatprep.subr.bf16.mxu0 0
        %2665 = vmatpush1.bf16.xpose.msra.mxu0 0
        %2666 = vmatprep.subr.bf16.mxu0 0
        %2667 = vmatpush1.bf16.xpose.msra.mxu0 0
        %2668 = vmatprep.subr.bf16.mxu0 0
        %2669 = vmatpush1.bf16.xpose.msra.mxu0 0
        %2670 = vmatprep.subr.bf16.mxu0 0
        %2671 = vmatpush1.bf16.xpose.msra.mxu0 0
        %2672 = vmatprep.subr.bf16.mxu0 0
        %2673 = vmatpush1.bf16.xpose.msra.mxu0 0
        %2674 = vmatprep.subr.bf16.mxu0 0
        %2675 = vmatpush1.bf16.xpose.msra.mxu0 0
        %2676 = vmatprep.subr.bf16.mxu0 0
        %2677 = vmatpush1.bf16.xpose.msra.mxu0 0
        %2678 = vmatprep.subr.bf16.mxu0 0
        %2679 = vmatpush1.bf16.xpose.msra.mxu0 0
        %2680 = vmatprep.subr.bf16.mxu0 0
        %2681 = vmatpush1.bf16.xpose.msra.mxu0 0
        %2682 = vmatprep.subr.bf16.mxu0 0
        %2683 = vmatpush1.bf16.xpose.msra.mxu0 0
        %2684 = vmatprep.subr.bf16.mxu0 0
        %2685 = vmatpush1.bf16.xpose.msra.mxu0 0
        %2686 = vmatprep.mubr.bf16.mxu0 0
        %2687 = vmatmul.mubr.bf16.gmra.mrb[0].mxu0 %v2649
        %v2688 = vpop.f32.mrb[0].mxu0
        %v2689 = vadd.f32 0.0, %v2688
        %v2690 = vpop.f32.mrb[0].mxu0
        %v2691 = vpop.f32.mrb[0].mxu0
        %v2692 = vadd.f32 0.0, %v2691
        %v2693 = vpop.f32.mrb[0].mxu0
        %2694 = vdwg.mxu0
        %v2695 = vmul.f32 %v2689, 0.25
        %v2696 = vmul.f32 %v2692, 0.25
        %v2697 = vadd.f32 %v2695, %v1287
        %v2698 = vadd.f32 %v2696, %v1288
        %v2699 = vsel %vm1586, %v2697, -inf
        %2700 = vmax.xlane.f32.xlu0 %v2699
        %v2701 = vpop.xlane.xlu0 %2700
        %v2702 = vsel %vm1590, %v2698, -inf
        %2703 = vmax.xlane.f32.xlu0 %v2702
        %v2704 = vpop.xlane.xlu0 %2703
        %v2705 = vsub.f32 %v2697, %v2701
        %v2706 = vsub.f32 %v2698, %v2704
        %v2707 = vmul.f32 %v2705, 1.442695
        %v2708 = vpow.pop %v2707
        %v2709 = vmul.f32 %v2706, 1.442695
        %v2710 = vpow.pop %v2709
        %v2711 = vsel %vm1586, %v2708, 0.0
        %2712 = vadd.xlane.f32.xlu0 %v2711
        %v2713 = vpop.xlane.xlu0 %2712
        %v2714 = vsel %vm1590, %v2710, 0.0
        %2715 = vadd.xlane.f32.xlu0 %v2714
        %v2716 = vpop.xlane.xlu0 %2715
        %v2717 = vrcp.pop %v2713
        %v2718 = vrcp.pop %v2716
        %v2719 = vmul.f32 %v2708, %v2717
        %v2720 = vmul.f32 %v2710, %v2718
        %v2721 = vpack.c.bf16 %v2720, %v2719
        %v2722 = vpack.c.bf16 %v2643, %v2640
        %v2724 = vsel %vm1586, %v2721, 0
        %v2727 = vsel %vm1615, %v2722, 0
        %2729 = vmatprep.subr.bf16.mxu0 0
        %2730 = vmatpush1.bf16.msra.mxu0 %v2727
        %2731 = vmatprep.subr.bf16.mxu0 0
        %2732 = vmatpush1.bf16.msra.mxu0 0
        %2733 = vmatprep.subr.bf16.mxu0 0
        %2734 = vmatpush1.bf16.msra.mxu0 0
        %2735 = vmatprep.subr.bf16.mxu0 0
        %2736 = vmatpush1.bf16.msra.mxu0 0
        %2737 = vmatprep.subr.bf16.mxu0 0
        %2738 = vmatpush1.bf16.msra.mxu0 0
        %2739 = vmatprep.subr.bf16.mxu0 0
        %2740 = vmatpush1.bf16.msra.mxu0 0
        %2741 = vmatprep.subr.bf16.mxu0 0
        %2742 = vmatpush1.bf16.msra.mxu0 0
        %2743 = vmatprep.subr.bf16.mxu0 0
        %2744 = vmatpush1.bf16.msra.mxu0 0
        %2745 = vmatprep.subr.bf16.mxu0 0
        %2746 = vmatpush1.bf16.msra.mxu0 0
        %2747 = vmatprep.subr.bf16.mxu0 0
        %2748 = vmatpush1.bf16.msra.mxu0 0
        %2749 = vmatprep.subr.bf16.mxu0 0
        %2750 = vmatpush1.bf16.msra.mxu0 0
        %2751 = vmatprep.subr.bf16.mxu0 0
        %2752 = vmatpush1.bf16.msra.mxu0 0
        %2753 = vmatprep.subr.bf16.mxu0 0
        %2754 = vmatpush1.bf16.msra.mxu0 0
        %2755 = vmatprep.subr.bf16.mxu0 0
        %2756 = vmatpush1.bf16.msra.mxu0 0
        %2757 = vmatprep.subr.bf16.mxu0 0
        %2758 = vmatpush1.bf16.msra.mxu0 0
        %2759 = vmatprep.subr.bf16.mxu0 0
        %2760 = vmatpush1.bf16.msra.mxu0 0
        %2761 = vmatprep.mubr.bf16.mxu0 0
        %2762 = vmatmul.mubr.bf16.gmra.mrb[0].mxu0 %v2724
        %v2763 = vpop.f32.mrb[0].mxu0
        %v2764 = vadd.f32 0.0, %v2763
        %v2765 = vpop.f32.mrb[0].mxu0
        %v2766 = vpop.f32.mrb[0].mxu0
        %v2767 = vadd.f32 0.0, %v2766
        %v2768 = vpop.f32.mrb[0].mxu0
        %2769 = vdwg.mxu0
        %2772 = vrot.lane.b32.xlu0 %v2024, 16
        %v2773 = vpop.permute.xlu0 %2772
        %2774 = vrot.lane.b32.xlu0 %v2027, 16
        %v2775 = vpop.permute.xlu0 %2774
        %2780 = vrot.lane.b32.xlu0 %v2394, 32
        %v2781 = vpop.permute.xlu0 %2780
        %2782 = vrot.lane.b32.xlu0 %v2397, 32
        %v2783 = vpop.permute.xlu0 %2782
        %2788 = vrot.lane.b32.xlu0 %v2764, 48
        %v2789 = vpop.permute.xlu0 %2788
        %2790 = vrot.lane.b32.xlu0 %v2767, 48
        %v2791 = vpop.permute.xlu0 %2790
        %v2794 = vsel %vm1534, %v1654, %v2773
        %v2795 = vsel %vm1534, %v1657, %v2775
        %vm2796 = vcmask 261120
        %v2797 = vsel %vm2796, %v2794, %v2781
        %v2798 = vsel %vm2796, %v2795, %v2783
        %vm2799 = vcmask 392192
        %v2800 = vsel %vm2799, %v2797, %v2789
        %v2801 = vsel %vm2799, %v2798, %v2791
        %v2802 = vpack.c.bf16 %v2801, %v2800
        %v2803 = vld [vmem:[%s1003] sm:$0xf]
        %v2804 = vld [vmem:[%s1003 + $0x4] sm:$0xf]
        %v2805 = vld [vmem:[%s1003 + $0x8] sm:$0xf]
        %v2806 = vld [vmem:[%s1003 + $0xc] sm:$0xf]
        %v2807 = vld [vmem:[%s1003 + $0x10] sm:$0xf]
        %v2808 = vld [vmem:[%s1003 + $0x14] sm:$0xf]
        %v2809 = vld [vmem:[%s1003 + $0x18] sm:$0xf]
        %v2810 = vld [vmem:[%s1003 + $0x1c] sm:$0xf]
        %v2811 = vld [vmem:[%s1006] sm:$0x1]
        %v2813 = vlaneseq
        %v2814 = vshrl.u32 %v2813, 7
        %v2815 = vsub.s32 0, %v2814
        %v2816 = vrot.slane %v2811, %v2815
        %v2826 = vunpack.c.l.b16 %v2803
        %v2827 = vunpack.c.l.b16 %v2804
        %v2828 = vunpack.c.l.b16 %v2805
        %v2829 = vunpack.c.l.b16 %v2806
        %v2830 = vunpack.c.l.b16 %v2807
        %v2831 = vunpack.c.l.b16 %v2808
        %v2832 = vunpack.c.l.b16 %v2809
        %v2833 = vunpack.c.l.b16 %v2810
        %v2834 = vpack.c.b16 %v2827, %v2826
        %v2835 = vpack.c.b16 %v2829, %v2828
        %v2836 = vpack.c.b16 %v2831, %v2830
        %v2837 = vpack.c.b16 %v2833, %v2832
        %v2843 = vsel %vm1241, %v2802, 0
        %2845 = vmatprep.subr.bf16.mxu0 0
        %2846 = vmatpush1.bf16.msra.mxu0 %v2834
        %2847 = vmatprep.subr.bf16.mxu0 0
        %2848 = vmatpush1.bf16.msra.mxu0 %v2835
        %2849 = vmatprep.subr.bf16.mxu0 0
        %2850 = vmatpush1.bf16.msra.mxu0 %v2836
        %2851 = vmatprep.subr.bf16.mxu0 0
        %2852 = vmatpush1.bf16.msra.mxu0 %v2837
        %2853 = vmatprep.subr.bf16.mxu0 0
        %2854 = vmatpush1.bf16.msra.mxu0 0
        %2855 = vmatprep.subr.bf16.mxu0 0
        %2856 = vmatpush1.bf16.msra.mxu0 0
        %2857 = vmatprep.subr.bf16.mxu0 0
        %2858 = vmatpush1.bf16.msra.mxu0 0
        %2859 = vmatprep.subr.bf16.mxu0 0
        %2860 = vmatpush1.bf16.msra.mxu0 0
        %2861 = vmatprep.subr.bf16.mxu0 0
        %2862 = vmatpush1.bf16.msra.mxu0 0
        %2863 = vmatprep.subr.bf16.mxu0 0
        %2864 = vmatpush1.bf16.msra.mxu0 0
        %2865 = vmatprep.subr.bf16.mxu0 0
        %2866 = vmatpush1.bf16.msra.mxu0 0
        %2867 = vmatprep.subr.bf16.mxu0 0
        %2868 = vmatpush1.bf16.msra.mxu0 0
        %2869 = vmatprep.subr.bf16.mxu0 0
        %2870 = vmatpush1.bf16.msra.mxu0 0
        %2871 = vmatprep.subr.bf16.mxu0 0
        %2872 = vmatpush1.bf16.msra.mxu0 0
        %2873 = vmatprep.subr.bf16.mxu0 0
        %2874 = vmatpush1.bf16.msra.mxu0 0
        %2875 = vmatprep.subr.bf16.mxu0 0
        %2876 = vmatpush1.bf16.msra.mxu0 0
        %2877 = vmatprep.mubr.bf16.mxu0 0
        %2878 = vmatmul.mubr.bf16.gmra.mrb[0].mxu0 %v2843
        %v2879 = vpop.f32.mrb[0].mxu0
        %v2880 = vadd.f32 %v2816, %v2879
        %v2881 = vpop.f32.mrb[0].mxu0
        %v2882 = vpop.f32.mrb[0].mxu0
        %v2883 = vadd.f32 %v2816, %v2882
        %v2884 = vpop.f32.mrb[0].mxu0
        %2885 = vdwg.mxu0
        %v2886 = vadd.f32 %v1237, %v2880
        %v2887 = vadd.f32 %v1238, %v2883
        %v2888 = vld [vmem:[%s1009] sm:$0x1]
        %v2889 = vld [vmem:[%s1012] sm:$0x1]
        %v2890 = vsel %vm1241, %v2886, 0.0
        %2891 = vadd.xlane.f32.xlu0 %v2890
        %v2892 = vpop.xlane.xlu0 %2891
        %v2893 = vsel %vm1245, %v2887, 0.0
        %2894 = vadd.xlane.f32.xlu0 %v2893
        %v2895 = vpop.xlane.xlu0 %2894
        %v2896 = vmul.f32 %v2892, %v1249
        %v2897 = vmul.f32 %v2895, %v1249
        %v2898 = vsub.f32 %v2886, %v2896
        %v2899 = vsub.f32 %v2887, %v2897
        %v2900 = vmul.f32 %v2898, %v2898
        %v2901 = vmul.f32 %v2899, %v2899
        %v2902 = vsel %vm1241, %v2900, 0.0
        %2903 = vadd.xlane.f32.xlu0 %v2902
        %v2904 = vpop.xlane.xlu0 %2903
        %v2905 = vsel %vm1245, %v2901, 0.0
        %2906 = vadd.xlane.f32.xlu0 %v2905
        %v2907 = vpop.xlane.xlu0 %2906
        %v2908 = vmul.f32 %v2904, %v1249
        %v2909 = vmul.f32 %v2907, %v1249
        %v2910 = vadd.f32 %v2908, 1e-05
        %v2911 = vadd.f32 %v2909, 1e-05
        %v2912 = vrsqrt.pop %v2910
        %v2913 = vrsqrt.pop %v2911
        %v2914 = vmul.f32 %v2898, %v2912
        %v2915 = vmul.f32 %v2899, %v2913
        %v2917 = vlaneseq
        %v2918 = vshrl.u32 %v2917, 7
        %v2919 = vsub.s32 0, %v2918
        %v2920 = vrot.slane %v2888, %v2919
        %v2922 = vmul.f32 %v2914, %v2920
        %v2923 = vmul.f32 %v2915, %v2920
        %v2925 = vlaneseq
        %v2926 = vshrl.u32 %v2925, 7
        %v2927 = vsub.s32 0, %v2926
        %v2928 = vrot.slane %v2889, %v2927
        %v2930 = vadd.f32 %v2922, %v2928
        %v2931 = vadd.f32 %v2923, %v2928
        %v2932 = vpack.c.bf16 %v2931, %v2930
        %v2933 = vld [vmem:[%s1017] sm:$0xff]
        %v2934 = vld [vmem:[%s1017 + $0x8] sm:$0xff]
        %v2935 = vld [vmem:[%s1017 + $0x10] sm:$0xff]
        %v2936 = vld [vmem:[%s1017 + $0x18] sm:$0xff]
        %v2937 = vld [vmem:[%s1017 + $0x20] sm:$0xff]
        %v2938 = vld [vmem:[%s1017 + $0x28] sm:$0xff]
        %v2939 = vld [vmem:[%s1017 + $0x30] sm:$0xff]
        %v2940 = vld [vmem:[%s1017 + $0x38] sm:$0xff]
        %v2941 = vld [vmem:[%s1021] sm:$0x3]
        %v2943 = vlaneseq
        %v2944 = vshrl.u32 %v2943, 7
        %v2945 = vsub.s32 0, %v2944
        %v2946 = vrot.slane %v2941, %v2945
        %v2947 = vlaneseq
        %v2948 = vshrl.u32 %v2947, 7
        %v2949 = vsub.s32 1, %v2948
        %v2950 = vrot.slane %v2941, %v2949
        %v2961 = vunpack.c.l.b16 %v2933
        %v2962 = vunpack.c.h.b16 %v2933
        %v2963 = vunpack.c.l.b16 %v2934
        %v2964 = vunpack.c.h.b16 %v2934
        %v2965 = vunpack.c.l.b16 %v2935
        %v2966 = vunpack.c.h.b16 %v2935
        %v2967 = vunpack.c.l.b16 %v2936
        %v2968 = vunpack.c.h.b16 %v2936
        %v2969 = vunpack.c.l.b16 %v2937
        %v2970 = vunpack.c.h.b16 %v2937
        %v2971 = vunpack.c.l.b16 %v2938
        %v2972 = vunpack.c.h.b16 %v2938
        %v2973 = vunpack.c.l.b16 %v2939
        %v2974 = vunpack.c.h.b16 %v2939
        %v2975 = vunpack.c.l.b16 %v2940
        %v2976 = vunpack.c.h.b16 %v2940
        %v2977 = vpack.c.b16 %v2963, %v2961
        %v2978 = vpack.c.b16 %v2964, %v2962
        %v2979 = vpack.c.b16 %v2967, %v2965
        %v2980 = vpack.c.b16 %v2968, %v2966
        %v2981 = vpack.c.b16 %v2971, %v2969
        %v2982 = vpack.c.b16 %v2972, %v2970
        %v2983 = vpack.c.b16 %v2975, %v2973
        %v2984 = vpack.c.b16 %v2976, %v2974
        %v2994 = vsel %vm1241, %v2932, 0
        %2996 = vmatprep.subr.bf16.mxu0 %v2978
        %2997 = vmatpush1.bf16.msra.mxu0 %v2977
        %2998 = vmatprep.subr.bf16.mxu0 %v2980
        %2999 = vmatpush1.bf16.msra.mxu0 %v2979
        %3000 = vmatprep.subr.bf16.mxu0 %v2982
        %3001 = vmatpush1.bf16.msra.mxu0 %v2981
        %3002 = vmatprep.subr.bf16.mxu0 %v2984
        %3003 = vmatpush1.bf16.msra.mxu0 %v2983
        %3004 = vmatprep.subr.bf16.mxu0 0
        %3005 = vmatpush1.bf16.msra.mxu0 0
        %3006 = vmatprep.subr.bf16.mxu0 0
        %3007 = vmatpush1.bf16.msra.mxu0 0
        %3008 = vmatprep.subr.bf16.mxu0 0
        %3009 = vmatpush1.bf16.msra.mxu0 0
        %3010 = vmatprep.subr.bf16.mxu0 0
        %3011 = vmatpush1.bf16.msra.mxu0 0
        %3012 = vmatprep.subr.bf16.mxu0 0
        %3013 = vmatpush1.bf16.msra.mxu0 0
        %3014 = vmatprep.subr.bf16.mxu0 0
        %3015 = vmatpush1.bf16.msra.mxu0 0
        %3016 = vmatprep.subr.bf16.mxu0 0
        %3017 = vmatpush1.bf16.msra.mxu0 0
        %3018 = vmatprep.subr.bf16.mxu0 0
        %3019 = vmatpush1.bf16.msra.mxu0 0
        %3020 = vmatprep.subr.bf16.mxu0 0
        %3021 = vmatpush1.bf16.msra.mxu0 0
        %3022 = vmatprep.subr.bf16.mxu0 0
        %3023 = vmatpush1.bf16.msra.mxu0 0
        %3024 = vmatprep.subr.bf16.mxu0 0
        %3025 = vmatpush1.bf16.msra.mxu0 0
        %3026 = vmatprep.subr.bf16.mxu0 0
        %3027 = vmatpush1.bf16.msra.mxu0 0
        %3028 = vmatprep.mubr.bf16.mxu0 0
        %3029 = vmatmul.mubr.bf16.gmra.mrb[0].mxu0 %v2994
        %v3030 = vpop.f32.mrb[0].mxu0
        %v3031 = vadd.f32 %v2946, %v3030
        %v3032 = vpop.f32.mrb[0].mxu0
        %v3033 = vadd.f32 %v2950, %v3032
        %v3034 = vpop.f32.mrb[0].mxu0
        %v3035 = vadd.f32 %v2946, %v3034
        %v3036 = vpop.f32.mrb[0].mxu0
        %v3037 = vadd.f32 %v2950, %v3036
        %3038 = vdwg.mxu0
        %v3039 = vmul.f32 %v3031, -1.702
        %v3040 = vmul.f32 %v3033, -1.702
        %v3041 = vmul.f32 %v3035, -1.702
        %v3042 = vmul.f32 %v3037, -1.702
        %v3043 = vmul.f32 %v3039, 1.442695
        %v3044 = vpow.pop %v3043
        %v3045 = vmul.f32 %v3040, 1.442695
        %v3046 = vpow.pop %v3045
        %v3047 = vmul.f32 %v3041, 1.442695
        %v3048 = vpow.pop %v3047
        %v3049 = vmul.f32 %v3042, 1.442695
        %v3050 = vpow.pop %v3049
        %v3051 = vadd.f32 %v3044, 1.0
        %v3052 = vadd.f32 %v3046, 1.0
        %v3053 = vadd.f32 %v3048, 1.0
        %v3054 = vadd.f32 %v3050, 1.0
        %v3055 = vrcp.pop %v3051
        %v3056 = vrcp.pop %v3052
        %v3057 = vrcp.pop %v3053
        %v3058 = vrcp.pop %v3054
        %v3059 = vmul.f32 %v3031, %v3055
        %v3060 = vmul.f32 %v3033, %v3056
        %v3061 = vmul.f32 %v3035, %v3057
        %v3062 = vmul.f32 %v3037, %v3058
        %v3063 = vpack.c.bf16 %v3061, %v3059
        %v3064 = vpack.c.bf16 %v3062, %v3060
        %v3065 = vld [vmem:[%s1026] sm:$0xf]
        %v3066 = vld [vmem:[%s1026 + $0x4] sm:$0xf]
        %v3067 = vld [vmem:[%s1026 + $0x8] sm:$0xf]
        %v3068 = vld [vmem:[%s1026 + $0xc] sm:$0xf]
        %v3069 = vld [vmem:[%s1026 + $0x10] sm:$0xf]
        %v3070 = vld [vmem:[%s1026 + $0x14] sm:$0xf]
        %v3071 = vld [vmem:[%s1026 + $0x18] sm:$0xf]
        %v3072 = vld [vmem:[%s1026 + $0x1c] sm:$0xf]
        %v3073 = vld [vmem:[%s1026 + $0x20] sm:$0xf]
        %v3074 = vld [vmem:[%s1026 + $0x24] sm:$0xf]
        %v3075 = vld [vmem:[%s1026 + $0x28] sm:$0xf]
        %v3076 = vld [vmem:[%s1026 + $0x2c] sm:$0xf]
        %v3077 = vld [vmem:[%s1026 + $0x30] sm:$0xf]
        %v3078 = vld [vmem:[%s1026 + $0x34] sm:$0xf]
        %v3079 = vld [vmem:[%s1026 + $0x38] sm:$0xf]
        %v3080 = vld [vmem:[%s1026 + $0x3c] sm:$0xf]
        %v3081 = vld [vmem:[%s1026 + $0x40] sm:$0xf]
        %v3082 = vld [vmem:[%s1026 + $0x44] sm:$0xf]
        %v3083 = vld [vmem:[%s1026 + $0x48] sm:$0xf]
        %v3084 = vld [vmem:[%s1026 + $0x4c] sm:$0xf]
        %v3085 = vld [vmem:[%s1026 + $0x50] sm:$0xf]
        %v3086 = vld [vmem:[%s1026 + $0x54] sm:$0xf]
        %v3087 = vld [vmem:[%s1026 + $0x58] sm:$0xf]
        %v3088 = vld [vmem:[%s1026 + $0x5c] sm:$0xf]
        %v3089 = vld [vmem:[%s1026 + $0x60] sm:$0xf]
        %v3090 = vld [vmem:[%s1026 + $0x64] sm:$0xf]
        %v3091 = vld [vmem:[%s1026 + $0x68] sm:$0xf]
        %v3092 = vld [vmem:[%s1026 + $0x6c] sm:$0xf]
        %v3093 = vld [vmem:[%s1026 + $0x70] sm:$0xf]
        %v3094 = vld [vmem:[%s1026 + $0x74] sm:$0xf]
        %v3095 = vld [vmem:[%s1026 + $0x78] sm:$0xf]
        %v3096 = vld [vmem:[%s1026 + $0x7c] sm:$0xf]
        %v3097 = vld [vmem:[%s1029] sm:$0x1]
        %v3099 = vlaneseq
        %v3100 = vshrl.u32 %v3099, 7
        %v3101 = vsub.s32 0, %v3100
        %v3102 = vrot.slane %v3097, %v3101
        %v3136 = vunpack.c.l.b16 %v3065
        %v3137 = vunpack.c.l.b16 %v3066
        %v3138 = vunpack.c.l.b16 %v3067
        %v3139 = vunpack.c.l.b16 %v3068
        %v3140 = vunpack.c.l.b16 %v3069
        %v3141 = vunpack.c.l.b16 %v3070
        %v3142 = vunpack.c.l.b16 %v3071
        %v3143 = vunpack.c.l.b16 %v3072
        %v3144 = vunpack.c.l.b16 %v3073
        %v3145 = vunpack.c.l.b16 %v3074
        %v3146 = vunpack.c.l.b16 %v3075
        %v3147 = vunpack.c.l.b16 %v3076
        %v3148 = vunpack.c.l.b16 %v3077
        %v3149 = vunpack.c.l.b16 %v3078
        %v3150 = vunpack.c.l.b16 %v3079
        %v3151 = vunpack.c.l.b16 %v3080
        %v3152 = vunpack.c.l.b16 %v3081
        %v3153 = vunpack.c.l.b16 %v3082
        %v3154 = vunpack.c.l.b16 %v3083
        %v3155 = vunpack.c.l.b16 %v3084
        %v3156 = vunpack.c.l.b16 %v3085
        %v3157 = vunpack.c.l.b16 %v3086
        %v3158 = vunpack.c.l.b16 %v3087
        %v3159 = vunpack.c.l.b16 %v3088
        %v3160 = vunpack.c.l.b16 %v3089
        %v3161 = vunpack.c.l.b16 %v3090
        %v3162 = vunpack.c.l.b16 %v3091
        %v3163 = vunpack.c.l.b16 %v3092
        %v3164 = vunpack.c.l.b16 %v3093
        %v3165 = vunpack.c.l.b16 %v3094
        %v3166 = vunpack.c.l.b16 %v3095
        %v3167 = vunpack.c.l.b16 %v3096
        %v3168 = vpack.c.b16 %v3137, %v3136
        %v3169 = vpack.c.b16 %v3139, %v3138
        %v3170 = vpack.c.b16 %v3141, %v3140
        %v3171 = vpack.c.b16 %v3143, %v3142
        %v3172 = vpack.c.b16 %v3145, %v3144
        %v3173 = vpack.c.b16 %v3147, %v3146
        %v3174 = vpack.c.b16 %v3149, %v3148
        %v3175 = vpack.c.b16 %v3151, %v3150
        %v3176 = vpack.c.b16 %v3153, %v3152
        %v3177 = vpack.c.b16 %v3155, %v3154
        %v3178 = vpack.c.b16 %v3157, %v3156
        %v3179 = vpack.c.b16 %v3159, %v3158
        %v3180 = vpack.c.b16 %v3161, %v3160
        %v3181 = vpack.c.b16 %v3163, %v3162
        %v3182 = vpack.c.b16 %v3165, %v3164
        %v3183 = vpack.c.b16 %v3167, %v3166
        %3200 = vmatprep.subr.bf16.mxu0 0
        %3201 = vmatpush1.bf16.msra.mxu0 %v3168
        %3202 = vmatprep.subr.bf16.mxu0 0
        %3203 = vmatpush1.bf16.msra.mxu0 %v3169
        %3204 = vmatprep.subr.bf16.mxu0 0
        %3205 = vmatpush1.bf16.msra.mxu0 %v3170
        %3206 = vmatprep.subr.bf16.mxu0 0
        %3207 = vmatpush1.bf16.msra.mxu0 %v3171
        %3208 = vmatprep.subr.bf16.mxu0 0
        %3209 = vmatpush1.bf16.msra.mxu0 %v3172
        %3210 = vmatprep.subr.bf16.mxu0 0
        %3211 = vmatpush1.bf16.msra.mxu0 %v3173
        %3212 = vmatprep.subr.bf16.mxu0 0
        %3213 = vmatpush1.bf16.msra.mxu0 %v3174
        %3214 = vmatprep.subr.bf16.mxu0 0
        %3215 = vmatpush1.bf16.msra.mxu0 %v3175
        %3216 = vmatprep.subr.bf16.mxu0 0
        %3217 = vmatpush1.bf16.msra.mxu0 %v3176
        %3218 = vmatprep.subr.bf16.mxu0 0
        %3219 = vmatpush1.bf16.msra.mxu0 %v3177
        %3220 = vmatprep.subr.bf16.mxu0 0
        %3221 = vmatpush1.bf16.msra.mxu0 %v3178
        %3222 = vmatprep.subr.bf16.mxu0 0
        %3223 = vmatpush1.bf16.msra.mxu0 %v3179
        %3224 = vmatprep.subr.bf16.mxu0 0
        %3225 = vmatpush1.bf16.msra.mxu0 %v3180
        %3226 = vmatprep.subr.bf16.mxu0 0
        %3227 = vmatpush1.bf16.msra.mxu0 %v3181
        %3228 = vmatprep.subr.bf16.mxu0 0
        %3229 = vmatpush1.bf16.msra.mxu0 %v3182
        %3230 = vmatprep.subr.bf16.mxu0 0
        %3231 = vmatpush1.bf16.msra.mxu0 %v3183
        %3232 = vmatprep.mubr.bf16.mxu0 %v3064
        %3233 = vmatmul.mubr.bf16.gmra.mrb[0].mxu0 %v3063
        %v3234 = vpop.f32.mrb[0].mxu0
        %v3235 = vadd.f32 %v3102, %v3234
        %v3236 = vpop.f32.mrb[0].mxu0
        %v3237 = vpop.f32.mrb[0].mxu0
        %v3238 = vadd.f32 %v3102, %v3237
        %v3239 = vpop.f32.mrb[0].mxu0
        %3240 = vdwg.mxu0
        %v3241 = vadd.f32 %v2886, %v3235
        %v3242 = vadd.f32 %v2887, %v3238
        %3243 = vst.msk [vmem:[#allocation2] sm:$0xff] %vm1241, %v3241
        %3244 = vst.msk [vmem:[#allocation2 + $0x8] sm:$0x3] %vm1245, %v3242
        %p3245 = scmp.eq.s32.totalorder %s38, 1
        // Predicated region
        $region129: #{clip_model_forward.1} parent=123 // pred_check
          %p3246 = pneg %p3245
        $region130: #{clip_model_forward.1} parent=123 // pred_check_branch
          %3248 = sbr.rel (%p3246) target = $region132
        $region131: #{clip_model_forward.1} parent=123 // pred_region
          %v3249 = vld [vmem:[#allocation2] sm:$0x1]
          %v3250 = vld [vmem:[#allocation2 + $0x5] sm:$0x1]
          %v3252 = vrot.slane %v3250, 7
          %vm3254 = vcmask 1040384
          %v3255 = vsel %vm3254, %v3249, %v3252
          %v3256 = vld [vmem:[%s22] sm:$0x1]
          %v3257 = vld [vmem:[%s23] sm:$0x1]
          %v3258 = vsel %vm1245, %v3255, 0.0
          %3259 = vadd.xlane.f32.xlu0 %v3258
          %v3260 = vpop.xlane.xlu0 %3259
          %v3261 = vmul.f32 %v3260, %v1249
          %v3262 = vsub.f32 %v3255, %v3261
          %v3263 = vmul.f32 %v3262, %v3262
          %v3264 = vsel %vm1245, %v3263, 0.0
          %3265 = vadd.xlane.f32.xlu0 %v3264
          %v3266 = vpop.xlane.xlu0 %3265
          %v3267 = vmul.f32 %v3266, %v1249
          %v3268 = vadd.f32 %v3267, 1e-05
          %v3269 = vrsqrt.pop %v3268
          %v3270 = vmul.f32 %v3262, %v3269
          %v3272 = vlaneseq
          %v3273 = vshrl.u32 %v3272, 7
          %v3274 = vsub.s32 0, %v3273
          %v3275 = vrot.slane %v3256, %v3274
          %v3277 = vmul.f32 %v3270, %v3275
          %v3279 = vlaneseq
          %v3280 = vshrl.u32 %v3279, 7
          %v3281 = vsub.s32 0, %v3280
          %v3282 = vrot.slane %v3257, %v3281
          %v3284 = vadd.f32 %v3277, %v3282
          %v3285 = vpack.c.bf16 %v3284, %v3284
          %v3286 = vld [vmem:[%s24] sm:$0xff]
          %v3287 = vld [vmem:[%s24 + $0x8] sm:$0xf]
          %v3288 = vld [vmem:[%s24 + $0xc] sm:$0xff]
          %v3289 = vld [vmem:[%s24 + $0x14] sm:$0xf]
          %v3290 = vld [vmem:[%s24 + $0x18] sm:$0xff]
          %v3291 = vld [vmem:[%s24 + $0x20] sm:$0xf]
          %v3292 = vld [vmem:[%s24 + $0x24] sm:$0xff]
          %v3293 = vld [vmem:[%s24 + $0x2c] sm:$0xf]
          %v3294 = vld [vmem:[%s24 + $0x30] sm:$0xff]
          %v3295 = vld [vmem:[%s24 + $0x38] sm:$0xf]
          %v3296 = vld [vmem:[%s24 + $0x3c] sm:$0xff]
          %v3297 = vld [vmem:[%s24 + $0x44] sm:$0xf]
          %v3298 = vld [vmem:[%s24 + $0x48] sm:$0xff]
          %v3299 = vld [vmem:[%s24 + $0x50] sm:$0xf]
          %v3300 = vld [vmem:[%s24 + $0x54] sm:$0xff]
          %v3301 = vld [vmem:[%s24 + $0x5c] sm:$0xf]
          %v3302 = vld [vmem:[%s25] sm:$0x7]
          %v3304 = vlaneseq
          %v3305 = vshrl.u32 %v3304, 7
          %v3306 = vsub.s32 0, %v3305
          %v3307 = vrot.slane %v3302, %v3306
          %v3308 = vlaneseq
          %v3309 = vshrl.u32 %v3308, 7
          %v3310 = vsub.s32 1, %v3309
          %v3311 = vrot.slane %v3302, %v3310
          %v3312 = vlaneseq
          %v3313 = vshrl.u32 %v3312, 7
          %v3314 = vsub.s32 2, %v3313
          %v3315 = vrot.slane %v3302, %v3314
          %v3335 = vunpack.c.l.b16 %v3286
          %v3336 = vunpack.c.h.b16 %v3286
          %v3337 = vunpack.c.l.b16 %v3287
          %v3338 = vunpack.c.l.b16 %v3288
          %v3339 = vunpack.c.h.b16 %v3288
          %v3340 = vunpack.c.l.b16 %v3289
          %v3341 = vunpack.c.l.b16 %v3290
          %v3342 = vunpack.c.h.b16 %v3290
          %v3343 = vunpack.c.l.b16 %v3291
          %v3344 = vunpack.c.l.b16 %v3292
          %v3345 = vunpack.c.h.b16 %v3292
          %v3346 = vunpack.c.l.b16 %v3293
          %v3347 = vunpack.c.l.b16 %v3294
          %v3348 = vunpack.c.h.b16 %v3294
          %v3349 = vunpack.c.l.b16 %v3295
          %v3350 = vunpack.c.l.b16 %v3296
          %v3351 = vunpack.c.h.b16 %v3296
          %v3352 = vunpack.c.l.b16 %v3297
          %v3353 = vunpack.c.l.b16 %v3298
          %v3354 = vunpack.c.h.b16 %v3298
          %v3355 = vunpack.c.l.b16 %v3299
          %v3356 = vunpack.c.l.b16 %v3300
          %v3357 = vunpack.c.h.b16 %v3300
          %v3358 = vunpack.c.l.b16 %v3301
          %v3359 = vpack.c.b16 %v3338, %v3335
          %v3360 = vpack.c.b16 %v3339, %v3336
          %v3361 = vpack.c.b16 %v3340, %v3337
          %v3362 = vpack.c.b16 %v3344, %v3341
          %v3363 = vpack.c.b16 %v3345, %v3342
          %v3364 = vpack.c.b16 %v3346, %v3343
          %v3365 = vpack.c.b16 %v3350, %v3347
          %v3366 = vpack.c.b16 %v3351, %v3348
          %v3367 = vpack.c.b16 %v3352, %v3349
          %v3368 = vpack.c.b16 %v3356, %v3353
          %v3369 = vpack.c.b16 %v3357, %v3354
          %v3370 = vpack.c.b16 %v3358, %v3355
          %v3384 = vsel %vm1241, %v3285, 0
          %3386 = vmatprep.subr.bf16.mxu0 %v3360
          %3387 = vmatpush1.bf16.msra.mxu0 %v3359
          %3388 = vmatprep.subr.bf16.mxu0 %v3363
          %3389 = vmatpush1.bf16.msra.mxu0 %v3362
          %3390 = vmatprep.subr.bf16.mxu0 %v3366
          %3391 = vmatpush1.bf16.msra.mxu0 %v3365
          %3392 = vmatprep.subr.bf16.mxu0 %v3369
          %3393 = vmatpush1.bf16.msra.mxu0 %v3368
          %3394 = vmatprep.subr.bf16.mxu0 0
          %3395 = vmatpush1.bf16.msra.mxu0 0
          %3396 = vmatprep.subr.bf16.mxu0 0
          %3397 = vmatpush1.bf16.msra.mxu0 0
          %3398 = vmatprep.subr.bf16.mxu0 0
          %3399 = vmatpush1.bf16.msra.mxu0 0
          %3400 = vmatprep.subr.bf16.mxu0 0
          %3401 = vmatpush1.bf16.msra.mxu0 0
          %3402 = vmatprep.subr.bf16.mxu0 0
          %3403 = vmatpush1.bf16.msra.mxu0 0
          %3404 = vmatprep.subr.bf16.mxu0 0
          %3405 = vmatpush1.bf16.msra.mxu0 0
          %3406 = vmatprep.subr.bf16.mxu0 0
          %3407 = vmatpush1.bf16.msra.mxu0 0
          %3408 = vmatprep.subr.bf16.mxu0 0
          %3409 = vmatpush1.bf16.msra.mxu0 0
          %3410 = vmatprep.subr.bf16.mxu0 0
          %3411 = vmatpush1.bf16.msra.mxu0 0
          %3412 = vmatprep.subr.bf16.mxu0 0
          %3413 = vmatpush1.bf16.msra.mxu0 0
          %3414 = vmatprep.subr.bf16.mxu0 0
          %3415 = vmatpush1.bf16.msra.mxu0 0
          %3416 = vmatprep.subr.bf16.mxu0 0
          %3417 = vmatpush1.bf16.msra.mxu0 0
          %3418 = vmatprep.mubr.bf16.mxu0 0
          %3419 = vmatmul.mubr.bf16.gmra.mrb[0].mxu0 %v3384
          %v3420 = vpop.f32.mrb[0].mxu0
          %v3421 = vadd.f32 %v3307, %v3420
          %v3422 = vpop.f32.mrb[0].mxu0
          %v3423 = vadd.f32 %v3311, %v3422
          %v3424 = vpop.f32.mrb[0].mxu0
          %v3425 = vpop.f32.mrb[0].mxu0
          %3426 = vdwg.mxu0
          %3427 = vmatprep.subr.bf16.mxu0 0
          %3428 = vmatpush1.bf16.msra.mxu0 %v3361
          %3429 = vmatprep.subr.bf16.mxu0 0
          %3430 = vmatpush1.bf16.msra.mxu0 %v3364
          %3431 = vmatprep.subr.bf16.mxu0 0
          %3432 = vmatpush1.bf16.msra.mxu0 %v3367
          %3433 = vmatprep.subr.bf16.mxu0 0
          %3434 = vmatpush1.bf16.msra.mxu0 %v3370
          %3435 = vmatprep.subr.bf16.mxu0 0
          %3436 = vmatpush1.bf16.msra.mxu0 0
          %3437 = vmatprep.subr.bf16.mxu0 0
          %3438 = vmatpush1.bf16.msra.mxu0 0
          %3439 = vmatprep.subr.bf16.mxu0 0
          %3440 = vmatpush1.bf16.msra.mxu0 0
          %3441 = vmatprep.subr.bf16.mxu0 0
          %3442 = vmatpush1.bf16.msra.mxu0 0
          %3443 = vmatprep.subr.bf16.mxu0 0
          %3444 = vmatpush1.bf16.msra.mxu0 0
          %3445 = vmatprep.subr.bf16.mxu0 0
          %3446 = vmatpush1.bf16.msra.mxu0 0
          %3447 = vmatprep.subr.bf16.mxu0 0
          %3448 = vmatpush1.bf16.msra.mxu0 0
          %3449 = vmatprep.subr.bf16.mxu0 0
          %3450 = vmatpush1.bf16.msra.mxu0 0
          %3451 = vmatprep.subr.bf16.mxu0 0
          %3452 = vmatpush1.bf16.msra.mxu0 0
          %3453 = vmatprep.subr.bf16.mxu0 0
          %3454 = vmatpush1.bf16.msra.mxu0 0
          %3455 = vmatprep.subr.bf16.mxu0 0
          %3456 = vmatpush1.bf16.msra.mxu0 0
          %3457 = vmatprep.subr.bf16.mxu0 0
          %3458 = vmatpush1.bf16.msra.mxu0 0
          %3459 = vmatprep.mubr.bf16.mxu0 0
          %3460 = vmatmul.mubr.bf16.gmra.mrb[0].mxu0 %v3384
          %v3461 = vpop.f32.mrb[0].mxu0
          %v3462 = vadd.f32 %v3315, %v3461
          %v3463 = vpop.f32.mrb[0].mxu0
          %v3464 = vpop.f32.mrb[0].mxu0
          %v3465 = vpop.f32.mrb[0].mxu0
          %3466 = vdwg.mxu0
          %v3470 = vcombine.low %v3421, %v3423
          %v3472 = vunpack.c.l.s4 1983009808
          %v3473 = vunpack.c.0.s8 %v3472
          %v3474 = vlaneseq
          %v3475 = vshrl.u32 %v3474, 7
          %v3476 = vsub.s32 %v3473, %v3475
          %v3477 = vrot.slane %v3470, %v3476
          %v3479 = vunpack.c.l.s4 1983009808
          %v3480 = vunpack.c.0.s8 %v3479
          %v3481 = vlaneseq
          %v3482 = vshrl.u32 %v3481, 7
          %v3483 = vsub.s32 %v3480, %v3482
          %v3484 = vrot.slane %v3462, %v3483
          %v3485 = vcombine.low %v3477, %v3484
          %3487 = vst [vmem:[#allocation3] sm:$0x3f] %v3485
        $region132: #{clip_model_forward.1} parent=123 // pred_fallthru
          _
        // Predicated region
        $region133: #{clip_model_forward.1} parent=123 // pred_check
          %p3488 = pneg %p677
        $region134: #{clip_model_forward.1} parent=123 // pred_check_branch
          %3490 = sbr.rel (%p3488) target = $region136
        $region135: #{clip_model_forward.1} parent=123 // pred_region
          %s3492 = ssub.s32 96, 96
          %3493 = vsyncadd [#allocation4], %s3492
          %s3495 = sshll.u32 [#allocation3], 4
          %s3496 = int_to_ptr.vmem [resolvable:$true] %s3495
          %3498 = dma.vmem_to_hbm [thread:$0]  %s3496, 96, %s26, [#allocation4]
        $region136: #{clip_model_forward.1} parent=123 // pred_fallthru
          _
        // Predicated region
        $region137: #{clip_model_forward.1} parent=123 // pred_check
          %p3499 = pneg %p677
        $region138: #{clip_model_forward.1} parent=123 // pred_check_branch
          %3501 = sbr.rel (%p3499) target = $region140
        $region139: #{clip_model_forward.1} parent=123 // pred_region
          %3502 = dma.done [#allocation4], 96
        $region140: #{clip_model_forward.1} parent=123 // pred_fallthru
          _
      $region124: #{clip_model_forward.1} parent=5 // pred_fallthru
        _
      %p3503 = scmp.le.s32.totalorder 2, %s33
      // Predicated region
      $region141: #{clip_model_forward.1} parent=5 // pred_check
        %p3504 = pneg %p3503
      $region142: #{clip_model_forward.1} parent=5 // pred_check_branch
        %3506 = sbr.rel (%p3504) target = $region144
      $region143: #{clip_model_forward.1} parent=5 // pred_region
        %s3507 = ssub.s32 %s33, 2
      $region144: #{clip_model_forward.1} parent=5 // pred_fallthru
        _
    $region6: #{clip_model_forward.1} parent=1 // loop_footer
      %s37 = sadd.s32 1, %s33
    $region7: #{clip_model_forward.1} parent=1 // loop_footer_branch
      %32 = sbr.rel target = $region3
    $region8: #{clip_model_forward.1} parent=1 // loop_exit
      _
    %3508 = vsyncpa [#allocation4], 1
    %s3509 = scalar_lea.sflag [#allocation4], 1
    %3510 = vsyncpa %s3509, 1

</llo_original>
